<compile_context>
chip_gen: v6e
topology: v6e:2x2x1
jax: 0.10.0
libtpu: 0.0.40
codegen_flags: <defaults>
</compile_context>

<pallas_src>
import jax
import jax.numpy as jnp
from jax.experimental import pallas as pl
from jax.experimental.pallas import tpu as pltpu

LANE = 128
VMEM_LIMIT = 32 * 1024 * 1024  # actual need ~10 MiB; safe on v5e/v6e/v7x


# ------------------------------ Pallas kernels ------------------------------

def _conv1_pool_kernel(t_ref, w_ref, b_ref, o_ref):
    """4 pool-tap GEMMs -> 4-way max -> +bias -> ReLU  (= conv1+relu+maxpool)."""
    w = w_ref[...]
    d00 = jnp.dot(t_ref[0], w, preferred_element_type=jnp.float32)
    d01 = jnp.dot(t_ref[1], w, preferred_element_type=jnp.float32)
    d10 = jnp.dot(t_ref[2], w, preferred_element_type=jnp.float32)
    d11 = jnp.dot(t_ref[3], w, preferred_element_type=jnp.float32)
    m = jnp.maximum(jnp.maximum(d00, d01), jnp.maximum(d10, d11))
    o_ref[...] = jnp.maximum(m + b_ref[...], 0.0).astype(o_ref.dtype)


def _conv2_kernel(p_ref, w_ref, b_ref, o_ref):
    """im2col GEMM + bias + ReLU (lane-dense: K=128, N=128)."""
    acc = jnp.dot(p_ref[...], w_ref[...], preferred_element_type=jnp.float32)
    o_ref[...] = jnp.maximum(acc + b_ref[...], 0.0).astype(o_ref.dtype)


def _fc_kernel(x_ref, w1_ref, b1_ref, w2_ref, b2_ref, o_ref):
    """fc1 + ReLU + fc2 + softmax over the 10 real classes (padded lanes masked
    explicitly, exact normalization)."""
    h = jnp.dot(x_ref[...], w1_ref[...], preferred_element_type=jnp.float32)
    h = jnp.maximum(h + b1_ref[...], 0.0)
    logits = jnp.dot(h.astype(jnp.bfloat16), w2_ref[...],
                     preferred_element_type=jnp.float32) + b2_ref[...]
    lane = jax.lax.broadcasted_iota(jnp.int32, logits.shape, 1)
    valid = lane < 10
    logits = jnp.where(valid, logits, jnp.full_like(logits, -1e30))
    m = jnp.max(logits, axis=-1, keepdims=True)
    e = jnp.where(valid, jnp.exp(logits - m), 0.0)
    denom = jnp.sum(e, axis=-1, keepdims=True)
    o_ref[...] = e / denom


# ------------------------------ call wrappers -------------------------------

def _cdiv(a, b):
    return -(-a // b)


def _round_up(x, m):
    return _cdiv(x, m) * m


def _row_blocking(m, target_rows):
    """(rows per block, padded total rows).  Blocks are multiples of 16 rows
    (bf16 sublane packing), <= target, and the grid always has >= 2 steps so
    v7x can shard across both TensorCores.  Never exceeds a small VMEM block."""
    bm = max(16, min(_round_up(target_rows, 16), _round_up(_cdiv(m, 2), 16)))
    grid = max(2, _cdiv(m, bm))
    return bm, grid * bm


def _pad_rows(a, m_pad, axis):
    pad = m_pad - a.shape[axis]
    if pad == 0:
        return a
    widths = [(0, 0)] * a.ndim
    widths[axis] = (0, pad)
    return jnp.pad(a, widths)


def _cparams():
    return pltpu.CompilerParams(dimension_semantics=("parallel",),
                                vmem_limit_bytes=VMEM_LIMIT)


def conv1_relu_pool(taps, w, b):
    """taps: (4, M, 32) bf16 stacked pool-tap im2col matrices -> (M, 128) bf16."""
    _, m, k = taps.shape
    bm, m_pad = _row_blocking(m, target_rows=1024)
    taps = _pad_rows(taps, m_pad, axis=1)
    out = pl.pallas_call(
        _conv1_pool_kernel,
        out_shape=jax.ShapeDtypeStruct((m_pad, LANE), jnp.bfloat16),
        grid=(m_pad // bm,),
        in_specs=[pl.BlockSpec((4, bm, k), lambda i: (0, i, 0)),
                  pl.BlockSpec(w.shape, lambda i: (0, 0)),
                  pl.BlockSpec(b.shape, lambda i: (0, 0))],
        out_specs=pl.BlockSpec((bm, LANE), lambda i: (i, 0)),
        compiler_params=_cparams(),
    )(taps, w, b)
    return out[:m]


def conv2_relu(patches, w, b):
    """patches: (M, 128) bf16 im2col (90 real features) -> (M, 128) bf16."""
    m, k = patches.shape
    bm, m_pad = _row_blocking(m, target_rows=1024)
    patches = _pad_rows(patches, m_pad, axis=0)
    out = pl.pallas_call(
        _conv2_kernel,
        out_shape=jax.ShapeDtypeStruct((m_pad, LANE), jnp.bfloat16),
        grid=(m_pad // bm,),
        in_specs=[pl.BlockSpec((bm, k), lambda i: (i, 0)),
                  pl.BlockSpec(w.shape, lambda i: (0, 0)),
                  pl.BlockSpec(b.shape, lambda i: (0, 0))],
        out_specs=pl.BlockSpec((bm, LANE), lambda i: (i, 0)),
        compiler_params=_cparams(),
    )(patches, w, b)
    return out[:m]


def fc_fused(x, w1, b1, w2, b2):
    """x: (N, 2000) bf16 -> (N, 128) f32 softmax probabilities (lanes >= 10 are 0)."""
    m, k = x.shape
    bm, m_pad = _row_blocking(m, target_rows=512)
    x = _pad_rows(x, m_pad, axis=0)
    out = pl.pallas_call(
        _fc_kernel,
        out_shape=jax.ShapeDtypeStruct((m_pad, LANE), jnp.float32),
        grid=(m_pad // bm,),
        in_specs=[pl.BlockSpec((bm, k), lambda i: (i, 0)),
                  pl.BlockSpec(w1.shape, lambda i: (0, 0)),
                  pl.BlockSpec(b1.shape, lambda i: (0, 0)),
                  pl.BlockSpec(w2.shape, lambda i: (0, 0)),
                  pl.BlockSpec(b2.shape, lambda i: (0, 0))],
        out_specs=pl.BlockSpec((bm, LANE), lambda i: (i, 0)),
        compiler_params=_cparams(),
    )(x, w1, b1, w2, b2)
    return out[:m]


# ------------------------------ params & glue --------------------------------

def init_params(key):
    """Deterministic init with the PyTorch module's exact shapes."""
    ks = jax.random.split(key, 8)
    s = 0.05
    return {
        "conv1_w": s * jax.random.normal(ks[0], (10, 1, 5, 5), jnp.float32),
        "conv1_b": s * jax.random.normal(ks[1], (10,), jnp.float32),
        "conv2_w": s * jax.random.normal(ks[2], (20, 10, 3, 3), jnp.float32),
        "conv2_b": s * jax.random.normal(ks[3], (20,), jnp.float32),
        "fc1_w": s * jax.random.normal(ks[4], (500, 2000), jnp.float32),
        "fc1_b": s * jax.random.normal(ks[5], (500,), jnp.float32),
        "fc2_w": s * jax.random.normal(ks[6], (10, 500), jnp.float32),
        "fc2_b": s * jax.random.normal(ks[7], (10,), jnp.float32),
    }


def prepare_params(p):
    """One-time re-layout: pre-transpose, zero-pad to lane-dense widths, bf16."""
    # conv1: (10,1,5,5) -> (25,10) -> pad K 25->32, O 10->128
    w1 = p["conv1_w"].reshape(10, 25).T
    w1p = jnp.zeros((32, LANE), jnp.float32).at[:25, :10].set(w1).astype(jnp.bfloat16)
    b1p = jnp.zeros((1, LANE), jnp.float32).at[0, :10].set(p["conv1_b"])
    # conv2: (20,10,3,3) -> (kh,kw,C,O)=(3,3,10,20) -> (90,20) -> pad to (128,128)
    w2 = jnp.transpose(p["conv2_w"], (2, 3, 1, 0)).reshape(90, 20)
    w2p = jnp.zeros((LANE, LANE), jnp.float32).at[:90, :20].set(w2).astype(jnp.bfloat16)
    b2p = jnp.zeros((1, LANE), jnp.float32).at[0, :20].set(p["conv2_b"])
    # fc1: pre-transpose (500,2000) -> (2000,512)
    fc1w = (jnp.zeros((2000, 512), jnp.float32)
            .at[:, :500].set(p["fc1_w"].T).astype(jnp.bfloat16))
    fc1b = jnp.zeros((1, 512), jnp.float32).at[0, :500].set(p["fc1_b"])
    # fc2: pre-transpose (10,500) -> (512,128); padded lanes masked in-kernel
    fc2w = (jnp.zeros((512, LANE), jnp.float32)
            .at[:500, :10].set(p["fc2_w"].T).astype(jnp.bfloat16))
    fc2b = jnp.zeros((1, LANE), jnp.float32).at[0, :10].set(p["fc2_b"])
    return {"w1": w1p, "b1": b1p, "w2": w2p, "b2": b2p,
            "fc1w": fc1w, "fc1b": fc1b, "fc2w": fc2w, "fc2b": fc2b}


def my_conv_net_forward(pp, x):
    """x: (N, 1, 28, 28) f32 -> (N, 10) softmax probabilities."""
    n = x.shape[0]
    img = x[:, 0, :, :]                                      # (N, 28, 28), C_in = 1

    # conv1(5x5) + relu + maxpool(2,2), fused.  Tap (s,t) holds im2col rows of
    # conv1 output pixels (2R+s, 2C+t), R,C in [0,12); kernel takes the 4-way max.
    # TODO(synk): building these im2col taps in-kernel from raw (bm,28,28) image
    # blocks would remove this last bulk HBM glue materialization.
    taps = []
    for s in (0, 1):
        for t in (0, 1):
            cols = [img[:, s + p:s + p + 24:2, t + q:t + q + 24:2]    # (N,12,12)
                    for p in range(5) for q in range(5)]
            tap = jnp.stack(cols, axis=-1).reshape(n * 144, 25)       # row = n*144+R*12+C
            taps.append(jnp.pad(tap, ((0, 0), (0, 7))))               # K 25 -> 32
    taps = jnp.stack(taps, axis=0).astype(jnp.bfloat16)               # (4, N*144, 32)
    h1 = conv1_relu_pool(taps, pp["w1"], pp["b1"])                    # (N*144, 128) bf16
    h1 = h1.reshape(n, 12, 12, LANE)[..., :10]                        # pooled NHWC, 10 real ch

    # conv2(3x3, 10->20) + relu.  im2col over real channels only:
    # feature index = (p*3+q)*10 + c, K = 90 padded to 128 (lane-dense).
    p2 = jnp.concatenate([h1[:, p:p + 10, q:q + 10, :]
                          for p in range(3) for q in range(3)], axis=-1)   # (N,10,10,90)
    p2 = jnp.pad(p2, ((0, 0), (0, 0), (0, 0), (0, LANE - 90)))
    p2 = p2.reshape(n * 100, LANE)                                    # bf16
    h2 = conv2_relu(p2, pp["w2"], pp["b2"])                           # (N*100, 128) bf16

    # Flatten exactly like PyTorch x.view(N,-1) on NCHW: feature = c*100 + h*10 + w.
    # TODO(synk): fold this permutation into fc1w rows (or fuse conv2->fc) so
    # h2 never leaves VMEM; kept as small plain-JAX glue for robustness.
    feat = (jnp.transpose(h2.reshape(n, 100, LANE), (0, 2, 1))[:, :20, :]
            .reshape(n, 2000))                                        # (N, 2000) bf16

    # fc1 + relu + fc2 + masked softmax, fused.  Padded lanes >= 10 come out 0.
    probs = fc_fused(feat, pp["fc1w"], pp["fc1b"], pp["fc2w"], pp["fc2b"])
    return probs[:, :10]


# ------------------------------ reference (JAX) ------------------------------

def reference_forward(params, x):
    """Plain-JAX f32 reference of the PyTorch module (for a tolerance check)."""
    out = jax.lax.conv_general_dilated(
        x, params["conv1_w"], window_strides=(1, 1), padding="VALID",
        dimension_numbers=("NCHW", "OIHW", "NCHW"))
    out = jax.nn.relu(out + params["conv1_b"][None, :, None, None])
    out = jax.lax.reduce_window(out, -jnp.inf, jax.lax.max,
                                (1, 1, 2, 2), (1, 1, 2, 2), "VALID")
    out = jax.lax.conv_general_dilated(
        out, params["conv2_w"], window_strides=(1, 1), padding="VALID",
        dimension_numbers=("NCHW", "OIHW", "NCHW"))
    out = jax.nn.relu(out + params["conv2_b"][None, :, None, None])
    out = out.reshape(x.shape[0], -1)
    out = jax.nn.relu(out @ params["fc1_w"].T + params["fc1_b"])
    out = out @ params["fc2_w"].T + params["fc2_b"]
    return jax.nn.softmax(out, axis=-1)


# ---------------------------------- main -------------------------------------

if __name__ == "__main__":
    key = jax.random.PRNGKey(0)
    k_param, k_input = jax.random.split(key)

    params = init_params(k_param)
    pp = prepare_params(params)
    # fc1 expects 20*10*10 features => 28x28 single-channel input.
    x = jax.random.normal(k_input, (2, 1, 28, 28), jnp.float32)

    fwd = jax.jit(my_conv_net_forward)
    y = jax.block_until_ready(fwd(pp, x))

    assert y.shape == (2, 10)
    row_sums = jnp.sum(y, axis=-1)
    assert bool(jnp.all(jnp.abs(row_sums - 1.0) < 1e-3)), "softmax rows must sum to 1"
    assert bool(jnp.all(y >= 0.0)), "probabilities must be non-negative"

    # bf16 MXU inputs => compare to the f32 reference with a loose tolerance.
    y_ref = jax.block_until_ready(reference_forward(params, x))
    assert bool(jnp.max(jnp.abs(y - y_ref)) < 2e-2), "mismatch vs plain-JAX reference"

    print("KERNEL_OK")
</pallas_src>

<mosaic_0001>
module attributes {stable_mosaic.version = 11 : i64} {
  func.func @_conv1_pool_kernel(%arg0: i32, %arg1: memref<4x144x32xbf16, #tpu.memory_space<vmem>>, %arg2: memref<32x128xbf16, #tpu.memory_space<vmem>>, %arg3: memref<1x128xf32, #tpu.memory_space<vmem>>, %arg4: memref<144x128xbf16, #tpu.memory_space<vmem>>) attributes {dimension_semantics = [#tpu.dimension_semantics<parallel>], iteration_bounds = array<i64: 2>, scalar_prefetch = 0 : i64, scratch_operands = 0 : i64, tpu.core_type = #tpu.core_type<tc>, window_params = [{transform_indices = @transform_0, window_bounds = array<i64: 4, 144, 32>}, {pipeline_mode = #tpu.pipeline_mode<synchronous>, transform_indices = @transform_1, window_bounds = array<i64: 32, 128>}, {pipeline_mode = #tpu.pipeline_mode<synchronous>, transform_indices = @transform_2, window_bounds = array<i64: 1, 128>}, {transform_indices = @transform_3, window_bounds = array<i64: 144, 128>}]} {
    %c0 = arith.constant 0 : index
    %c0_0 = arith.constant 0 : index
    %0 = vector.load %arg2[%c0, %c0_0] : memref<32x128xbf16, #tpu.memory_space<vmem>>, vector<32x128xbf16>
    %c0_1 = arith.constant 0 : index
    %c0_2 = arith.constant 0 : index
    %c0_3 = arith.constant 0 : index
    %1 = vector.load %arg1[%c0_1, %c0_2, %c0_3] : memref<4x144x32xbf16, #tpu.memory_space<vmem>>, vector<1x144x32xbf16>
    %2 = vector.shape_cast %1 : vector<1x144x32xbf16> to vector<144x32xbf16>
    %cst = arith.constant dense<0.000000e+00> : vector<144x128xf32>
    %3 = tpu.matmul %2, %0, %cst {dimension_numbers = #tpu.dot_dimension_numbers<[1], [0], [0], [1], [0, 0, 1, 1], [], []>} : vector<144x32xbf16>, vector<32x128xbf16>, vector<144x128xf32> -> vector<144x128xf32>
    %c1 = arith.constant 1 : index
    %c0_4 = arith.constant 0 : index
    %c0_5 = arith.constant 0 : index
    %4 = vector.load %arg1[%c1, %c0_4, %c0_5] : memref<4x144x32xbf16, #tpu.memory_space<vmem>>, vector<1x144x32xbf16>
    %5 = vector.shape_cast %4 : vector<1x144x32xbf16> to vector<144x32xbf16>
    %cst_6 = arith.constant dense<0.000000e+00> : vector<144x128xf32>
    %6 = tpu.matmul %5, %0, %cst_6 {dimension_numbers = #tpu.dot_dimension_numbers<[1], [0], [0], [1], [0, 0, 1, 1], [], []>} : vector<144x32xbf16>, vector<32x128xbf16>, vector<144x128xf32> -> vector<144x128xf32>
    %c2 = arith.constant 2 : index
    %c0_7 = arith.constant 0 : index
    %c0_8 = arith.constant 0 : index
    %7 = vector.load %arg1[%c2, %c0_7, %c0_8] : memref<4x144x32xbf16, #tpu.memory_space<vmem>>, vector<1x144x32xbf16>
    %8 = vector.shape_cast %7 : vector<1x144x32xbf16> to vector<144x32xbf16>
    %cst_9 = arith.constant dense<0.000000e+00> : vector<144x128xf32>
    %9 = tpu.matmul %8, %0, %cst_9 {dimension_numbers = #tpu.dot_dimension_numbers<[1], [0], [0], [1], [0, 0, 1, 1], [], []>} : vector<144x32xbf16>, vector<32x128xbf16>, vector<144x128xf32> -> vector<144x128xf32>
    %c3 = arith.constant 3 : index
    %c0_10 = arith.constant 0 : index
    %c0_11 = arith.constant 0 : index
    %10 = vector.load %arg1[%c3, %c0_10, %c0_11] : memref<4x144x32xbf16, #tpu.memory_space<vmem>>, vector<1x144x32xbf16>
    %11 = vector.shape_cast %10 : vector<1x144x32xbf16> to vector<144x32xbf16>
    %cst_12 = arith.constant dense<0.000000e+00> : vector<144x128xf32>
    %12 = tpu.matmul %11, %0, %cst_12 {dimension_numbers = #tpu.dot_dimension_numbers<[1], [0], [0], [1], [0, 0, 1, 1], [], []>} : vector<144x32xbf16>, vector<32x128xbf16>, vector<144x128xf32> -> vector<144x128xf32>
    %13 = arith.maximumf %3, %6 : vector<144x128xf32>
    %14 = arith.maximumf %9, %12 : vector<144x128xf32>
    %15 = arith.maximumf %13, %14 : vector<144x128xf32>
    %c0_13 = arith.constant 0 : index
    %c0_14 = arith.constant 0 : index
    %16 = vector.load %arg3[%c0_13, %c0_14] : memref<1x128xf32, #tpu.memory_space<vmem>>, vector<1x128xf32>
    %17 = vector.broadcast %16 : vector<1x128xf32> to vector<144x128xf32>
    %18 = arith.addf %15, %17 : vector<144x128xf32>
    %cst_15 = arith.constant 0.000000e+00 : f32
    %19 = vector.broadcast %cst_15 : f32 to vector<144x128xf32>
    %20 = arith.maximumf %18, %19 : vector<144x128xf32>
    %21 = arith.truncf %20 : vector<144x128xf32> to vector<144x128xbf16>
    %c0_16 = arith.constant 0 : index
    %c0_17 = arith.constant 0 : index
    %22 = vector.load %arg4[%c0_16, %c0_17] : memref<144x128xbf16, #tpu.memory_space<vmem>>, vector<144x128xbf16>
    tpu.vector_store %arg4[%c0_16, %c0_17], %21 {strides = array<i32>} : memref<144x128xbf16, #tpu.memory_space<vmem>>, vector<144x128xbf16>,
    return
  }
  func.func @transform_0(%arg0: i32) -> (i32, i32, i32) {
    %c0_i32 = arith.constant 0 : i32
    %c0_i32_0 = arith.constant 0 : i32
    %c0_i32_1 = arith.constant 0 : i32
    return %c0_i32, %arg0, %c0_i32_0 : i32, i32, i32
  }
  func.func @transform_1(%arg0: i32) -> (i32, i32) {
    %c0_i32 = arith.constant 0 : i32
    %c0_i32_0 = arith.constant 0 : i32
    %c0_i32_1 = arith.constant 0 : i32
    return %c0_i32, %c0_i32_0 : i32, i32
  }
  func.func @transform_2(%arg0: i32) -> (i32, i32) {
    %c0_i32 = arith.constant 0 : i32
    %c0_i32_0 = arith.constant 0 : i32
    %c0_i32_1 = arith.constant 0 : i32
    return %c0_i32, %c0_i32_0 : i32, i32
  }
  func.func @transform_3(%arg0: i32) -> (i32, i32) {
    %c0_i32 = arith.constant 0 : i32
    %c0_i32_0 = arith.constant 0 : i32
    return %arg0, %c0_i32 : i32, i32
  }
}

module attributes {stable_mosaic.version = 11 : i64} {
  func.func @_conv2_kernel(%arg0: i32, %arg1: memref<112x128xbf16, #tpu.memory_space<vmem>>, %arg2: memref<128x128xbf16, #tpu.memory_space<vmem>>, %arg3: memref<1x128xf32, #tpu.memory_space<vmem>>, %arg4: memref<112x128xbf16, #tpu.memory_space<vmem>>) attributes {dimension_semantics = [#tpu.dimension_semantics<parallel>], iteration_bounds = array<i64: 2>, scalar_prefetch = 0 : i64, scratch_operands = 0 : i64, tpu.core_type = #tpu.core_type<tc>, window_params = [{transform_indices = @transform_0, window_bounds = array<i64: 112, 128>}, {pipeline_mode = #tpu.pipeline_mode<synchronous>, transform_indices = @transform_1, window_bounds = array<i64: 128, 128>}, {pipeline_mode = #tpu.pipeline_mode<synchronous>, transform_indices = @transform_2, window_bounds = array<i64: 1, 128>}, {transform_indices = @transform_3, window_bounds = array<i64: 112, 128>}]} {
    %c0 = arith.constant 0 : index
    %c0_0 = arith.constant 0 : index
    %0 = vector.load %arg1[%c0, %c0_0] : memref<112x128xbf16, #tpu.memory_space<vmem>>, vector<112x128xbf16>
    %c0_1 = arith.constant 0 : index
    %c0_2 = arith.constant 0 : index
    %1 = vector.load %arg2[%c0_1, %c0_2] : memref<128x128xbf16, #tpu.memory_space<vmem>>, vector<128x128xbf16>
    %cst = arith.constant dense<0.000000e+00> : vector<112x128xf32>
    %2 = tpu.matmul %0, %1, %cst {dimension_numbers = #tpu.dot_dimension_numbers<[1], [0], [0], [1], [0, 0, 1, 1], [], []>} : vector<112x128xbf16>, vector<128x128xbf16>, vector<112x128xf32> -> vector<112x128xf32>
    %c0_3 = arith.constant 0 : index
    %c0_4 = arith.constant 0 : index
    %3 = vector.load %arg3[%c0_3, %c0_4] : memref<1x128xf32, #tpu.memory_space<vmem>>, vector<1x128xf32>
    %4 = vector.broadcast %3 : vector<1x128xf32> to vector<112x128xf32>
    %5 = arith.addf %2, %4 : vector<112x128xf32>
    %cst_5 = arith.constant 0.000000e+00 : f32
    %6 = vector.broadcast %cst_5 : f32 to vector<112x128xf32>
    %7 = arith.maximumf %5, %6 : vector<112x128xf32>
    %8 = arith.truncf %7 : vector<112x128xf32> to vector<112x128xbf16>
    %c0_6 = arith.constant 0 : index
    %c0_7 = arith.constant 0 : index
    %9 = vector.load %arg4[%c0_6, %c0_7] : memref<112x128xbf16, #tpu.memory_space<vmem>>, vector<112x128xbf16>
    tpu.vector_store %arg4[%c0_6, %c0_7], %8 {strides = array<i32>} : memref<112x128xbf16, #tpu.memory_space<vmem>>, vector<112x128xbf16>,
    return
  }
  func.func @transform_0(%arg0: i32) -> (i32, i32) {
    %c0_i32 = arith.constant 0 : i32
    %c0_i32_0 = arith.constant 0 : i32
    return %arg0, %c0_i32 : i32, i32
  }
  func.func @transform_1(%arg0: i32) -> (i32, i32) {
    %c0_i32 = arith.constant 0 : i32
    %c0_i32_0 = arith.constant 0 : i32
    %c0_i32_1 = arith.constant 0 : i32
    return %c0_i32, %c0_i32_0 : i32, i32
  }
  func.func @transform_2(%arg0: i32) -> (i32, i32) {
    %c0_i32 = arith.constant 0 : i32
    %c0_i32_0 = arith.constant 0 : i32
    %c0_i32_1 = arith.constant 0 : i32
    return %c0_i32, %c0_i32_0 : i32, i32
  }
  func.func @transform_3(%arg0: i32) -> (i32, i32) {
    %c0_i32 = arith.constant 0 : i32
    %c0_i32_0 = arith.constant 0 : i32
    return %arg0, %c0_i32 : i32, i32
  }
}

module attributes {stable_mosaic.version = 11 : i64} {
  func.func @_fc_kernel(%arg0: i32, %arg1: memref<16x2000xbf16, #tpu.memory_space<vmem>>, %arg2: memref<2000x512xbf16, #tpu.memory_space<vmem>>, %arg3: memref<1x512xf32, #tpu.memory_space<vmem>>, %arg4: memref<512x128xbf16, #tpu.memory_space<vmem>>, %arg5: memref<1x128xf32, #tpu.memory_space<vmem>>, %arg6: memref<16x128xf32, #tpu.memory_space<vmem>>) attributes {dimension_semantics = [#tpu.dimension_semantics<parallel>], iteration_bounds = array<i64: 2>, scalar_prefetch = 0 : i64, scratch_operands = 0 : i64, tpu.core_type = #tpu.core_type<tc>, window_params = [{transform_indices = @transform_0, window_bounds = array<i64: 16, 2000>}, {pipeline_mode = #tpu.pipeline_mode<synchronous>, transform_indices = @transform_1, window_bounds = array<i64: 2000, 512>}, {pipeline_mode = #tpu.pipeline_mode<synchronous>, transform_indices = @transform_2, window_bounds = array<i64: 1, 512>}, {pipeline_mode = #tpu.pipeline_mode<synchronous>, transform_indices = @transform_3, window_bounds = array<i64: 512, 128>}, {pipeline_mode = #tpu.pipeline_mode<synchronous>, transform_indices = @transform_4, window_bounds = array<i64: 1, 128>}, {transform_indices = @transform_5, window_bounds = array<i64: 16, 128>}]} {
    %c0 = arith.constant 0 : index
    %c0_0 = arith.constant 0 : index
    %0 = vector.load %arg1[%c0, %c0_0] : memref<16x2000xbf16, #tpu.memory_space<vmem>>, vector<16x2000xbf16>
    %c0_1 = arith.constant 0 : index
    %c0_2 = arith.constant 0 : index
    %1 = vector.load %arg2[%c0_1, %c0_2] : memref<2000x512xbf16, #tpu.memory_space<vmem>>, vector<2000x512xbf16>
    %cst = arith.constant dense<0.000000e+00> : vector<16x512xf32>
    %2 = tpu.matmul %0, %1, %cst {dimension_numbers = #tpu.dot_dimension_numbers<[1], [0], [0], [1], [0, 0, 1, 1], [], []>} : vector<16x2000xbf16>, vector<2000x512xbf16>, vector<16x512xf32> -> vector<16x512xf32>
    %c0_3 = arith.constant 0 : index
    %c0_4 = arith.constant 0 : index
    %3 = vector.load %arg3[%c0_3, %c0_4] : memref<1x512xf32, #tpu.memory_space<vmem>>, vector<1x512xf32>
    %4 = vector.broadcast %3 : vector<1x512xf32> to vector<16x512xf32>
    %5 = arith.addf %2, %4 : vector<16x512xf32>
    %cst_5 = arith.constant 0.000000e+00 : f32
    %6 = vector.broadcast %cst_5 : f32 to vector<16x512xf32>
    %7 = arith.maximumf %5, %6 : vector<16x512xf32>
    %8 = arith.truncf %7 : vector<16x512xf32> to vector<16x512xbf16>
    %c0_6 = arith.constant 0 : index
    %c0_7 = arith.constant 0 : index
    %9 = vector.load %arg4[%c0_6, %c0_7] : memref<512x128xbf16, #tpu.memory_space<vmem>>, vector<512x128xbf16>
    %cst_8 = arith.constant dense<0.000000e+00> : vector<16x128xf32>
    %10 = tpu.matmul %8, %9, %cst_8 {dimension_numbers = #tpu.dot_dimension_numbers<[1], [0], [0], [1], [0, 0, 1, 1], [], []>} : vector<16x512xbf16>, vector<512x128xbf16>, vector<16x128xf32> -> vector<16x128xf32>
    %c0_9 = arith.constant 0 : index
    %c0_10 = arith.constant 0 : index
    %11 = vector.load %arg5[%c0_9, %c0_10] : memref<1x128xf32, #tpu.memory_space<vmem>>, vector<1x128xf32>
    %12 = vector.broadcast %11 : vector<1x128xf32> to vector<16x128xf32>
    %13 = arith.addf %10, %12 : vector<16x128xf32>
    %14 = tpu.iota {dimensions = array<i32: 1>} : vector<16x128xi32>
    %c10_i32 = arith.constant 10 : i32
    %15 = vector.broadcast %c10_i32 : i32 to vector<16x128xi32>
    %16 = arith.cmpi slt, %14, %15 : vector<16x128xi32>
    %cst_11 = arith.constant -1.000000e+30 : f32
    %17 = vector.broadcast %cst_11 : f32 to vector<16x128xf32>
    %18 = arith.select %16, %13, %17 : vector<16x128xi1>, vector<16x128xf32>
    %cst_12 = arith.constant dense<0xFF800000> : vector<16xf32>
    %19 = vector.multi_reduction <maximumf>, %18, %cst_12 [1] : vector<16x128xf32> to vector<16xf32>
    %20 = vector.shape_cast %19 : vector<16xf32> to vector<16x1xf32>
    %21 = vector.broadcast %20 : vector<16x1xf32> to vector<16x128xf32>
    %22 = arith.subf %18, %21 : vector<16x128xf32>
    %23 = math.exp %22 : vector<16x128xf32>
    %cst_13 = arith.constant 0.000000e+00 : f32
    %24 = vector.broadcast %cst_13 : f32 to vector<16x128xf32>
    %25 = arith.select %16, %23, %24 : vector<16x128xi1>, vector<16x128xf32>
    %cst_14 = arith.constant dense<0.000000e+00> : vector<16xf32>
    %26 = vector.multi_reduction <add>, %25, %cst_14 [1] : vector<16x128xf32> to vector<16xf32>
    %27 = vector.shape_cast %26 : vector<16xf32> to vector<16x1xf32>
    %28 = vector.broadcast %27 : vector<16x1xf32> to vector<16x128xf32>
    %29 = arith.divf %25, %28 : vector<16x128xf32>
    %c0_15 = arith.constant 0 : index
    %c0_16 = arith.constant 0 : index
    %30 = vector.load %arg6[%c0_15, %c0_16] : memref<16x128xf32, #tpu.memory_space<vmem>>, vector<16x128xf32>
    tpu.vector_store %arg6[%c0_15, %c0_16], %29 {strides = array<i32>} : memref<16x128xf32, #tpu.memory_space<vmem>>, vector<16x128xf32>,
    return
  }
  func.func @transform_0(%arg0: i32) -> (i32, i32) {
    %c0_i32 = arith.constant 0 : i32
    %c0_i32_0 = arith.constant 0 : i32
    return %arg0, %c0_i32 : i32, i32
  }
  func.func @transform_1(%arg0: i32) -> (i32, i32) {
    %c0_i32 = arith.constant 0 : i32
    %c0_i32_0 = arith.constant 0 : i32
    %c0_i32_1 = arith.constant 0 : i32
    return %c0_i32, %c0_i32_0 : i32, i32
  }
  func.func @transform_2(%arg0: i32) -> (i32, i32) {
    %c0_i32 = arith.constant 0 : i32
    %c0_i32_0 = arith.constant 0 : i32
    %c0_i32_1 = arith.constant 0 : i32
    return %c0_i32, %c0_i32_0 : i32, i32
  }
  func.func @transform_3(%arg0: i32) -> (i32, i32) {
    %c0_i32 = arith.constant 0 : i32
    %c0_i32_0 = arith.constant 0 : i32
    %c0_i32_1 = arith.constant 0 : i32
    return %c0_i32, %c0_i32_0 : i32, i32
  }
  func.func @transform_4(%arg0: i32) -> (i32, i32) {
    %c0_i32 = arith.constant 0 : i32
    %c0_i32_0 = arith.constant 0 : i32
    %c0_i32_1 = arith.constant 0 : i32
    return %c0_i32, %c0_i32_0 : i32, i32
  }
  func.func @transform_5(%arg0: i32) -> (i32, i32) {
    %c0_i32 = arith.constant 0 : i32
    %c0_i32_0 = arith.constant 0 : i32
    return %arg0, %c0_i32 : i32, i32
  }
}

</mosaic_0001>

<llo_original>
// kernel: my_conv_net_forward.3
$region0: #{my_conv_net_forward.3}
  #allocation0 [shape = 'u32[]', space=smem, size = 0x4, offset = 0x4, fixed_abs, tag = 'smem constant byte address 0x4 - core index']
  #allocation1 [shape = 'u32[144,128]{1,0:T(1,128)}', space=vmem, size = 0x12000, scoped, tag = 'internal scratch']
  %s0 = inlined_call_operand.vmem [shape: bf16[4,288,32], index: 0, kind: input, shape index: {}]
  %s1 = inlined_call_operand.vmem [shape: bf16[32,128], index: 1, kind: input, shape index: {}]
  %s2 = inlined_call_operand.vmem [shape: f32[1,128], index: 2, kind: input, shape index: {}]
  %s3 = inlined_call_operand.vmem [shape: bf16[288,128], index: 3, kind: output, shape index: {}]
  %s4 = sld [smem:[#allocation0]]
  $region86: #{my_conv_net_forward.3} parent=0
    _
  %s6 = ssub.s32 1, %s4
  %s7 = scalar_select 0, %s6, %s4
  $region1: #{my_conv_net_forward.3} parent=0
    #allocation2 [shape = 'u8[294912]{0}', space=vmem, size = 0x48000, scoped, tag = 'input window, operand 0']
    loop: start=0, step=1, limit=4
    $region2: #{my_conv_net_forward.3} parent=1 // loop_pre_header
      _
    $region3: #{my_conv_net_forward.3} parent=1 // loop_header
      %s9 = sphi 0, %s13
      %p10 = scmp.ge.s32.totalorder %s9, 4
      %s19 = sphi 0, %s21
      %s22 = sphi 0, %s19
      %s23 = sphi 0, %s22
      %s39 = sphi 0, %s23
      %s43 = sphi 0, %s43
      %s45 = sphi 0, %s43
      %s46 = sphi 0, %s45
      %s60 = sphi 0, %s46
      %s64 = sphi 0, %s64
      %s66 = sphi 0, %s64
      %s67 = sphi 0, %s66
      %s81 = sphi 0, %s67
      %s87 = sphi 0, %s89
      %s90 = sphi 0, %s87
      %s91 = sphi 0, %s90
      %s107 = sphi 0, %s91
    $region4: #{my_conv_net_forward.3} parent=1 // loop_header_branch
      %12 = sbr.rel (%p10) target = $region8
    $region5: #{my_conv_net_forward.3} parent=1 // loop_body
      %s14 = ssub.s32 %s9, 1
      %s15 = ssub.s32 %s9, 2
      %s16 = sadd.s32 %s9, 1
      %s17 = ssub.s32 %s9, %s16
      %p18 = scmp.eq.s32.totalorder %s17, 0
      %s20 = sadd.s32 %s19, 1
      %s21 = scalar_select %p18, %s19, %s20
      %p24 = pneg %p18
      %p25 = scmp.eq.s32.totalorder %s9, 1
      %p26 = por %p24, %p25
      %p27 = scmp.ne.s32.totalorder %s19, %s22
      %p28 = scmp.eq.s32.totalorder %s9, 0
      %p29 = por %p27, %p28
      %p30 = scmp.ne.s32.totalorder %s19, %s22
      %p31 = scmp.eq.s32.totalorder %s14, 1
      %p32 = por %p30, %p31
      %p33 = scmp.ne.s32.totalorder %s22, %s23
      %p34 = scmp.eq.s32.totalorder %s14, 0
      %p35 = por %p33, %p34
      %p36 = scmp.ne.s32.totalorder %s22, %s23
      %p37 = scmp.eq.s32.totalorder %s15, 1
      %p38 = por %p36, %p37
      %p40 = scmp.ne.s32.totalorder %s23, %s39
      %p41 = scmp.eq.s32.totalorder %s15, 0
      %p42 = por %p40, %p41
      %s44 = sadd.s32 %s43, 1
      %p47 = scmp.eq.s32.totalorder %s9, 1
      %p48 = scmp.ne.s32.totalorder %s43, %s45
      %p49 = scmp.eq.s32.totalorder %s9, 0
      %p50 = por %p48, %p49
      %p51 = scmp.ne.s32.totalorder %s43, %s45
      %p52 = scmp.eq.s32.totalorder %s14, 1
      %p53 = por %p51, %p52
      %p54 = scmp.ne.s32.totalorder %s45, %s46
      %p55 = scmp.eq.s32.totalorder %s14, 0
      %p56 = por %p54, %p55
      %p57 = scmp.ne.s32.totalorder %s45, %s46
      %p58 = scmp.eq.s32.totalorder %s15, 1
      %p59 = por %p57, %p58
      %p61 = scmp.ne.s32.totalorder %s46, %s60
      %p62 = scmp.eq.s32.totalorder %s15, 0
      %p63 = por %p61, %p62
      %s65 = sadd.s32 %s64, 1
      %p68 = scmp.eq.s32.totalorder %s9, 1
      %p69 = scmp.ne.s32.totalorder %s64, %s66
      %p70 = scmp.eq.s32.totalorder %s9, 0
      %p71 = por %p69, %p70
      %p72 = scmp.ne.s32.totalorder %s64, %s66
      %p73 = scmp.eq.s32.totalorder %s14, 1
      %p74 = por %p72, %p73
      %p75 = scmp.ne.s32.totalorder %s66, %s67
      %p76 = scmp.eq.s32.totalorder %s14, 0
      %p77 = por %p75, %p76
      %p78 = scmp.ne.s32.totalorder %s66, %s67
      %p79 = scmp.eq.s32.totalorder %s15, 1
      %p80 = por %p78, %p79
      %p82 = scmp.ne.s32.totalorder %s67, %s81
      %p83 = scmp.eq.s32.totalorder %s15, 0
      %p84 = por %p82, %p83
      %s85 = ssub.s32 %s9, %s16
      %p86 = scmp.eq.s32.totalorder %s85, 0
      %s88 = sadd.s32 %s87, 1
      %s89 = scalar_select %p86, %s87, %s88
      %p92 = pneg %p86
      %p93 = scmp.eq.s32.totalorder %s9, 1
      %p94 = por %p92, %p93
      %p95 = scmp.ne.s32.totalorder %s87, %s90
      %p96 = scmp.eq.s32.totalorder %s9, 0
      %p97 = por %p95, %p96
      %p98 = scmp.ne.s32.totalorder %s87, %s90
      %p99 = scmp.eq.s32.totalorder %s14, 1
      %p100 = por %p98, %p99
      %p101 = scmp.ne.s32.totalorder %s90, %s91
      %p102 = scmp.eq.s32.totalorder %s14, 0
      %p103 = por %p101, %p102
      %p104 = scmp.ne.s32.totalorder %s90, %s91
      %p105 = scmp.eq.s32.totalorder %s15, 1
      %p106 = por %p104, %p105
      %p108 = scmp.ne.s32.totalorder %s91, %s107
      %p109 = scmp.eq.s32.totalorder %s15, 0
      %p110 = por %p108, %p109
      %p111 = scmp.le.s32.totalorder 1, %s9
      %p112 = scmp.lt.s32.totalorder %s9, 3
      %p113 = pnand %p111, %p112
      %p114 = pneg %p113
      // Predicated region
      $region9: #{my_conv_net_forward.3} parent=5 // pred_check
        _
      $region10: #{my_conv_net_forward.3} parent=5 // pred_check_branch
        %116 = sbr.rel (%p113) target = $region12
      $region11: #{my_conv_net_forward.3} parent=5 // pred_region
        %s117 = ssub.s32 %s9, 1
        // Predicated region
        $region13: #{my_conv_net_forward.3} parent=11 // pred_check
          %p118 = pneg %p56
        $region14: #{my_conv_net_forward.3} parent=11 // pred_check_branch
          %120 = sbr.rel (%p118) target = $region16
        $region15: #{my_conv_net_forward.3} parent=11 // pred_region
          _
        $region16: #{my_conv_net_forward.3} parent=11 // pred_fallthru
          _
        // Predicated region
        $region17: #{my_conv_net_forward.3} parent=11 // pred_check
          %p121 = pneg %p77
        $region18: #{my_conv_net_forward.3} parent=11 // pred_check_branch
          %123 = sbr.rel (%p121) target = $region20
        $region19: #{my_conv_net_forward.3} parent=11 // pred_region
          _
        $region20: #{my_conv_net_forward.3} parent=11 // pred_fallthru
          _
      $region12: #{my_conv_net_forward.3} parent=5 // pred_fallthru
        _
      %p124 = scmp.lt.s32.totalorder %s9, 2
      // Predicated region
      $region21: #{my_conv_net_forward.3} parent=5 // pred_check
        %p125 = pneg %p124
      $region22: #{my_conv_net_forward.3} parent=5 // pred_check_branch
        %127 = sbr.rel (%p125) target = $region24
      $region23: #{my_conv_net_forward.3} parent=5 // pred_region
        // Predicated region
        $region25: #{my_conv_net_forward.3} parent=23 // pred_check
          %p128 = pneg %p29
        $region26: #{my_conv_net_forward.3} parent=23 // pred_check_branch
          %130 = sbr.rel (%p128) target = $region28
        $region27: #{my_conv_net_forward.3} parent=23 // pred_region
          %s131 = sand.u32 %s19, 1
          %s132 = sand.u32 %s19, 1
          %s133 = smul.addr %s132, 288
          %s134 = scalar_lea.vmem [#allocation2], %s133
          %s135 = smul.u32 18, %s9
          %s136 = smul.addr %s135, 4
          %s137 = scalar_lea.vmem %s0, %s136
          // Predicated region
          $region29: #{my_conv_net_forward.3} parent=27 // pred_check
            _
          $region30: #{my_conv_net_forward.3} parent=27 // pred_check_branch
            %139 = sbr.rel (0) target = $region32
          $region31: #{my_conv_net_forward.3} parent=27 // pred_region
            // Predicated region
            $region33: #{my_conv_net_forward.3} parent=31 // pred_check
              _
            $region34: #{my_conv_net_forward.3} parent=31 // pred_check_branch
              %141 = sbr.rel target = $region36
            $region35: #{my_conv_net_forward.3} parent=31 // pred_region
              // Predicated region
              $region48: #{my_conv_net_forward.3} parent=35 // pred_check
                _
              $region49: #{my_conv_net_forward.3} parent=35 // pred_check_branch
                %299 = sbr.rel (0) target = $region51
              $region50: #{my_conv_net_forward.3} parent=35 // pred_region
                loop: start=0, step=1, limit=1
                $region52: #{my_conv_net_forward.3} parent=50 // loop_pre_header
                  _
                $region53: #{my_conv_net_forward.3} parent=50 // loop_header
                  %s301 = sphi 0, %s305
                  %p302 = scmp.ge.s32.totalorder %s301, 1
                  %s306 = sphi %s137, %s137
                  %s307 = sphi %s134, %s134
                $region54: #{my_conv_net_forward.3} parent=50 // loop_header_branch
                  %304 = sbr.rel (%p302) target = $region58
                $region55: #{my_conv_net_forward.3} parent=50 // loop_body
                  _
                $region56: #{my_conv_net_forward.3} parent=50 // loop_footer
                  %s305 = sadd.s32 1, %s301
                $region57: #{my_conv_net_forward.3} parent=50 // loop_footer_branch
                  %300 = sbr.rel target = $region53
                $region58: #{my_conv_net_forward.3} parent=50 // loop_exit
                  _
                %s309 = ssub.s32 16, 1
                loop: start=0, step=1, limit=1
                $region59: #{my_conv_net_forward.3} parent=50 // loop_pre_header
                  _
                $region60: #{my_conv_net_forward.3} parent=50 // loop_header
                  %s311 = sphi 0, %s315
                  %p312 = scmp.ge.s32.totalorder %s311, 1
                  %s316 = sphi %s137, %s137
                  %s317 = sphi %s134, %s134
                $region61: #{my_conv_net_forward.3} parent=50 // loop_header_branch
                  %314 = sbr.rel (%p312) target = $region65
                $region62: #{my_conv_net_forward.3} parent=50 // loop_body
                  %v318 = vld [vmem:[%s316] sm:%s309]
                  %319 = vst [vmem:[%s317] sm:%s309] %v318
                  %v320 = vld [vmem:[%s316 + $0x4] sm:%s309]
                  %321 = vst [vmem:[%s317 + $0x4] sm:%s309] %v320
                  %v322 = vld [vmem:[%s316 + $0x8] sm:%s309]
                  %323 = vst [vmem:[%s317 + $0x8] sm:%s309] %v322
                  %v324 = vld [vmem:[%s316 + $0xc] sm:%s309]
                  %325 = vst [vmem:[%s317 + $0xc] sm:%s309] %v324
                  %v326 = vld [vmem:[%s316 + $0x10] sm:%s309]
                  %327 = vst [vmem:[%s317 + $0x10] sm:%s309] %v326
                  %v328 = vld [vmem:[%s316 + $0x14] sm:%s309]
                  %329 = vst [vmem:[%s317 + $0x14] sm:%s309] %v328
                  %v330 = vld [vmem:[%s316 + $0x18] sm:%s309]
                  %331 = vst [vmem:[%s317 + $0x18] sm:%s309] %v330
                  %v332 = vld [vmem:[%s316 + $0x1c] sm:%s309]
                  %333 = vst [vmem:[%s317 + $0x1c] sm:%s309] %v332
                  %v334 = vld [vmem:[%s316 + $0x20] sm:%s309]
                  %335 = vst [vmem:[%s317 + $0x20] sm:%s309] %v334
                  %v336 = vld [vmem:[%s316 + $0x24] sm:%s309]
                  %337 = vst [vmem:[%s317 + $0x24] sm:%s309] %v336
                  %v338 = vld [vmem:[%s316 + $0x28] sm:%s309]
                  %339 = vst [vmem:[%s317 + $0x28] sm:%s309] %v338
                  %v340 = vld [vmem:[%s316 + $0x2c] sm:%s309]
                  %341 = vst [vmem:[%s317 + $0x2c] sm:%s309] %v340
                  %v342 = vld [vmem:[%s316 + $0x30] sm:%s309]
                  %343 = vst [vmem:[%s317 + $0x30] sm:%s309] %v342
                  %v344 = vld [vmem:[%s316 + $0x34] sm:%s309]
                  %345 = vst [vmem:[%s317 + $0x34] sm:%s309] %v344
                  %v346 = vld [vmem:[%s316 + $0x38] sm:%s309]
                  %347 = vst [vmem:[%s317 + $0x38] sm:%s309] %v346
                  %v348 = vld [vmem:[%s316 + $0x3c] sm:%s309]
                  %349 = vst [vmem:[%s317 + $0x3c] sm:%s309] %v348
                  %v350 = vld [vmem:[%s316 + $0x40] sm:%s309]
                  %351 = vst [vmem:[%s317 + $0x40] sm:%s309] %v350
                  %v352 = vld [vmem:[%s316 + $0x44] sm:%s309]
                  %353 = vst [vmem:[%s317 + $0x44] sm:%s309] %v352
                  %v354 = vld [vmem:[%s316 + $0x90] sm:%s309]
                  %355 = vst [vmem:[%s317 + $0x48] sm:%s309] %v354
                  %v356 = vld [vmem:[%s316 + $0x94] sm:%s309]
                  %357 = vst [vmem:[%s317 + $0x4c] sm:%s309] %v356
                  %v358 = vld [vmem:[%s316 + $0x98] sm:%s309]
                  %359 = vst [vmem:[%s317 + $0x50] sm:%s309] %v358
                  %v360 = vld [vmem:[%s316 + $0x9c] sm:%s309]
                  %361 = vst [vmem:[%s317 + $0x54] sm:%s309] %v360
                  %v362 = vld [vmem:[%s316 + $0xa0] sm:%s309]
                  %363 = vst [vmem:[%s317 + $0x58] sm:%s309] %v362
                  %v364 = vld [vmem:[%s316 + $0xa4] sm:%s309]
                  %365 = vst [vmem:[%s317 + $0x5c] sm:%s309] %v364
                  %v366 = vld [vmem:[%s316 + $0xa8] sm:%s309]
                  %367 = vst [vmem:[%s317 + $0x60] sm:%s309] %v366
                  %v368 = vld [vmem:[%s316 + $0xac] sm:%s309]
                  %369 = vst [vmem:[%s317 + $0x64] sm:%s309] %v368
                  %v370 = vld [vmem:[%s316 + $0xb0] sm:%s309]
                  %371 = vst [vmem:[%s317 + $0x68] sm:%s309] %v370
                  %v372 = vld [vmem:[%s316 + $0xb4] sm:%s309]
                  %373 = vst [vmem:[%s317 + $0x6c] sm:%s309] %v372
                  %v374 = vld [vmem:[%s316 + $0xb8] sm:%s309]
                  %375 = vst [vmem:[%s317 + $0x70] sm:%s309] %v374
                  %v376 = vld [vmem:[%s316 + $0xbc] sm:%s309]
                  %377 = vst [vmem:[%s317 + $0x74] sm:%s309] %v376
                  %v378 = vld [vmem:[%s316 + $0xc0] sm:%s309]
                  %379 = vst [vmem:[%s317 + $0x78] sm:%s309] %v378
                  %v380 = vld [vmem:[%s316 + $0xc4] sm:%s309]
                  %381 = vst [vmem:[%s317 + $0x7c] sm:%s309] %v380
                  %v382 = vld [vmem:[%s316 + $0xc8] sm:%s309]
                  %383 = vst [vmem:[%s317 + $0x80] sm:%s309] %v382
                  %v384 = vld [vmem:[%s316 + $0xcc] sm:%s309]
                  %385 = vst [vmem:[%s317 + $0x84] sm:%s309] %v384
                  %v386 = vld [vmem:[%s316 + $0xd0] sm:%s309]
                  %387 = vst [vmem:[%s317 + $0x88] sm:%s309] %v386
                  %v388 = vld [vmem:[%s316 + $0xd4] sm:%s309]
                  %389 = vst [vmem:[%s317 + $0x8c] sm:%s309] %v388
                  %v390 = vld [vmem:[%s316 + $0x120] sm:%s309]
                  %391 = vst [vmem:[%s317 + $0x90] sm:%s309] %v390
                  %v392 = vld [vmem:[%s316 + $0x124] sm:%s309]
                  %393 = vst [vmem:[%s317 + $0x94] sm:%s309] %v392
                  %v394 = vld [vmem:[%s316 + $0x128] sm:%s309]
                  %395 = vst [vmem:[%s317 + $0x98] sm:%s309] %v394
                  %v396 = vld [vmem:[%s316 + $0x12c] sm:%s309]
                  %397 = vst [vmem:[%s317 + $0x9c] sm:%s309] %v396
                  %v398 = vld [vmem:[%s316 + $0x130] sm:%s309]
                  %399 = vst [vmem:[%s317 + $0xa0] sm:%s309] %v398
                  %v400 = vld [vmem:[%s316 + $0x134] sm:%s309]
                  %401 = vst [vmem:[%s317 + $0xa4] sm:%s309] %v400
                  %v402 = vld [vmem:[%s316 + $0x138] sm:%s309]
                  %403 = vst [vmem:[%s317 + $0xa8] sm:%s309] %v402
                  %v404 = vld [vmem:[%s316 + $0x13c] sm:%s309]
                  %405 = vst [vmem:[%s317 + $0xac] sm:%s309] %v404
                  %v406 = vld [vmem:[%s316 + $0x140] sm:%s309]
                  %407 = vst [vmem:[%s317 + $0xb0] sm:%s309] %v406
                  %v408 = vld [vmem:[%s316 + $0x144] sm:%s309]
                  %409 = vst [vmem:[%s317 + $0xb4] sm:%s309] %v408
                  %v410 = vld [vmem:[%s316 + $0x148] sm:%s309]
                  %411 = vst [vmem:[%s317 + $0xb8] sm:%s309] %v410
                  %v412 = vld [vmem:[%s316 + $0x14c] sm:%s309]
                  %413 = vst [vmem:[%s317 + $0xbc] sm:%s309] %v412
                  %v414 = vld [vmem:[%s316 + $0x150] sm:%s309]
                  %415 = vst [vmem:[%s317 + $0xc0] sm:%s309] %v414
                  %v416 = vld [vmem:[%s316 + $0x154] sm:%s309]
                  %417 = vst [vmem:[%s317 + $0xc4] sm:%s309] %v416
                  %v418 = vld [vmem:[%s316 + $0x158] sm:%s309]
                  %419 = vst [vmem:[%s317 + $0xc8] sm:%s309] %v418
                  %v420 = vld [vmem:[%s316 + $0x15c] sm:%s309]
                  %421 = vst [vmem:[%s317 + $0xcc] sm:%s309] %v420
                  %v422 = vld [vmem:[%s316 + $0x160] sm:%s309]
                  %423 = vst [vmem:[%s317 + $0xd0] sm:%s309] %v422
                  %v424 = vld [vmem:[%s316 + $0x164] sm:%s309]
                  %425 = vst [vmem:[%s317 + $0xd4] sm:%s309] %v424
                  %v426 = vld [vmem:[%s316 + $0x1b0] sm:%s309]
                  %427 = vst [vmem:[%s317 + $0xd8] sm:%s309] %v426
                  %v428 = vld [vmem:[%s316 + $0x1b4] sm:%s309]
                  %429 = vst [vmem:[%s317 + $0xdc] sm:%s309] %v428
                  %v430 = vld [vmem:[%s316 + $0x1b8] sm:%s309]
                  %431 = vst [vmem:[%s317 + $0xe0] sm:%s309] %v430
                  %v432 = vld [vmem:[%s316 + $0x1bc] sm:%s309]
                  %433 = vst [vmem:[%s317 + $0xe4] sm:%s309] %v432
                  %v434 = vld [vmem:[%s316 + $0x1c0] sm:%s309]
                  %435 = vst [vmem:[%s317 + $0xe8] sm:%s309] %v434
                  %v436 = vld [vmem:[%s316 + $0x1c4] sm:%s309]
                  %437 = vst [vmem:[%s317 + $0xec] sm:%s309] %v436
                  %v438 = vld [vmem:[%s316 + $0x1c8] sm:%s309]
                  %439 = vst [vmem:[%s317 + $0xf0] sm:%s309] %v438
                  %v440 = vld [vmem:[%s316 + $0x1cc] sm:%s309]
                  %441 = vst [vmem:[%s317 + $0xf4] sm:%s309] %v440
                  %v442 = vld [vmem:[%s316 + $0x1d0] sm:%s309]
                  %443 = vst [vmem:[%s317 + $0xf8] sm:%s309] %v442
                  %v444 = vld [vmem:[%s316 + $0x1d4] sm:%s309]
                  %445 = vst [vmem:[%s317 + $0xfc] sm:%s309] %v444
                  %v446 = vld [vmem:[%s316 + $0x1d8] sm:%s309]
                  %447 = vst [vmem:[%s317 + $0x100] sm:%s309] %v446
                  %v448 = vld [vmem:[%s316 + $0x1dc] sm:%s309]
                  %449 = vst [vmem:[%s317 + $0x104] sm:%s309] %v448
                  %v450 = vld [vmem:[%s316 + $0x1e0] sm:%s309]
                  %451 = vst [vmem:[%s317 + $0x108] sm:%s309] %v450
                  %v452 = vld [vmem:[%s316 + $0x1e4] sm:%s309]
                  %453 = vst [vmem:[%s317 + $0x10c] sm:%s309] %v452
                  %v454 = vld [vmem:[%s316 + $0x1e8] sm:%s309]
                  %455 = vst [vmem:[%s317 + $0x110] sm:%s309] %v454
                  %v456 = vld [vmem:[%s316 + $0x1ec] sm:%s309]
                  %457 = vst [vmem:[%s317 + $0x114] sm:%s309] %v456
                  %v458 = vld [vmem:[%s316 + $0x1f0] sm:%s309]
                  %459 = vst [vmem:[%s317 + $0x118] sm:%s309] %v458
                  %v460 = vld [vmem:[%s316 + $0x1f4] sm:%s309]
                  %461 = vst [vmem:[%s317 + $0x11c] sm:%s309] %v460
                $region63: #{my_conv_net_forward.3} parent=50 // loop_footer
                  %s315 = sadd.s32 1, %s311
                $region64: #{my_conv_net_forward.3} parent=50 // loop_footer_branch
                  %310 = sbr.rel target = $region60
                $region65: #{my_conv_net_forward.3} parent=50 // loop_exit
                  _
              $region51: #{my_conv_net_forward.3} parent=35 // pred_fallthru
                _
            $region36: #{my_conv_net_forward.3} parent=31 // pred_fallthru
              _
            // Predicated region
            $region37: #{my_conv_net_forward.3} parent=31 // pred_check
              _
            $region38: #{my_conv_net_forward.3} parent=31 // pred_check_branch
              %143 = sbr.rel (0) target = $region40
            $region39: #{my_conv_net_forward.3} parent=31 // pred_region
              %s145 = ssub.s32 16, 1
              loop: start=0, step=1, limit=1
              $region41: #{my_conv_net_forward.3} parent=39 // loop_pre_header
                _
              $region42: #{my_conv_net_forward.3} parent=39 // loop_header
                %s147 = sphi 0, %s151
                %p148 = scmp.ge.s32.totalorder %s147, 1
                %s152 = sphi %s137, %s137
                %s153 = sphi %s134, %s134
              $region43: #{my_conv_net_forward.3} parent=39 // loop_header_branch
                %150 = sbr.rel (%p148) target = $region47
              $region44: #{my_conv_net_forward.3} parent=39 // loop_body
                %v154 = vld [vmem:[%s152] sm:%s145]
                %155 = vst [vmem:[%s153] sm:%s145] %v154
                %v156 = vld [vmem:[%s152 + $0x4] sm:%s145]
                %157 = vst [vmem:[%s153 + $0x4] sm:%s145] %v156
                %v158 = vld [vmem:[%s152 + $0x8] sm:%s145]
                %159 = vst [vmem:[%s153 + $0x8] sm:%s145] %v158
                %v160 = vld [vmem:[%s152 + $0xc] sm:%s145]
                %161 = vst [vmem:[%s153 + $0xc] sm:%s145] %v160
                %v162 = vld [vmem:[%s152 + $0x10] sm:%s145]
                %163 = vst [vmem:[%s153 + $0x10] sm:%s145] %v162
                %v164 = vld [vmem:[%s152 + $0x14] sm:%s145]
                %165 = vst [vmem:[%s153 + $0x14] sm:%s145] %v164
                %v166 = vld [vmem:[%s152 + $0x18] sm:%s145]
                %167 = vst [vmem:[%s153 + $0x18] sm:%s145] %v166
                %v168 = vld [vmem:[%s152 + $0x1c] sm:%s145]
                %169 = vst [vmem:[%s153 + $0x1c] sm:%s145] %v168
                %v170 = vld [vmem:[%s152 + $0x20] sm:%s145]
                %171 = vst [vmem:[%s153 + $0x20] sm:%s145] %v170
                %v172 = vld [vmem:[%s152 + $0x24] sm:%s145]
                %173 = vst [vmem:[%s153 + $0x24] sm:%s145] %v172
                %v174 = vld [vmem:[%s152 + $0x28] sm:%s145]
                %175 = vst [vmem:[%s153 + $0x28] sm:%s145] %v174
                %v176 = vld [vmem:[%s152 + $0x2c] sm:%s145]
                %177 = vst [vmem:[%s153 + $0x2c] sm:%s145] %v176
                %v178 = vld [vmem:[%s152 + $0x30] sm:%s145]
                %179 = vst [vmem:[%s153 + $0x30] sm:%s145] %v178
                %v180 = vld [vmem:[%s152 + $0x34] sm:%s145]
                %181 = vst [vmem:[%s153 + $0x34] sm:%s145] %v180
                %v182 = vld [vmem:[%s152 + $0x38] sm:%s145]
                %183 = vst [vmem:[%s153 + $0x38] sm:%s145] %v182
                %v184 = vld [vmem:[%s152 + $0x3c] sm:%s145]
                %185 = vst [vmem:[%s153 + $0x3c] sm:%s145] %v184
                %v186 = vld [vmem:[%s152 + $0x40] sm:%s145]
                %187 = vst [vmem:[%s153 + $0x40] sm:%s145] %v186
                %v188 = vld [vmem:[%s152 + $0x44] sm:%s145]
                %189 = vst [vmem:[%s153 + $0x44] sm:%s145] %v188
                %v190 = vld [vmem:[%s152 + $0x90] sm:%s145]
                %191 = vst [vmem:[%s153 + $0x48] sm:%s145] %v190
                %v192 = vld [vmem:[%s152 + $0x94] sm:%s145]
                %193 = vst [vmem:[%s153 + $0x4c] sm:%s145] %v192
                %v194 = vld [vmem:[%s152 + $0x98] sm:%s145]
                %195 = vst [vmem:[%s153 + $0x50] sm:%s145] %v194
                %v196 = vld [vmem:[%s152 + $0x9c] sm:%s145]
                %197 = vst [vmem:[%s153 + $0x54] sm:%s145] %v196
                %v198 = vld [vmem:[%s152 + $0xa0] sm:%s145]
                %199 = vst [vmem:[%s153 + $0x58] sm:%s145] %v198
                %v200 = vld [vmem:[%s152 + $0xa4] sm:%s145]
                %201 = vst [vmem:[%s153 + $0x5c] sm:%s145] %v200
                %v202 = vld [vmem:[%s152 + $0xa8] sm:%s145]
                %203 = vst [vmem:[%s153 + $0x60] sm:%s145] %v202
                %v204 = vld [vmem:[%s152 + $0xac] sm:%s145]
                %205 = vst [vmem:[%s153 + $0x64] sm:%s145] %v204
                %v206 = vld [vmem:[%s152 + $0xb0] sm:%s145]
                %207 = vst [vmem:[%s153 + $0x68] sm:%s145] %v206
                %v208 = vld [vmem:[%s152 + $0xb4] sm:%s145]
                %209 = vst [vmem:[%s153 + $0x6c] sm:%s145] %v208
                %v210 = vld [vmem:[%s152 + $0xb8] sm:%s145]
                %211 = vst [vmem:[%s153 + $0x70] sm:%s145] %v210
                %v212 = vld [vmem:[%s152 + $0xbc] sm:%s145]
                %213 = vst [vmem:[%s153 + $0x74] sm:%s145] %v212
                %v214 = vld [vmem:[%s152 + $0xc0] sm:%s145]
                %215 = vst [vmem:[%s153 + $0x78] sm:%s145] %v214
                %v216 = vld [vmem:[%s152 + $0xc4] sm:%s145]
                %217 = vst [vmem:[%s153 + $0x7c] sm:%s145] %v216
                %v218 = vld [vmem:[%s152 + $0xc8] sm:%s145]
                %219 = vst [vmem:[%s153 + $0x80] sm:%s145] %v218
                %v220 = vld [vmem:[%s152 + $0xcc] sm:%s145]
                %221 = vst [vmem:[%s153 + $0x84] sm:%s145] %v220
                %v222 = vld [vmem:[%s152 + $0xd0] sm:%s145]
                %223 = vst [vmem:[%s153 + $0x88] sm:%s145] %v222
                %v224 = vld [vmem:[%s152 + $0xd4] sm:%s145]
                %225 = vst [vmem:[%s153 + $0x8c] sm:%s145] %v224
                %v226 = vld [vmem:[%s152 + $0x120] sm:%s145]
                %227 = vst [vmem:[%s153 + $0x90] sm:%s145] %v226
                %v228 = vld [vmem:[%s152 + $0x124] sm:%s145]
                %229 = vst [vmem:[%s153 + $0x94] sm:%s145] %v228
                %v230 = vld [vmem:[%s152 + $0x128] sm:%s145]
                %231 = vst [vmem:[%s153 + $0x98] sm:%s145] %v230
                %v232 = vld [vmem:[%s152 + $0x12c] sm:%s145]
                %233 = vst [vmem:[%s153 + $0x9c] sm:%s145] %v232
                %v234 = vld [vmem:[%s152 + $0x130] sm:%s145]
                %235 = vst [vmem:[%s153 + $0xa0] sm:%s145] %v234
                %v236 = vld [vmem:[%s152 + $0x134] sm:%s145]
                %237 = vst [vmem:[%s153 + $0xa4] sm:%s145] %v236
                %v238 = vld [vmem:[%s152 + $0x138] sm:%s145]
                %239 = vst [vmem:[%s153 + $0xa8] sm:%s145] %v238
                %v240 = vld [vmem:[%s152 + $0x13c] sm:%s145]
                %241 = vst [vmem:[%s153 + $0xac] sm:%s145] %v240
                %v242 = vld [vmem:[%s152 + $0x140] sm:%s145]
                %243 = vst [vmem:[%s153 + $0xb0] sm:%s145] %v242
                %v244 = vld [vmem:[%s152 + $0x144] sm:%s145]
                %245 = vst [vmem:[%s153 + $0xb4] sm:%s145] %v244
                %v246 = vld [vmem:[%s152 + $0x148] sm:%s145]
                %247 = vst [vmem:[%s153 + $0xb8] sm:%s145] %v246
                %v248 = vld [vmem:[%s152 + $0x14c] sm:%s145]
                %249 = vst [vmem:[%s153 + $0xbc] sm:%s145] %v248
                %v250 = vld [vmem:[%s152 + $0x150] sm:%s145]
                %251 = vst [vmem:[%s153 + $0xc0] sm:%s145] %v250
                %v252 = vld [vmem:[%s152 + $0x154] sm:%s145]
                %253 = vst [vmem:[%s153 + $0xc4] sm:%s145] %v252
                %v254 = vld [vmem:[%s152 + $0x158] sm:%s145]
                %255 = vst [vmem:[%s153 + $0xc8] sm:%s145] %v254
                %v256 = vld [vmem:[%s152 + $0x15c] sm:%s145]
                %257 = vst [vmem:[%s153 + $0xcc] sm:%s145] %v256
                %v258 = vld [vmem:[%s152 + $0x160] sm:%s145]
                %259 = vst [vmem:[%s153 + $0xd0] sm:%s145] %v258
                %v260 = vld [vmem:[%s152 + $0x164] sm:%s145]
                %261 = vst [vmem:[%s153 + $0xd4] sm:%s145] %v260
                %v262 = vld [vmem:[%s152 + $0x1b0] sm:%s145]
                %263 = vst [vmem:[%s153 + $0xd8] sm:%s145] %v262
                %v264 = vld [vmem:[%s152 + $0x1b4] sm:%s145]
                %265 = vst [vmem:[%s153 + $0xdc] sm:%s145] %v264
                %v266 = vld [vmem:[%s152 + $0x1b8] sm:%s145]
                %267 = vst [vmem:[%s153 + $0xe0] sm:%s145] %v266
                %v268 = vld [vmem:[%s152 + $0x1bc] sm:%s145]
                %269 = vst [vmem:[%s153 + $0xe4] sm:%s145] %v268
                %v270 = vld [vmem:[%s152 + $0x1c0] sm:%s145]
                %271 = vst [vmem:[%s153 + $0xe8] sm:%s145] %v270
                %v272 = vld [vmem:[%s152 + $0x1c4] sm:%s145]
                %273 = vst [vmem:[%s153 + $0xec] sm:%s145] %v272
                %v274 = vld [vmem:[%s152 + $0x1c8] sm:%s145]
                %275 = vst [vmem:[%s153 + $0xf0] sm:%s145] %v274
                %v276 = vld [vmem:[%s152 + $0x1cc] sm:%s145]
                %277 = vst [vmem:[%s153 + $0xf4] sm:%s145] %v276
                %v278 = vld [vmem:[%s152 + $0x1d0] sm:%s145]
                %279 = vst [vmem:[%s153 + $0xf8] sm:%s145] %v278
                %v280 = vld [vmem:[%s152 + $0x1d4] sm:%s145]
                %281 = vst [vmem:[%s153 + $0xfc] sm:%s145] %v280
                %v282 = vld [vmem:[%s152 + $0x1d8] sm:%s145]
                %283 = vst [vmem:[%s153 + $0x100] sm:%s145] %v282
                %v284 = vld [vmem:[%s152 + $0x1dc] sm:%s145]
                %285 = vst [vmem:[%s153 + $0x104] sm:%s145] %v284
                %v286 = vld [vmem:[%s152 + $0x1e0] sm:%s145]
                %287 = vst [vmem:[%s153 + $0x108] sm:%s145] %v286
                %v288 = vld [vmem:[%s152 + $0x1e4] sm:%s145]
                %289 = vst [vmem:[%s153 + $0x10c] sm:%s145] %v288
                %v290 = vld [vmem:[%s152 + $0x1e8] sm:%s145]
                %291 = vst [vmem:[%s153 + $0x110] sm:%s145] %v290
                %v292 = vld [vmem:[%s152 + $0x1ec] sm:%s145]
                %293 = vst [vmem:[%s153 + $0x114] sm:%s145] %v292
                %v294 = vld [vmem:[%s152 + $0x1f0] sm:%s145]
                %295 = vst [vmem:[%s153 + $0x118] sm:%s145] %v294
                %v296 = vld [vmem:[%s152 + $0x1f4] sm:%s145]
                %297 = vst [vmem:[%s153 + $0x11c] sm:%s145] %v296
              $region45: #{my_conv_net_forward.3} parent=39 // loop_footer
                %s151 = sadd.s32 1, %s147
              $region46: #{my_conv_net_forward.3} parent=39 // loop_footer_branch
                %146 = sbr.rel target = $region42
              $region47: #{my_conv_net_forward.3} parent=39 // loop_exit
                _
            $region40: #{my_conv_net_forward.3} parent=31 // pred_fallthru
              _
          $region32: #{my_conv_net_forward.3} parent=27 // pred_fallthru
            _
          %462 = vnop
        $region28: #{my_conv_net_forward.3} parent=23 // pred_fallthru
          _
      $region24: #{my_conv_net_forward.3} parent=5 // pred_fallthru
        _
      %p463 = scmp.le.s32.totalorder 1, %s9
      %p464 = scmp.lt.s32.totalorder %s9, 3
      %p465 = pnand %p463, %p464
      %p466 = pneg %p465
      // Predicated region
      $region66: #{my_conv_net_forward.3} parent=5 // pred_check
        _
      $region67: #{my_conv_net_forward.3} parent=5 // pred_check_branch
        %468 = sbr.rel (%p465) target = $region69
      $region68: #{my_conv_net_forward.3} parent=5 // pred_region
        %s469 = ssub.s32 %s9, 1
        %s470 = sand.u32 %s22, 1
        %s471 = sand.u32 %s22, 1
        %s472 = smul.addr %s471, 288
        %s473 = scalar_lea.vmem [#allocation2], %s472
        // Predicated region
        $region70: #{my_conv_net_forward.3} parent=68 // pred_check
          %p474 = pneg %p35
        $region71: #{my_conv_net_forward.3} parent=68 // pred_check_branch
          %476 = sbr.rel (%p474) target = $region73
        $region72: #{my_conv_net_forward.3} parent=68 // pred_region
          _
        $region73: #{my_conv_net_forward.3} parent=68 // pred_fallthru
          _
        %s477 = sand.u32 %s22, 1
        %s478 = sand.u32 %s22, 1
        %s479 = smul.addr %s478, 288
        %s480 = scalar_lea.vmem [#allocation2], %s479
        %p481 = pneg %p35
        %p482 = pneg %p32
        %p483 = pneg %p56
        %p484 = pneg %p53
        %p485 = pneg %p77
        %p486 = pneg %p74
        %p487 = pneg %p103
        %p488 = pneg %p100
        %s489 = smul.u32 18, %s14
        %p490 = scmp.lt.s32.totalorder %s489, 35
        %s491 = scalar_select %p490, %s489, 35
        %s492 = smul.addr %s491, 4
        %s493 = scalar_lea.vmem %s3, %s492
        %s494 = smul.u32 18, %s14
        %s495 = smul.u32 18, %s14
        %p496 = scmp.lt.s32.totalorder %s495, 35
        %s497 = scalar_select %p496, %s495, 35
        %s498 = smul.addr %s497, 4
        %s499 = scalar_lea.vmem %s3, %s498
        %s500 = smul.u32 18, %s14
        %v502 = vld [vmem:[%s1] sm:$0xf]
        %v503 = vld [vmem:[%s1 + $0x4] sm:$0xf]
        %v504 = vld [vmem:[%s1 + $0x8] sm:$0xf]
        %v505 = vld [vmem:[%s1 + $0xc] sm:$0xf]
        %v506 = vld [vmem:[%s473] sm:$0xf]
        %v507 = vld [vmem:[%s473 + $0x4] sm:$0xf]
        %v508 = vld [vmem:[%s473 + $0x8] sm:$0xf]
        %v509 = vld [vmem:[%s473 + $0xc] sm:$0xf]
        %v510 = vld [vmem:[%s473 + $0x10] sm:$0xf]
        %v511 = vld [vmem:[%s473 + $0x14] sm:$0xf]
        %v512 = vld [vmem:[%s473 + $0x18] sm:$0xf]
        %v513 = vld [vmem:[%s473 + $0x1c] sm:$0xf]
        %v514 = vld [vmem:[%s473 + $0x20] sm:$0xf]
        %v515 = vld [vmem:[%s473 + $0x24] sm:$0xf]
        %v516 = vld [vmem:[%s473 + $0x28] sm:$0xf]
        %v517 = vld [vmem:[%s473 + $0x2c] sm:$0xf]
        %v518 = vld [vmem:[%s473 + $0x30] sm:$0xf]
        %v519 = vld [vmem:[%s473 + $0x34] sm:$0xf]
        %v520 = vld [vmem:[%s473 + $0x38] sm:$0xf]
        %v521 = vld [vmem:[%s473 + $0x3c] sm:$0xf]
        %v522 = vld [vmem:[%s473 + $0x40] sm:$0xf]
        %v523 = vld [vmem:[%s473 + $0x44] sm:$0xf]
        %v542 = vunpack.c.l.b16 %v506
        %v543 = vunpack.c.l.b16 %v507
        %v544 = vunpack.c.l.b16 %v508
        %v545 = vunpack.c.l.b16 %v509
        %v546 = vunpack.c.l.b16 %v510
        %v547 = vunpack.c.l.b16 %v511
        %v548 = vunpack.c.l.b16 %v512
        %v549 = vunpack.c.l.b16 %v513
        %v550 = vunpack.c.l.b16 %v514
        %v551 = vunpack.c.l.b16 %v515
        %v552 = vunpack.c.l.b16 %v516
        %v553 = vunpack.c.l.b16 %v517
        %v554 = vunpack.c.l.b16 %v518
        %v555 = vunpack.c.l.b16 %v519
        %v556 = vunpack.c.l.b16 %v520
        %v557 = vunpack.c.l.b16 %v521
        %v558 = vunpack.c.l.b16 %v522
        %v559 = vunpack.c.l.b16 %v523
        %v560 = vpack.c.b16 %v543, %v542
        %v561 = vpack.c.b16 %v545, %v544
        %v562 = vpack.c.b16 %v547, %v546
        %v563 = vpack.c.b16 %v549, %v548
        %v564 = vpack.c.b16 %v551, %v550
        %v565 = vpack.c.b16 %v553, %v552
        %v566 = vpack.c.b16 %v555, %v554
        %v567 = vpack.c.b16 %v557, %v556
        %v568 = vpack.c.b16 %v559, %v558
        %v573 = vunpack.c.l.b16 %v502
        %v574 = vunpack.c.l.b16 %v503
        %v575 = vunpack.c.l.b16 %v504
        %v576 = vunpack.c.l.b16 %v505
        %v577 = vpack.c.b16 %v574, %v573
        %v578 = vpack.c.b16 %v576, %v575
        %vm581 = vcmask 261120
        %v583 = vsel %vm581, %v560, 0
        %v586 = vsel %vm581, %v561, 0
        %v589 = vsel %vm581, %v562, 0
        %v592 = vsel %vm581, %v563, 0
        %v595 = vsel %vm581, %v564, 0
        %v598 = vsel %vm581, %v565, 0
        %v601 = vsel %vm581, %v566, 0
        %v604 = vsel %vm581, %v567, 0
        %v607 = vsel %vm581, %v568, 0
        %609 = vmatprep.subr.bf16.mxu0 0
        %610 = vmatpush1.bf16.msra.mxu0 0
        %611 = vmatprep.subr.bf16.mxu0 0
        %612 = vmatpush1.bf16.msra.mxu0 0
        %613 = vmatprep.subr.bf16.mxu0 0
        %614 = vmatpush1.bf16.msra.mxu0 0
        %615 = vmatprep.subr.bf16.mxu0 0
        %616 = vmatpush1.bf16.msra.mxu0 0
        %617 = vmatprep.subr.bf16.mxu0 0
        %618 = vmatpush1.bf16.msra.mxu0 0
        %619 = vmatprep.subr.bf16.mxu0 0
        %620 = vmatpush1.bf16.msra.mxu0 0
        %621 = vmatprep.subr.bf16.mxu0 0
        %622 = vmatpush1.bf16.msra.mxu0 %v578
        %623 = vmatprep.subr.bf16.mxu0 0
        %624 = vmatpush1.bf16.msra.mxu0 %v577
        %625 = vmatprep.subr.bf16.mxu0 0
        %626 = vmatpush2.bf16.msra.mxu0 0
        %627 = vmatprep.subr.bf16.mxu0 0
        %628 = vmatpush2.bf16.msra.mxu0 0
        %629 = vmatprep.subr.bf16.mxu0 0
        %630 = vmatpush2.bf16.msra.mxu0 0
        %631 = vmatprep.subr.bf16.mxu0 0
        %632 = vmatpush2.bf16.msra.mxu0 0
        %633 = vmatprep.subr.bf16.mxu0 0
        %634 = vmatpush2.bf16.msra.mxu0 0
        %635 = vmatprep.subr.bf16.mxu0 0
        %636 = vmatpush2.bf16.msra.mxu0 0
        %637 = vmatprep.subr.bf16.mxu0 0
        %638 = vmatpush2.bf16.msra.mxu0 0
        %639 = vmatprep.subr.bf16.mxu0 0
        %640 = vmatpush2.bf16.msra.mxu0 0
        %641 = vmatprep.mubr.bf16.mxu0 0
        %642 = vmatmul.mubr.bf16.gmra.mxu0 %v583
        %v643 = vpop.f32.mrf.mxu0
        %v644 = vadd.f32 0.0, %v643
        %v645 = vpop.f32.mrf.mxu0
        %v646 = vpop.f32.mrf.mxu0
        %v647 = vadd.f32 0.0, %v646
        %v648 = vpop.f32.mrf.mxu0
        %649 = vmatprep.mubr.bf16.mxu0 0
        %650 = vmatmul.mubr.bf16.gmra.mxu0 %v586
        %v651 = vpop.f32.mrf.mxu0
        %v652 = vadd.f32 0.0, %v651
        %v653 = vpop.f32.mrf.mxu0
        %v654 = vpop.f32.mrf.mxu0
        %v655 = vadd.f32 0.0, %v654
        %v656 = vpop.f32.mrf.mxu0
        %657 = vmatprep.mubr.bf16.mxu0 0
        %658 = vmatmul.mubr.bf16.gmra.mxu0 %v589
        %v659 = vpop.f32.mrf.mxu0
        %v660 = vadd.f32 0.0, %v659
        %v661 = vpop.f32.mrf.mxu0
        %v662 = vpop.f32.mrf.mxu0
        %v663 = vadd.f32 0.0, %v662
        %v664 = vpop.f32.mrf.mxu0
        %665 = vmatprep.mubr.bf16.mxu0 0
        %666 = vmatmul.mubr.bf16.gmra.mxu0 %v592
        %v667 = vpop.f32.mrf.mxu0
        %v668 = vadd.f32 0.0, %v667
        %v669 = vpop.f32.mrf.mxu0
        %v670 = vpop.f32.mrf.mxu0
        %v671 = vadd.f32 0.0, %v670
        %v672 = vpop.f32.mrf.mxu0
        %673 = vmatprep.mubr.bf16.mxu0 0
        %674 = vmatmul.mubr.bf16.gmra.mxu0 %v595
        %v675 = vpop.f32.mrf.mxu0
        %v676 = vadd.f32 0.0, %v675
        %v677 = vpop.f32.mrf.mxu0
        %v678 = vpop.f32.mrf.mxu0
        %v679 = vadd.f32 0.0, %v678
        %v680 = vpop.f32.mrf.mxu0
        %681 = vmatprep.mubr.bf16.mxu0 0
        %682 = vmatmul.mubr.bf16.gmra.mxu0 %v598
        %v683 = vpop.f32.mrf.mxu0
        %v684 = vadd.f32 0.0, %v683
        %v685 = vpop.f32.mrf.mxu0
        %v686 = vpop.f32.mrf.mxu0
        %v687 = vadd.f32 0.0, %v686
        %v688 = vpop.f32.mrf.mxu0
        %689 = vmatprep.mubr.bf16.mxu0 0
        %690 = vmatmul.mubr.bf16.gmra.mxu0 %v601
        %v691 = vpop.f32.mrf.mxu0
        %v692 = vadd.f32 0.0, %v691
        %v693 = vpop.f32.mrf.mxu0
        %v694 = vpop.f32.mrf.mxu0
        %v695 = vadd.f32 0.0, %v694
        %v696 = vpop.f32.mrf.mxu0
        %697 = vmatprep.mubr.bf16.mxu0 0
        %698 = vmatmul.mubr.bf16.gmra.mxu0 %v604
        %v699 = vpop.f32.mrf.mxu0
        %v700 = vadd.f32 0.0, %v699
        %v701 = vpop.f32.mrf.mxu0
        %v702 = vpop.f32.mrf.mxu0
        %v703 = vadd.f32 0.0, %v702
        %v704 = vpop.f32.mrf.mxu0
        %705 = vmatprep.mubr.bf16.mxu0 0
        %706 = vmatmul.mubr.bf16.gmra.mxu0 %v607
        %v707 = vpop.f32.mrf.mxu0
        %v708 = vadd.f32 0.0, %v707
        %v709 = vpop.f32.mrf.mxu0
        %v710 = vpop.f32.mrf.mxu0
        %v711 = vadd.f32 0.0, %v710
        %v712 = vpop.f32.mrf.mxu0
        %713 = vdwg.mxu0
        %s714 = scalar_lea.vmem %s473, 72 [#allocation2]
        %v715 = vld [vmem:[%s714] sm:$0xf]
        %v716 = vld [vmem:[%s714 + $0x4] sm:$0xf]
        %v717 = vld [vmem:[%s714 + $0x8] sm:$0xf]
        %v718 = vld [vmem:[%s714 + $0xc] sm:$0xf]
        %v719 = vld [vmem:[%s714 + $0x10] sm:$0xf]
        %v720 = vld [vmem:[%s714 + $0x14] sm:$0xf]
        %v721 = vld [vmem:[%s714 + $0x18] sm:$0xf]
        %v722 = vld [vmem:[%s714 + $0x1c] sm:$0xf]
        %v723 = vld [vmem:[%s714 + $0x20] sm:$0xf]
        %v724 = vld [vmem:[%s714 + $0x24] sm:$0xf]
        %v725 = vld [vmem:[%s714 + $0x28] sm:$0xf]
        %v726 = vld [vmem:[%s714 + $0x2c] sm:$0xf]
        %v727 = vld [vmem:[%s714 + $0x30] sm:$0xf]
        %v728 = vld [vmem:[%s714 + $0x34] sm:$0xf]
        %v729 = vld [vmem:[%s714 + $0x38] sm:$0xf]
        %v730 = vld [vmem:[%s714 + $0x3c] sm:$0xf]
        %v731 = vld [vmem:[%s714 + $0x40] sm:$0xf]
        %v732 = vld [vmem:[%s714 + $0x44] sm:$0xf]
        %v751 = vunpack.c.l.b16 %v715
        %v752 = vunpack.c.l.b16 %v716
        %v753 = vunpack.c.l.b16 %v717
        %v754 = vunpack.c.l.b16 %v718
        %v755 = vunpack.c.l.b16 %v719
        %v756 = vunpack.c.l.b16 %v720
        %v757 = vunpack.c.l.b16 %v721
        %v758 = vunpack.c.l.b16 %v722
        %v759 = vunpack.c.l.b16 %v723
        %v760 = vunpack.c.l.b16 %v724
        %v761 = vunpack.c.l.b16 %v725
        %v762 = vunpack.c.l.b16 %v726
        %v763 = vunpack.c.l.b16 %v727
        %v764 = vunpack.c.l.b16 %v728
        %v765 = vunpack.c.l.b16 %v729
        %v766 = vunpack.c.l.b16 %v730
        %v767 = vunpack.c.l.b16 %v731
        %v768 = vunpack.c.l.b16 %v732
        %v769 = vpack.c.b16 %v752, %v751
        %v770 = vpack.c.b16 %v754, %v753
        %v771 = vpack.c.b16 %v756, %v755
        %v772 = vpack.c.b16 %v758, %v757
        %v773 = vpack.c.b16 %v760, %v759
        %v774 = vpack.c.b16 %v762, %v761
        %v775 = vpack.c.b16 %v764, %v763
        %v776 = vpack.c.b16 %v766, %v765
        %v777 = vpack.c.b16 %v768, %v767
        %v779 = vsel %vm581, %v769, 0
        %v782 = vsel %vm581, %v770, 0
        %v785 = vsel %vm581, %v771, 0
        %v788 = vsel %vm581, %v772, 0
        %v791 = vsel %vm581, %v773, 0
        %v794 = vsel %vm581, %v774, 0
        %v797 = vsel %vm581, %v775, 0
        %v800 = vsel %vm581, %v776, 0
        %v803 = vsel %vm581, %v777, 0
        %805 = vmatprep.subr.bf16.mxu0 0
        %806 = vmatpush1.bf16.msra.mxu0 0
        %807 = vmatprep.subr.bf16.mxu0 0
        %808 = vmatpush1.bf16.msra.mxu0 0
        %809 = vmatprep.subr.bf16.mxu0 0
        %810 = vmatpush1.bf16.msra.mxu0 0
        %811 = vmatprep.subr.bf16.mxu0 0
        %812 = vmatpush1.bf16.msra.mxu0 0
        %813 = vmatprep.subr.bf16.mxu0 0
        %814 = vmatpush1.bf16.msra.mxu0 0
        %815 = vmatprep.subr.bf16.mxu0 0
        %816 = vmatpush1.bf16.msra.mxu0 0
        %817 = vmatprep.subr.bf16.mxu0 0
        %818 = vmatpush1.bf16.msra.mxu0 %v578
        %819 = vmatprep.subr.bf16.mxu0 0
        %820 = vmatpush1.bf16.msra.mxu0 %v577
        %821 = vmatprep.subr.bf16.mxu0 0
        %822 = vmatpush2.bf16.msra.mxu0 0
        %823 = vmatprep.subr.bf16.mxu0 0
        %824 = vmatpush2.bf16.msra.mxu0 0
        %825 = vmatprep.subr.bf16.mxu0 0
        %826 = vmatpush2.bf16.msra.mxu0 0
        %827 = vmatprep.subr.bf16.mxu0 0
        %828 = vmatpush2.bf16.msra.mxu0 0
        %829 = vmatprep.subr.bf16.mxu0 0
        %830 = vmatpush2.bf16.msra.mxu0 0
        %831 = vmatprep.subr.bf16.mxu0 0
        %832 = vmatpush2.bf16.msra.mxu0 0
        %833 = vmatprep.subr.bf16.mxu0 0
        %834 = vmatpush2.bf16.msra.mxu0 0
        %835 = vmatprep.subr.bf16.mxu0 0
        %836 = vmatpush2.bf16.msra.mxu0 0
        %837 = vmatprep.mubr.bf16.mxu0 0
        %838 = vmatmul.mubr.bf16.gmra.mxu0 %v779
        %v839 = vpop.f32.mrf.mxu0
        %v840 = vadd.f32 0.0, %v839
        %v841 = vpop.f32.mrf.mxu0
        %v842 = vpop.f32.mrf.mxu0
        %v843 = vadd.f32 0.0, %v842
        %v844 = vpop.f32.mrf.mxu0
        %845 = vmatprep.mubr.bf16.mxu0 0
        %846 = vmatmul.mubr.bf16.gmra.mxu0 %v782
        %v847 = vpop.f32.mrf.mxu0
        %v848 = vadd.f32 0.0, %v847
        %v849 = vpop.f32.mrf.mxu0
        %v850 = vpop.f32.mrf.mxu0
        %v851 = vadd.f32 0.0, %v850
        %v852 = vpop.f32.mrf.mxu0
        %853 = vmatprep.mubr.bf16.mxu0 0
        %854 = vmatmul.mubr.bf16.gmra.mxu0 %v785
        %v855 = vpop.f32.mrf.mxu0
        %v856 = vadd.f32 0.0, %v855
        %v857 = vpop.f32.mrf.mxu0
        %v858 = vpop.f32.mrf.mxu0
        %v859 = vadd.f32 0.0, %v858
        %v860 = vpop.f32.mrf.mxu0
        %861 = vmatprep.mubr.bf16.mxu0 0
        %862 = vmatmul.mubr.bf16.gmra.mxu0 %v788
        %v863 = vpop.f32.mrf.mxu0
        %v864 = vadd.f32 0.0, %v863
        %v865 = vpop.f32.mrf.mxu0
        %v866 = vpop.f32.mrf.mxu0
        %v867 = vadd.f32 0.0, %v866
        %v868 = vpop.f32.mrf.mxu0
        %869 = vmatprep.mubr.bf16.mxu0 0
        %870 = vmatmul.mubr.bf16.gmra.mxu0 %v791
        %v871 = vpop.f32.mrf.mxu0
        %v872 = vadd.f32 0.0, %v871
        %v873 = vpop.f32.mrf.mxu0
        %v874 = vpop.f32.mrf.mxu0
        %v875 = vadd.f32 0.0, %v874
        %v876 = vpop.f32.mrf.mxu0
        %877 = vmatprep.mubr.bf16.mxu0 0
        %878 = vmatmul.mubr.bf16.gmra.mxu0 %v794
        %v879 = vpop.f32.mrf.mxu0
        %v880 = vadd.f32 0.0, %v879
        %v881 = vpop.f32.mrf.mxu0
        %v882 = vpop.f32.mrf.mxu0
        %v883 = vadd.f32 0.0, %v882
        %v884 = vpop.f32.mrf.mxu0
        %885 = vmatprep.mubr.bf16.mxu0 0
        %886 = vmatmul.mubr.bf16.gmra.mxu0 %v797
        %v887 = vpop.f32.mrf.mxu0
        %v888 = vadd.f32 0.0, %v887
        %v889 = vpop.f32.mrf.mxu0
        %v890 = vpop.f32.mrf.mxu0
        %v891 = vadd.f32 0.0, %v890
        %v892 = vpop.f32.mrf.mxu0
        %893 = vmatprep.mubr.bf16.mxu0 0
        %894 = vmatmul.mubr.bf16.gmra.mxu0 %v800
        %v895 = vpop.f32.mrf.mxu0
        %v896 = vadd.f32 0.0, %v895
        %v897 = vpop.f32.mrf.mxu0
        %v898 = vpop.f32.mrf.mxu0
        %v899 = vadd.f32 0.0, %v898
        %v900 = vpop.f32.mrf.mxu0
        %901 = vmatprep.mubr.bf16.mxu0 0
        %902 = vmatmul.mubr.bf16.gmra.mxu0 %v803
        %v903 = vpop.f32.mrf.mxu0
        %v904 = vadd.f32 0.0, %v903
        %v905 = vpop.f32.mrf.mxu0
        %v906 = vpop.f32.mrf.mxu0
        %v907 = vadd.f32 0.0, %v906
        %v908 = vpop.f32.mrf.mxu0
        %909 = vdwg.mxu0
        %s910 = scalar_lea.vmem %s473, 144 [#allocation2]
        %v911 = vld [vmem:[%s910] sm:$0xf]
        %v912 = vld [vmem:[%s910 + $0x4] sm:$0xf]
        %v913 = vld [vmem:[%s910 + $0x8] sm:$0xf]
        %v914 = vld [vmem:[%s910 + $0xc] sm:$0xf]
        %v915 = vld [vmem:[%s910 + $0x10] sm:$0xf]
        %v916 = vld [vmem:[%s910 + $0x14] sm:$0xf]
        %v917 = vld [vmem:[%s910 + $0x18] sm:$0xf]
        %v918 = vld [vmem:[%s910 + $0x1c] sm:$0xf]
        %v919 = vld [vmem:[%s910 + $0x20] sm:$0xf]
        %v920 = vld [vmem:[%s910 + $0x24] sm:$0xf]
        %v921 = vld [vmem:[%s910 + $0x28] sm:$0xf]
        %v922 = vld [vmem:[%s910 + $0x2c] sm:$0xf]
        %v923 = vld [vmem:[%s910 + $0x30] sm:$0xf]
        %v924 = vld [vmem:[%s910 + $0x34] sm:$0xf]
        %v925 = vld [vmem:[%s910 + $0x38] sm:$0xf]
        %v926 = vld [vmem:[%s910 + $0x3c] sm:$0xf]
        %v927 = vld [vmem:[%s910 + $0x40] sm:$0xf]
        %v928 = vld [vmem:[%s910 + $0x44] sm:$0xf]
        %v947 = vunpack.c.l.b16 %v911
        %v948 = vunpack.c.l.b16 %v912
        %v949 = vunpack.c.l.b16 %v913
        %v950 = vunpack.c.l.b16 %v914
        %v951 = vunpack.c.l.b16 %v915
        %v952 = vunpack.c.l.b16 %v916
        %v953 = vunpack.c.l.b16 %v917
        %v954 = vunpack.c.l.b16 %v918
        %v955 = vunpack.c.l.b16 %v919
        %v956 = vunpack.c.l.b16 %v920
        %v957 = vunpack.c.l.b16 %v921
        %v958 = vunpack.c.l.b16 %v922
        %v959 = vunpack.c.l.b16 %v923
        %v960 = vunpack.c.l.b16 %v924
        %v961 = vunpack.c.l.b16 %v925
        %v962 = vunpack.c.l.b16 %v926
        %v963 = vunpack.c.l.b16 %v927
        %v964 = vunpack.c.l.b16 %v928
        %v965 = vpack.c.b16 %v948, %v947
        %v966 = vpack.c.b16 %v950, %v949
        %v967 = vpack.c.b16 %v952, %v951
        %v968 = vpack.c.b16 %v954, %v953
        %v969 = vpack.c.b16 %v956, %v955
        %v970 = vpack.c.b16 %v958, %v957
        %v971 = vpack.c.b16 %v960, %v959
        %v972 = vpack.c.b16 %v962, %v961
        %v973 = vpack.c.b16 %v964, %v963
        %v975 = vsel %vm581, %v965, 0
        %v978 = vsel %vm581, %v966, 0
        %v981 = vsel %vm581, %v967, 0
        %v984 = vsel %vm581, %v968, 0
        %v987 = vsel %vm581, %v969, 0
        %v990 = vsel %vm581, %v970, 0
        %v993 = vsel %vm581, %v971, 0
        %v996 = vsel %vm581, %v972, 0
        %v999 = vsel %vm581, %v973, 0
        %1001 = vmatprep.subr.bf16.mxu0 0
        %1002 = vmatpush1.bf16.msra.mxu0 0
        %1003 = vmatprep.subr.bf16.mxu0 0
        %1004 = vmatpush1.bf16.msra.mxu0 0
        %1005 = vmatprep.subr.bf16.mxu0 0
        %1006 = vmatpush1.bf16.msra.mxu0 0
        %1007 = vmatprep.subr.bf16.mxu0 0
        %1008 = vmatpush1.bf16.msra.mxu0 0
        %1009 = vmatprep.subr.bf16.mxu0 0
        %1010 = vmatpush1.bf16.msra.mxu0 0
        %1011 = vmatprep.subr.bf16.mxu0 0
        %1012 = vmatpush1.bf16.msra.mxu0 0
        %1013 = vmatprep.subr.bf16.mxu0 0
        %1014 = vmatpush1.bf16.msra.mxu0 %v578
        %1015 = vmatprep.subr.bf16.mxu0 0
        %1016 = vmatpush1.bf16.msra.mxu0 %v577
        %1017 = vmatprep.subr.bf16.mxu0 0
        %1018 = vmatpush2.bf16.msra.mxu0 0
        %1019 = vmatprep.subr.bf16.mxu0 0
        %1020 = vmatpush2.bf16.msra.mxu0 0
        %1021 = vmatprep.subr.bf16.mxu0 0
        %1022 = vmatpush2.bf16.msra.mxu0 0
        %1023 = vmatprep.subr.bf16.mxu0 0
        %1024 = vmatpush2.bf16.msra.mxu0 0
        %1025 = vmatprep.subr.bf16.mxu0 0
        %1026 = vmatpush2.bf16.msra.mxu0 0
        %1027 = vmatprep.subr.bf16.mxu0 0
        %1028 = vmatpush2.bf16.msra.mxu0 0
        %1029 = vmatprep.subr.bf16.mxu0 0
        %1030 = vmatpush2.bf16.msra.mxu0 0
        %1031 = vmatprep.subr.bf16.mxu0 0
        %1032 = vmatpush2.bf16.msra.mxu0 0
        %1033 = vmatprep.mubr.bf16.mxu0 0
        %1034 = vmatmul.mubr.bf16.gmra.mxu0 %v975
        %v1035 = vpop.f32.mrf.mxu0
        %v1036 = vadd.f32 0.0, %v1035
        %v1037 = vpop.f32.mrf.mxu0
        %v1038 = vpop.f32.mrf.mxu0
        %v1039 = vadd.f32 0.0, %v1038
        %v1040 = vpop.f32.mrf.mxu0
        %1041 = vmatprep.mubr.bf16.mxu0 0
        %1042 = vmatmul.mubr.bf16.gmra.mxu0 %v978
        %v1043 = vpop.f32.mrf.mxu0
        %v1044 = vadd.f32 0.0, %v1043
        %v1045 = vpop.f32.mrf.mxu0
        %v1046 = vpop.f32.mrf.mxu0
        %v1047 = vadd.f32 0.0, %v1046
        %v1048 = vpop.f32.mrf.mxu0
        %1049 = vmatprep.mubr.bf16.mxu0 0
        %1050 = vmatmul.mubr.bf16.gmra.mxu0 %v981
        %v1051 = vpop.f32.mrf.mxu0
        %v1052 = vadd.f32 0.0, %v1051
        %v1053 = vpop.f32.mrf.mxu0
        %v1054 = vpop.f32.mrf.mxu0
        %v1055 = vadd.f32 0.0, %v1054
        %v1056 = vpop.f32.mrf.mxu0
        %1057 = vmatprep.mubr.bf16.mxu0 0
        %1058 = vmatmul.mubr.bf16.gmra.mxu0 %v984
        %v1059 = vpop.f32.mrf.mxu0
        %v1060 = vadd.f32 0.0, %v1059
        %v1061 = vpop.f32.mrf.mxu0
        %v1062 = vpop.f32.mrf.mxu0
        %v1063 = vadd.f32 0.0, %v1062
        %v1064 = vpop.f32.mrf.mxu0
        %1065 = vmatprep.mubr.bf16.mxu0 0
        %1066 = vmatmul.mubr.bf16.gmra.mxu0 %v987
        %v1067 = vpop.f32.mrf.mxu0
        %v1068 = vadd.f32 0.0, %v1067
        %v1069 = vpop.f32.mrf.mxu0
        %v1070 = vpop.f32.mrf.mxu0
        %v1071 = vadd.f32 0.0, %v1070
        %v1072 = vpop.f32.mrf.mxu0
        %1073 = vmatprep.mubr.bf16.mxu0 0
        %1074 = vmatmul.mubr.bf16.gmra.mxu0 %v990
        %v1075 = vpop.f32.mrf.mxu0
        %v1076 = vadd.f32 0.0, %v1075
        %v1077 = vpop.f32.mrf.mxu0
        %v1078 = vpop.f32.mrf.mxu0
        %v1079 = vadd.f32 0.0, %v1078
        %v1080 = vpop.f32.mrf.mxu0
        %1081 = vmatprep.mubr.bf16.mxu0 0
        %1082 = vmatmul.mubr.bf16.gmra.mxu0 %v993
        %v1083 = vpop.f32.mrf.mxu0
        %v1084 = vadd.f32 0.0, %v1083
        %v1085 = vpop.f32.mrf.mxu0
        %v1086 = vpop.f32.mrf.mxu0
        %v1087 = vadd.f32 0.0, %v1086
        %v1088 = vpop.f32.mrf.mxu0
        %1089 = vmatprep.mubr.bf16.mxu0 0
        %1090 = vmatmul.mubr.bf16.gmra.mxu0 %v996
        %v1091 = vpop.f32.mrf.mxu0
        %v1092 = vadd.f32 0.0, %v1091
        %v1093 = vpop.f32.mrf.mxu0
        %v1094 = vpop.f32.mrf.mxu0
        %v1095 = vadd.f32 0.0, %v1094
        %v1096 = vpop.f32.mrf.mxu0
        %1097 = vmatprep.mubr.bf16.mxu0 0
        %1098 = vmatmul.mubr.bf16.gmra.mxu0 %v999
        %v1099 = vpop.f32.mrf.mxu0
        %v1100 = vadd.f32 0.0, %v1099
        %v1101 = vpop.f32.mrf.mxu0
        %v1102 = vpop.f32.mrf.mxu0
        %v1103 = vadd.f32 0.0, %v1102
        %v1104 = vpop.f32.mrf.mxu0
        %1105 = vdwg.mxu0
        %s1106 = scalar_lea.vmem %s473, 216 [#allocation2]
        %v1107 = vld [vmem:[%s1106] sm:$0xf]
        %v1108 = vld [vmem:[%s1106 + $0x4] sm:$0xf]
        %v1109 = vld [vmem:[%s1106 + $0x8] sm:$0xf]
        %v1110 = vld [vmem:[%s1106 + $0xc] sm:$0xf]
        %v1111 = vld [vmem:[%s1106 + $0x10] sm:$0xf]
        %v1112 = vld [vmem:[%s1106 + $0x14] sm:$0xf]
        %v1113 = vld [vmem:[%s1106 + $0x18] sm:$0xf]
        %v1114 = vld [vmem:[%s1106 + $0x1c] sm:$0xf]
        %v1115 = vld [vmem:[%s1106 + $0x20] sm:$0xf]
        %v1116 = vld [vmem:[%s1106 + $0x24] sm:$0xf]
        %v1117 = vld [vmem:[%s1106 + $0x28] sm:$0xf]
        %v1118 = vld [vmem:[%s1106 + $0x2c] sm:$0xf]
        %v1119 = vld [vmem:[%s1106 + $0x30] sm:$0xf]
        %v1120 = vld [vmem:[%s1106 + $0x34] sm:$0xf]
        %v1121 = vld [vmem:[%s1106 + $0x38] sm:$0xf]
        %v1122 = vld [vmem:[%s1106 + $0x3c] sm:$0xf]
        %v1123 = vld [vmem:[%s1106 + $0x40] sm:$0xf]
        %v1124 = vld [vmem:[%s1106 + $0x44] sm:$0xf]
        %v1143 = vunpack.c.l.b16 %v1107
        %v1144 = vunpack.c.l.b16 %v1108
        %v1145 = vunpack.c.l.b16 %v1109
        %v1146 = vunpack.c.l.b16 %v1110
        %v1147 = vunpack.c.l.b16 %v1111
        %v1148 = vunpack.c.l.b16 %v1112
        %v1149 = vunpack.c.l.b16 %v1113
        %v1150 = vunpack.c.l.b16 %v1114
        %v1151 = vunpack.c.l.b16 %v1115
        %v1152 = vunpack.c.l.b16 %v1116
        %v1153 = vunpack.c.l.b16 %v1117
        %v1154 = vunpack.c.l.b16 %v1118
        %v1155 = vunpack.c.l.b16 %v1119
        %v1156 = vunpack.c.l.b16 %v1120
        %v1157 = vunpack.c.l.b16 %v1121
        %v1158 = vunpack.c.l.b16 %v1122
        %v1159 = vunpack.c.l.b16 %v1123
        %v1160 = vunpack.c.l.b16 %v1124
        %v1161 = vpack.c.b16 %v1144, %v1143
        %v1162 = vpack.c.b16 %v1146, %v1145
        %v1163 = vpack.c.b16 %v1148, %v1147
        %v1164 = vpack.c.b16 %v1150, %v1149
        %v1165 = vpack.c.b16 %v1152, %v1151
        %v1166 = vpack.c.b16 %v1154, %v1153
        %v1167 = vpack.c.b16 %v1156, %v1155
        %v1168 = vpack.c.b16 %v1158, %v1157
        %v1169 = vpack.c.b16 %v1160, %v1159
        %v1171 = vsel %vm581, %v1161, 0
        %v1174 = vsel %vm581, %v1162, 0
        %v1177 = vsel %vm581, %v1163, 0
        %v1180 = vsel %vm581, %v1164, 0
        %v1183 = vsel %vm581, %v1165, 0
        %v1186 = vsel %vm581, %v1166, 0
        %v1189 = vsel %vm581, %v1167, 0
        %v1192 = vsel %vm581, %v1168, 0
        %v1195 = vsel %vm581, %v1169, 0
        %1197 = vmatprep.subr.bf16.mxu0 0
        %1198 = vmatpush1.bf16.msra.mxu0 0
        %1199 = vmatprep.subr.bf16.mxu0 0
        %1200 = vmatpush1.bf16.msra.mxu0 0
        %1201 = vmatprep.subr.bf16.mxu0 0
        %1202 = vmatpush1.bf16.msra.mxu0 0
        %1203 = vmatprep.subr.bf16.mxu0 0
        %1204 = vmatpush1.bf16.msra.mxu0 0
        %1205 = vmatprep.subr.bf16.mxu0 0
        %1206 = vmatpush1.bf16.msra.mxu0 0
        %1207 = vmatprep.subr.bf16.mxu0 0
        %1208 = vmatpush1.bf16.msra.mxu0 0
        %1209 = vmatprep.subr.bf16.mxu0 0
        %1210 = vmatpush1.bf16.msra.mxu0 %v578
        %1211 = vmatprep.subr.bf16.mxu0 0
        %1212 = vmatpush1.bf16.msra.mxu0 %v577
        %1213 = vmatprep.subr.bf16.mxu0 0
        %1214 = vmatpush2.bf16.msra.mxu0 0
        %1215 = vmatprep.subr.bf16.mxu0 0
        %1216 = vmatpush2.bf16.msra.mxu0 0
        %1217 = vmatprep.subr.bf16.mxu0 0
        %1218 = vmatpush2.bf16.msra.mxu0 0
        %1219 = vmatprep.subr.bf16.mxu0 0
        %1220 = vmatpush2.bf16.msra.mxu0 0
        %1221 = vmatprep.subr.bf16.mxu0 0
        %1222 = vmatpush2.bf16.msra.mxu0 0
        %1223 = vmatprep.subr.bf16.mxu0 0
        %1224 = vmatpush2.bf16.msra.mxu0 0
        %1225 = vmatprep.subr.bf16.mxu0 0
        %1226 = vmatpush2.bf16.msra.mxu0 0
        %1227 = vmatprep.subr.bf16.mxu0 0
        %1228 = vmatpush2.bf16.msra.mxu0 0
        %1229 = vmatprep.mubr.bf16.mxu0 0
        %1230 = vmatmul.mubr.bf16.gmra.mxu0 %v1171
        %v1231 = vpop.f32.mrf.mxu0
        %v1232 = vadd.f32 0.0, %v1231
        %v1233 = vpop.f32.mrf.mxu0
        %v1234 = vpop.f32.mrf.mxu0
        %v1235 = vadd.f32 0.0, %v1234
        %v1236 = vpop.f32.mrf.mxu0
        %1237 = vmatprep.mubr.bf16.mxu0 0
        %1238 = vmatmul.mubr.bf16.gmra.mxu0 %v1174
        %v1239 = vpop.f32.mrf.mxu0
        %v1240 = vadd.f32 0.0, %v1239
        %v1241 = vpop.f32.mrf.mxu0
        %v1242 = vpop.f32.mrf.mxu0
        %v1243 = vadd.f32 0.0, %v1242
        %v1244 = vpop.f32.mrf.mxu0
        %1245 = vmatprep.mubr.bf16.mxu0 0
        %1246 = vmatmul.mubr.bf16.gmra.mxu0 %v1177
        %v1247 = vpop.f32.mrf.mxu0
        %v1248 = vadd.f32 0.0, %v1247
        %v1249 = vpop.f32.mrf.mxu0
        %v1250 = vpop.f32.mrf.mxu0
        %v1251 = vadd.f32 0.0, %v1250
        %v1252 = vpop.f32.mrf.mxu0
        %1253 = vmatprep.mubr.bf16.mxu0 0
        %1254 = vmatmul.mubr.bf16.gmra.mxu0 %v1180
        %v1255 = vpop.f32.mrf.mxu0
        %v1256 = vadd.f32 0.0, %v1255
        %v1257 = vpop.f32.mrf.mxu0
        %v1258 = vpop.f32.mrf.mxu0
        %v1259 = vadd.f32 0.0, %v1258
        %v1260 = vpop.f32.mrf.mxu0
        %1261 = vmatprep.mubr.bf16.mxu0 0
        %1262 = vmatmul.mubr.bf16.gmra.mxu0 %v1183
        %v1263 = vpop.f32.mrf.mxu0
        %v1264 = vadd.f32 0.0, %v1263
        %v1265 = vpop.f32.mrf.mxu0
        %v1266 = vpop.f32.mrf.mxu0
        %v1267 = vadd.f32 0.0, %v1266
        %v1268 = vpop.f32.mrf.mxu0
        %1269 = vmatprep.mubr.bf16.mxu0 0
        %1270 = vmatmul.mubr.bf16.gmra.mxu0 %v1186
        %v1271 = vpop.f32.mrf.mxu0
        %v1272 = vadd.f32 0.0, %v1271
        %v1273 = vpop.f32.mrf.mxu0
        %v1274 = vpop.f32.mrf.mxu0
        %v1275 = vadd.f32 0.0, %v1274
        %v1276 = vpop.f32.mrf.mxu0
        %1277 = vmatprep.mubr.bf16.mxu0 0
        %1278 = vmatmul.mubr.bf16.gmra.mxu0 %v1189
        %v1279 = vpop.f32.mrf.mxu0
        %v1280 = vadd.f32 0.0, %v1279
        %v1281 = vpop.f32.mrf.mxu0
        %v1282 = vpop.f32.mrf.mxu0
        %v1283 = vadd.f32 0.0, %v1282
        %v1284 = vpop.f32.mrf.mxu0
        %1285 = vmatprep.mubr.bf16.mxu0 0
        %1286 = vmatmul.mubr.bf16.gmra.mxu0 %v1192
        %v1287 = vpop.f32.mrf.mxu0
        %v1288 = vadd.f32 0.0, %v1287
        %v1289 = vpop.f32.mrf.mxu0
        %v1290 = vpop.f32.mrf.mxu0
        %v1291 = vadd.f32 0.0, %v1290
        %v1292 = vpop.f32.mrf.mxu0
        %1293 = vmatprep.mubr.bf16.mxu0 0
        %1294 = vmatmul.mubr.bf16.gmra.mxu0 %v1195
        %v1295 = vpop.f32.mrf.mxu0
        %v1296 = vadd.f32 0.0, %v1295
        %v1297 = vpop.f32.mrf.mxu0
        %v1298 = vpop.f32.mrf.mxu0
        %v1299 = vadd.f32 0.0, %v1298
        %v1300 = vpop.f32.mrf.mxu0
        %1301 = vdwg.mxu0
        %v1302 = vmax.f32 %v644, %v840
        %v1303 = vmax.f32 %v647, %v843
        %v1304 = vmax.f32 %v652, %v848
        %v1305 = vmax.f32 %v655, %v851
        %v1306 = vmax.f32 %v660, %v856
        %v1307 = vmax.f32 %v663, %v859
        %v1308 = vmax.f32 %v668, %v864
        %v1309 = vmax.f32 %v671, %v867
        %v1310 = vmax.f32 %v676, %v872
        %v1311 = vmax.f32 %v679, %v875
        %v1312 = vmax.f32 %v684, %v880
        %v1313 = vmax.f32 %v687, %v883
        %v1314 = vmax.f32 %v692, %v888
        %v1315 = vmax.f32 %v695, %v891
        %v1316 = vmax.f32 %v700, %v896
        %v1317 = vmax.f32 %v703, %v899
        %v1318 = vmax.f32 %v708, %v904
        %v1319 = vmax.f32 %v711, %v907
        %v1320 = vmax.f32 %v1036, %v1232
        %v1321 = vmax.f32 %v1039, %v1235
        %v1322 = vmax.f32 %v1044, %v1240
        %v1323 = vmax.f32 %v1047, %v1243
        %v1324 = vmax.f32 %v1052, %v1248
        %v1325 = vmax.f32 %v1055, %v1251
        %v1326 = vmax.f32 %v1060, %v1256
        %v1327 = vmax.f32 %v1063, %v1259
        %v1328 = vmax.f32 %v1068, %v1264
        %v1329 = vmax.f32 %v1071, %v1267
        %v1330 = vmax.f32 %v1076, %v1272
        %v1331 = vmax.f32 %v1079, %v1275
        %v1332 = vmax.f32 %v1084, %v1280
        %v1333 = vmax.f32 %v1087, %v1283
        %v1334 = vmax.f32 %v1092, %v1288
        %v1335 = vmax.f32 %v1095, %v1291
        %v1336 = vmax.f32 %v1100, %v1296
        %v1337 = vmax.f32 %v1103, %v1299
        %v1338 = vmax.f32 %v1302, %v1320
        %v1339 = vmax.f32 %v1303, %v1321
        %v1340 = vmax.f32 %v1304, %v1322
        %v1341 = vmax.f32 %v1305, %v1323
        %v1342 = vmax.f32 %v1306, %v1324
        %v1343 = vmax.f32 %v1307, %v1325
        %v1344 = vmax.f32 %v1308, %v1326
        %v1345 = vmax.f32 %v1309, %v1327
        %v1346 = vmax.f32 %v1310, %v1328
        %v1347 = vmax.f32 %v1311, %v1329
        %v1348 = vmax.f32 %v1312, %v1330
        %v1349 = vmax.f32 %v1313, %v1331
        %v1350 = vmax.f32 %v1314, %v1332
        %v1351 = vmax.f32 %v1315, %v1333
        %v1352 = vmax.f32 %v1316, %v1334
        %v1353 = vmax.f32 %v1317, %v1335
        %v1354 = vmax.f32 %v1318, %v1336
        %v1355 = vmax.f32 %v1319, %v1337
        %v1356 = vld [vmem:[%s2] sm:$0x1]
        %v1358 = vlaneseq
        %v1359 = vshrl.u32 %v1358, 7
        %v1360 = vsub.s32 0, %v1359
        %v1361 = vrot.slane %v1356, %v1360
        %v1363 = vadd.f32 %v1338, %v1361
        %v1364 = vadd.f32 %v1339, %v1361
        %v1365 = vadd.f32 %v1340, %v1361
        %v1366 = vadd.f32 %v1341, %v1361
        %v1367 = vadd.f32 %v1342, %v1361
        %v1368 = vadd.f32 %v1343, %v1361
        %v1369 = vadd.f32 %v1344, %v1361
        %v1370 = vadd.f32 %v1345, %v1361
        %v1371 = vadd.f32 %v1346, %v1361
        %v1372 = vadd.f32 %v1347, %v1361
        %v1373 = vadd.f32 %v1348, %v1361
        %v1374 = vadd.f32 %v1349, %v1361
        %v1375 = vadd.f32 %v1350, %v1361
        %v1376 = vadd.f32 %v1351, %v1361
        %v1377 = vadd.f32 %v1352, %v1361
        %v1378 = vadd.f32 %v1353, %v1361
        %v1379 = vadd.f32 %v1354, %v1361
        %v1380 = vadd.f32 %v1355, %v1361
        %v1381 = vmax.f32 %v1363, 0.0
        %v1382 = vmax.f32 %v1364, 0.0
        %v1383 = vmax.f32 %v1365, 0.0
        %v1384 = vmax.f32 %v1366, 0.0
        %v1385 = vmax.f32 %v1367, 0.0
        %v1386 = vmax.f32 %v1368, 0.0
        %v1387 = vmax.f32 %v1369, 0.0
        %v1388 = vmax.f32 %v1370, 0.0
        %v1389 = vmax.f32 %v1371, 0.0
        %v1390 = vmax.f32 %v1372, 0.0
        %v1391 = vmax.f32 %v1373, 0.0
        %v1392 = vmax.f32 %v1374, 0.0
        %v1393 = vmax.f32 %v1375, 0.0
        %v1394 = vmax.f32 %v1376, 0.0
        %v1395 = vmax.f32 %v1377, 0.0
        %v1396 = vmax.f32 %v1378, 0.0
        %v1397 = vmax.f32 %v1379, 0.0
        %v1398 = vmax.f32 %v1380, 0.0
        %v1399 = vpack.c.bf16 %v1382, %v1381
        %v1400 = vpack.c.bf16 %v1384, %v1383
        %v1401 = vpack.c.bf16 %v1386, %v1385
        %v1402 = vpack.c.bf16 %v1388, %v1387
        %v1403 = vpack.c.bf16 %v1390, %v1389
        %v1404 = vpack.c.bf16 %v1392, %v1391
        %v1405 = vpack.c.bf16 %v1394, %v1393
        %v1406 = vpack.c.bf16 %v1396, %v1395
        %v1407 = vpack.c.bf16 %v1398, %v1397
        %v1417 = vunpack.c.l.b16 %v1399
        %v1418 = vunpack.c.h.b16 %v1399
        %v1419 = vunpack.c.l.b16 %v1400
        %v1420 = vunpack.c.h.b16 %v1400
        %v1421 = vunpack.c.l.b16 %v1401
        %v1422 = vunpack.c.h.b16 %v1401
        %v1423 = vunpack.c.l.b16 %v1402
        %v1424 = vunpack.c.h.b16 %v1402
        %v1425 = vunpack.c.l.b16 %v1403
        %v1426 = vunpack.c.h.b16 %v1403
        %v1427 = vunpack.c.l.b16 %v1404
        %v1428 = vunpack.c.h.b16 %v1404
        %v1429 = vunpack.c.l.b16 %v1405
        %v1430 = vunpack.c.h.b16 %v1405
        %v1431 = vunpack.c.l.b16 %v1406
        %v1432 = vunpack.c.h.b16 %v1406
        %v1433 = vunpack.c.l.b16 %v1407
        %v1434 = vunpack.c.h.b16 %v1407
        %v1435 = vpack.c.b16 %v1417, %v1417
        %v1436 = vpack.c.b16 %v1418, %v1418
        %v1437 = vpack.c.b16 %v1419, %v1419
        %v1438 = vpack.c.b16 %v1420, %v1420
        %v1439 = vpack.c.b16 %v1421, %v1421
        %v1440 = vpack.c.b16 %v1422, %v1422
        %v1441 = vpack.c.b16 %v1423, %v1423
        %v1442 = vpack.c.b16 %v1424, %v1424
        %v1443 = vpack.c.b16 %v1425, %v1425
        %v1444 = vpack.c.b16 %v1426, %v1426
        %v1445 = vpack.c.b16 %v1427, %v1427
        %v1446 = vpack.c.b16 %v1428, %v1428
        %v1447 = vpack.c.b16 %v1429, %v1429
        %v1448 = vpack.c.b16 %v1430, %v1430
        %v1449 = vpack.c.b16 %v1431, %v1431
        %v1450 = vpack.c.b16 %v1432, %v1432
        %v1451 = vpack.c.b16 %v1433, %v1433
        %v1452 = vpack.c.b16 %v1434, %v1434
        %1471 = vst [vmem:[%s499] sm:$0xf] %v1435
        %1472 = vst [vmem:[%s499 + $0x4] sm:$0xf] %v1436
        %1473 = vst [vmem:[%s499 + $0x8] sm:$0xf] %v1437
        %1474 = vst [vmem:[%s499 + $0xc] sm:$0xf] %v1438
        %1475 = vst [vmem:[%s499 + $0x10] sm:$0xf] %v1439
        %1476 = vst [vmem:[%s499 + $0x14] sm:$0xf] %v1440
        %1477 = vst [vmem:[%s499 + $0x18] sm:$0xf] %v1441
        %1478 = vst [vmem:[%s499 + $0x1c] sm:$0xf] %v1442
        %1479 = vst [vmem:[%s499 + $0x20] sm:$0xf] %v1443
        %1480 = vst [vmem:[%s499 + $0x24] sm:$0xf] %v1444
        %1481 = vst [vmem:[%s499 + $0x28] sm:$0xf] %v1445
        %1482 = vst [vmem:[%s499 + $0x2c] sm:$0xf] %v1446
        %1483 = vst [vmem:[%s499 + $0x30] sm:$0xf] %v1447
        %1484 = vst [vmem:[%s499 + $0x34] sm:$0xf] %v1448
        %1485 = vst [vmem:[%s499 + $0x38] sm:$0xf] %v1449
        %1486 = vst [vmem:[%s499 + $0x3c] sm:$0xf] %v1450
        %1487 = vst [vmem:[%s499 + $0x40] sm:$0xf] %v1451
        %1488 = vst [vmem:[%s499 + $0x44] sm:$0xf] %v1452
        %s1489 = smul.u32 18, %s14
        %p1490 = scmp.lt.s32.totalorder %s1489, 35
        %s1491 = scalar_select %p1490, %s1489, 35
        %s1492 = smul.addr %s1491, 4
        %s1493 = scalar_lea.vmem %s3, %s1492
        // Predicated region
        $region74: #{my_conv_net_forward.3} parent=68 // pred_check
          %p1494 = pneg %p100
        $region75: #{my_conv_net_forward.3} parent=68 // pred_check_branch
          %1496 = sbr.rel (%p1494) target = $region77
        $region76: #{my_conv_net_forward.3} parent=68 // pred_region
          %s1497 = smul.u32 18, %s14
        $region77: #{my_conv_net_forward.3} parent=68 // pred_fallthru
          _
      $region69: #{my_conv_net_forward.3} parent=5 // pred_fallthru
        _
      %p1498 = scmp.le.s32.totalorder 2, %s9
      // Predicated region
      $region78: #{my_conv_net_forward.3} parent=5 // pred_check
        %p1499 = pneg %p1498
      $region79: #{my_conv_net_forward.3} parent=5 // pred_check_branch
        %1501 = sbr.rel (%p1499) target = $region81
      $region80: #{my_conv_net_forward.3} parent=5 // pred_region
        %s1502 = ssub.s32 %s9, 2
        // Predicated region
        $region82: #{my_conv_net_forward.3} parent=80 // pred_check
          %p1503 = pneg %p106
        $region83: #{my_conv_net_forward.3} parent=80 // pred_check_branch
          %1505 = sbr.rel (%p1503) target = $region85
        $region84: #{my_conv_net_forward.3} parent=80 // pred_region
          %s1506 = smul.u32 18, %s15
          %p1507 = scmp.lt.s32.totalorder %s1506, 35
          %s1508 = scalar_select %p1507, %s1506, 35
          %s1509 = smul.addr %s1508, 4
          %s1510 = scalar_lea.vmem %s3, %s1509
        $region85: #{my_conv_net_forward.3} parent=80 // pred_fallthru
          _
      $region81: #{my_conv_net_forward.3} parent=5 // pred_fallthru
        _
    $region6: #{my_conv_net_forward.3} parent=1 // loop_footer
      %s13 = sadd.s32 1, %s9
    $region7: #{my_conv_net_forward.3} parent=1 // loop_footer_branch
      %8 = sbr.rel target = $region3
    $region8: #{my_conv_net_forward.3} parent=1 // loop_exit
      _

// kernel: my_conv_net_forward.4
$region0: #{my_conv_net_forward.4}
  #allocation0 [shape = 'u32[]', space=smem, size = 0x4, offset = 0x4, fixed_abs, tag = 'smem constant byte address 0x4 - core index']
  #allocation1 [shape = 'u32[144,128]{1,0:T(1,128)}', space=vmem, size = 0x12000, scoped, tag = 'internal scratch']
  %s0 = inlined_call_operand.vmem [shape: bf16[224,128], index: 0, kind: input, shape index: {}]
  %s1 = inlined_call_operand.vmem [shape: bf16[128,128], index: 1, kind: input, shape index: {}]
  %s2 = inlined_call_operand.vmem [shape: f32[1,128], index: 2, kind: input, shape index: {}]
  %s3 = inlined_call_operand.vmem [shape: bf16[224,128], index: 3, kind: output, shape index: {}]
  %s4 = sld [smem:[#allocation0]]
  $region45: #{my_conv_net_forward.4} parent=0
    _
  %s6 = ssub.s32 1, %s4
  %s7 = scalar_select 0, %s6, %s4
  loop: start=0, step=1, limit=4
  $region2: #{my_conv_net_forward.4} parent=0 // loop_pre_header
    _
  $region3: #{my_conv_net_forward.4} parent=0 // loop_header
    %s9 = sphi 0, %s13
    %p10 = scmp.ge.s32.totalorder %s9, 4
    %s19 = sphi 0, %s21
    %s22 = sphi 0, %s19
    %s23 = sphi 0, %s22
    %s39 = sphi 0, %s23
    %s43 = sphi 0, %s43
    %s45 = sphi 0, %s43
    %s46 = sphi 0, %s45
    %s60 = sphi 0, %s46
    %s64 = sphi 0, %s64
    %s66 = sphi 0, %s64
    %s67 = sphi 0, %s66
    %s81 = sphi 0, %s67
    %s87 = sphi 0, %s89
    %s90 = sphi 0, %s87
    %s91 = sphi 0, %s90
    %s107 = sphi 0, %s91
  $region4: #{my_conv_net_forward.4} parent=0 // loop_header_branch
    %12 = sbr.rel (%p10) target = $region8
  $region5: #{my_conv_net_forward.4} parent=0 // loop_body
    %s14 = ssub.s32 %s9, 1
    %s15 = ssub.s32 %s9, 2
    %s16 = sadd.s32 %s9, 1
    %s17 = ssub.s32 %s9, %s16
    %p18 = scmp.eq.s32.totalorder %s17, 0
    %s20 = sadd.s32 %s19, 1
    %s21 = scalar_select %p18, %s19, %s20
    %p24 = pneg %p18
    %p25 = scmp.eq.s32.totalorder %s9, 1
    %p26 = por %p24, %p25
    %p27 = scmp.ne.s32.totalorder %s19, %s22
    %p28 = scmp.eq.s32.totalorder %s9, 0
    %p29 = por %p27, %p28
    %p30 = scmp.ne.s32.totalorder %s19, %s22
    %p31 = scmp.eq.s32.totalorder %s14, 1
    %p32 = por %p30, %p31
    %p33 = scmp.ne.s32.totalorder %s22, %s23
    %p34 = scmp.eq.s32.totalorder %s14, 0
    %p35 = por %p33, %p34
    %p36 = scmp.ne.s32.totalorder %s22, %s23
    %p37 = scmp.eq.s32.totalorder %s15, 1
    %p38 = por %p36, %p37
    %p40 = scmp.ne.s32.totalorder %s23, %s39
    %p41 = scmp.eq.s32.totalorder %s15, 0
    %p42 = por %p40, %p41
    %s44 = sadd.s32 %s43, 1
    %p47 = scmp.eq.s32.totalorder %s9, 1
    %p48 = scmp.ne.s32.totalorder %s43, %s45
    %p49 = scmp.eq.s32.totalorder %s9, 0
    %p50 = por %p48, %p49
    %p51 = scmp.ne.s32.totalorder %s43, %s45
    %p52 = scmp.eq.s32.totalorder %s14, 1
    %p53 = por %p51, %p52
    %p54 = scmp.ne.s32.totalorder %s45, %s46
    %p55 = scmp.eq.s32.totalorder %s14, 0
    %p56 = por %p54, %p55
    %p57 = scmp.ne.s32.totalorder %s45, %s46
    %p58 = scmp.eq.s32.totalorder %s15, 1
    %p59 = por %p57, %p58
    %p61 = scmp.ne.s32.totalorder %s46, %s60
    %p62 = scmp.eq.s32.totalorder %s15, 0
    %p63 = por %p61, %p62
    %s65 = sadd.s32 %s64, 1
    %p68 = scmp.eq.s32.totalorder %s9, 1
    %p69 = scmp.ne.s32.totalorder %s64, %s66
    %p70 = scmp.eq.s32.totalorder %s9, 0
    %p71 = por %p69, %p70
    %p72 = scmp.ne.s32.totalorder %s64, %s66
    %p73 = scmp.eq.s32.totalorder %s14, 1
    %p74 = por %p72, %p73
    %p75 = scmp.ne.s32.totalorder %s66, %s67
    %p76 = scmp.eq.s32.totalorder %s14, 0
    %p77 = por %p75, %p76
    %p78 = scmp.ne.s32.totalorder %s66, %s67
    %p79 = scmp.eq.s32.totalorder %s15, 1
    %p80 = por %p78, %p79
    %p82 = scmp.ne.s32.totalorder %s67, %s81
    %p83 = scmp.eq.s32.totalorder %s15, 0
    %p84 = por %p82, %p83
    %s85 = ssub.s32 %s9, %s16
    %p86 = scmp.eq.s32.totalorder %s85, 0
    %s88 = sadd.s32 %s87, 1
    %s89 = scalar_select %p86, %s87, %s88
    %p92 = pneg %p86
    %p93 = scmp.eq.s32.totalorder %s9, 1
    %p94 = por %p92, %p93
    %p95 = scmp.ne.s32.totalorder %s87, %s90
    %p96 = scmp.eq.s32.totalorder %s9, 0
    %p97 = por %p95, %p96
    %p98 = scmp.ne.s32.totalorder %s87, %s90
    %p99 = scmp.eq.s32.totalorder %s14, 1
    %p100 = por %p98, %p99
    %p101 = scmp.ne.s32.totalorder %s90, %s91
    %p102 = scmp.eq.s32.totalorder %s14, 0
    %p103 = por %p101, %p102
    %p104 = scmp.ne.s32.totalorder %s90, %s91
    %p105 = scmp.eq.s32.totalorder %s15, 1
    %p106 = por %p104, %p105
    %p108 = scmp.ne.s32.totalorder %s91, %s107
    %p109 = scmp.eq.s32.totalorder %s15, 0
    %p110 = por %p108, %p109
    %p111 = scmp.le.s32.totalorder 1, %s9
    %p112 = scmp.lt.s32.totalorder %s9, 3
    %p113 = pnand %p111, %p112
    %p114 = pneg %p113
    // Predicated region
    $region9: #{my_conv_net_forward.4} parent=5 // pred_check
      _
    $region10: #{my_conv_net_forward.4} parent=5 // pred_check_branch
      %116 = sbr.rel (%p113) target = $region12
    $region11: #{my_conv_net_forward.4} parent=5 // pred_region
      %s117 = ssub.s32 %s9, 1
      // Predicated region
      $region13: #{my_conv_net_forward.4} parent=11 // pred_check
        %p118 = pneg %p56
      $region14: #{my_conv_net_forward.4} parent=11 // pred_check_branch
        %120 = sbr.rel (%p118) target = $region16
      $region15: #{my_conv_net_forward.4} parent=11 // pred_region
        _
      $region16: #{my_conv_net_forward.4} parent=11 // pred_fallthru
        _
      // Predicated region
      $region17: #{my_conv_net_forward.4} parent=11 // pred_check
        %p121 = pneg %p77
      $region18: #{my_conv_net_forward.4} parent=11 // pred_check_branch
        %123 = sbr.rel (%p121) target = $region20
      $region19: #{my_conv_net_forward.4} parent=11 // pred_region
        _
      $region20: #{my_conv_net_forward.4} parent=11 // pred_fallthru
        _
    $region12: #{my_conv_net_forward.4} parent=5 // pred_fallthru
      _
    %p124 = scmp.lt.s32.totalorder %s9, 2
    // Predicated region
    $region21: #{my_conv_net_forward.4} parent=5 // pred_check
      %p125 = pneg %p124
    $region22: #{my_conv_net_forward.4} parent=5 // pred_check_branch
      %127 = sbr.rel (%p125) target = $region24
    $region23: #{my_conv_net_forward.4} parent=5 // pred_region
      // Predicated region
      $region25: #{my_conv_net_forward.4} parent=23 // pred_check
        %p128 = pneg %p29
      $region26: #{my_conv_net_forward.4} parent=23 // pred_check_branch
        %130 = sbr.rel (%p128) target = $region28
      $region27: #{my_conv_net_forward.4} parent=23 // pred_region
        %s131 = smul.u32 14, %s9
        %p132 = scmp.lt.s32.totalorder %s131, 27
        %s133 = scalar_select %p132, %s131, 27
        %s134 = smul.addr %s133, 4
        %s135 = scalar_lea.vmem %s0, %s134
        %s136 = smul.u32 14, %s9
      $region28: #{my_conv_net_forward.4} parent=23 // pred_fallthru
        _
    $region24: #{my_conv_net_forward.4} parent=5 // pred_fallthru
      _
    %p137 = scmp.le.s32.totalorder 1, %s9
    %p138 = scmp.lt.s32.totalorder %s9, 3
    %p139 = pnand %p137, %p138
    %p140 = pneg %p139
    // Predicated region
    $region29: #{my_conv_net_forward.4} parent=5 // pred_check
      _
    $region30: #{my_conv_net_forward.4} parent=5 // pred_check_branch
      %142 = sbr.rel (%p139) target = $region32
    $region31: #{my_conv_net_forward.4} parent=5 // pred_region
      %s143 = ssub.s32 %s9, 1
      %s144 = smul.u32 14, %s14
      %p145 = scmp.lt.s32.totalorder %s144, 27
      %s146 = scalar_select %p145, %s144, 27
      %s147 = smul.addr %s146, 4
      %s148 = scalar_lea.vmem %s0, %s147
      %p149 = pneg %p35
      %p150 = pneg %p32
      %p151 = pneg %p56
      %p152 = pneg %p53
      %p153 = pneg %p77
      %p154 = pneg %p74
      %p155 = pneg %p103
      %p156 = pneg %p100
      %s157 = smul.u32 14, %s14
      %p158 = scmp.lt.s32.totalorder %s157, 27
      %s159 = scalar_select %p158, %s157, 27
      %s160 = smul.addr %s159, 4
      %s161 = scalar_lea.vmem %s3, %s160
      %s162 = smul.u32 14, %s14
      %p163 = scmp.lt.s32.totalorder %s162, 27
      %s164 = scalar_select %p163, %s162, 27
      %s165 = smul.addr %s164, 4
      %s166 = scalar_lea.vmem %s0, %s165
      %s167 = smul.u32 14, %s14
      %s168 = smul.u32 14, %s14
      %p169 = scmp.lt.s32.totalorder %s168, 27
      %s170 = scalar_select %p169, %s168, 27
      %s171 = smul.addr %s170, 4
      %s172 = scalar_lea.vmem %s3, %s171
      %s173 = smul.u32 14, %s14
      %v175 = vld [vmem:[%s166] sm:$0xf]
      %v176 = vld [vmem:[%s166 + $0x4] sm:$0xf]
      %v177 = vld [vmem:[%s166 + $0x8] sm:$0xf]
      %v178 = vld [vmem:[%s166 + $0xc] sm:$0xf]
      %v179 = vld [vmem:[%s166 + $0x10] sm:$0xf]
      %v180 = vld [vmem:[%s166 + $0x14] sm:$0xf]
      %v181 = vld [vmem:[%s166 + $0x18] sm:$0xf]
      %v182 = vld [vmem:[%s166 + $0x1c] sm:$0xf]
      %v183 = vld [vmem:[%s166 + $0x20] sm:$0xf]
      %v184 = vld [vmem:[%s166 + $0x24] sm:$0xf]
      %v185 = vld [vmem:[%s166 + $0x28] sm:$0xf]
      %v186 = vld [vmem:[%s166 + $0x2c] sm:$0xf]
      %v187 = vld [vmem:[%s166 + $0x30] sm:$0xf]
      %v188 = vld [vmem:[%s166 + $0x34] sm:$0xf]
      %v189 = vld [vmem:[%s1] sm:$0xf]
      %v190 = vld [vmem:[%s1 + $0x4] sm:$0xf]
      %v191 = vld [vmem:[%s1 + $0x8] sm:$0xf]
      %v192 = vld [vmem:[%s1 + $0xc] sm:$0xf]
      %v193 = vld [vmem:[%s1 + $0x10] sm:$0xf]
      %v194 = vld [vmem:[%s1 + $0x14] sm:$0xf]
      %v195 = vld [vmem:[%s1 + $0x18] sm:$0xf]
      %v196 = vld [vmem:[%s1 + $0x1c] sm:$0xf]
      %v197 = vld [vmem:[%s1 + $0x20] sm:$0xf]
      %v198 = vld [vmem:[%s1 + $0x24] sm:$0xf]
      %v199 = vld [vmem:[%s1 + $0x28] sm:$0xf]
      %v200 = vld [vmem:[%s1 + $0x2c] sm:$0xf]
      %v201 = vld [vmem:[%s1 + $0x30] sm:$0xf]
      %v202 = vld [vmem:[%s1 + $0x34] sm:$0xf]
      %v203 = vld [vmem:[%s1 + $0x38] sm:$0xf]
      %v204 = vld [vmem:[%s1 + $0x3c] sm:$0xf]
      %v205 = vld [vmem:[%s2] sm:$0x1]
      %v207 = vlaneseq
      %v208 = vshrl.u32 %v207, 7
      %v209 = vsub.s32 0, %v208
      %v210 = vrot.slane %v205, %v209
      %v226 = vunpack.c.l.b16 %v175
      %v227 = vunpack.c.l.b16 %v176
      %v228 = vunpack.c.l.b16 %v177
      %v229 = vunpack.c.l.b16 %v178
      %v230 = vunpack.c.l.b16 %v179
      %v231 = vunpack.c.l.b16 %v180
      %v232 = vunpack.c.l.b16 %v181
      %v233 = vunpack.c.l.b16 %v182
      %v234 = vunpack.c.l.b16 %v183
      %v235 = vunpack.c.l.b16 %v184
      %v236 = vunpack.c.l.b16 %v185
      %v237 = vunpack.c.l.b16 %v186
      %v238 = vunpack.c.l.b16 %v187
      %v239 = vunpack.c.l.b16 %v188
      %v240 = vpack.c.b16 %v227, %v226
      %v241 = vpack.c.b16 %v229, %v228
      %v242 = vpack.c.b16 %v231, %v230
      %v243 = vpack.c.b16 %v233, %v232
      %v244 = vpack.c.b16 %v235, %v234
      %v245 = vpack.c.b16 %v237, %v236
      %v246 = vpack.c.b16 %v239, %v238
      %v270 = vunpack.c.l.b16 %v189
      %v271 = vunpack.c.l.b16 %v190
      %v272 = vunpack.c.l.b16 %v191
      %v273 = vunpack.c.l.b16 %v192
      %v274 = vunpack.c.l.b16 %v193
      %v275 = vunpack.c.l.b16 %v194
      %v276 = vunpack.c.l.b16 %v195
      %v277 = vunpack.c.l.b16 %v196
      %v278 = vunpack.c.l.b16 %v197
      %v279 = vunpack.c.l.b16 %v198
      %v280 = vunpack.c.l.b16 %v199
      %v281 = vunpack.c.l.b16 %v200
      %v282 = vunpack.c.l.b16 %v201
      %v283 = vunpack.c.l.b16 %v202
      %v284 = vunpack.c.l.b16 %v203
      %v285 = vunpack.c.l.b16 %v204
      %v286 = vpack.c.b16 %v271, %v270
      %v287 = vpack.c.b16 %v273, %v272
      %v288 = vpack.c.b16 %v275, %v274
      %v289 = vpack.c.b16 %v277, %v276
      %v290 = vpack.c.b16 %v279, %v278
      %v291 = vpack.c.b16 %v281, %v280
      %v292 = vpack.c.b16 %v283, %v282
      %v293 = vpack.c.b16 %v285, %v284
      %302 = vmatprep.subr.bf16.mxu0 0
      %303 = vmatpush1.bf16.msra.mxu0 %v293
      %304 = vmatprep.subr.bf16.mxu0 0
      %305 = vmatpush1.bf16.msra.mxu0 %v292
      %306 = vmatprep.subr.bf16.mxu0 0
      %307 = vmatpush1.bf16.msra.mxu0 %v291
      %308 = vmatprep.subr.bf16.mxu0 0
      %309 = vmatpush1.bf16.msra.mxu0 %v290
      %310 = vmatprep.subr.bf16.mxu0 0
      %311 = vmatpush1.bf16.msra.mxu0 %v289
      %312 = vmatprep.subr.bf16.mxu0 0
      %313 = vmatpush1.bf16.msra.mxu0 %v288
      %314 = vmatprep.subr.bf16.mxu0 0
      %315 = vmatpush1.bf16.msra.mxu0 %v287
      %316 = vmatprep.subr.bf16.mxu0 0
      %317 = vmatpush1.bf16.msra.mxu0 %v286
      %318 = vmatprep.subr.bf16.mxu0 0
      %319 = vmatpush2.bf16.msra.mxu0 0
      %320 = vmatprep.subr.bf16.mxu0 0
      %321 = vmatpush2.bf16.msra.mxu0 0
      %322 = vmatprep.subr.bf16.mxu0 0
      %323 = vmatpush2.bf16.msra.mxu0 0
      %324 = vmatprep.subr.bf16.mxu0 0
      %325 = vmatpush2.bf16.msra.mxu0 0
      %326 = vmatprep.subr.bf16.mxu0 0
      %327 = vmatpush2.bf16.msra.mxu0 0
      %328 = vmatprep.subr.bf16.mxu0 0
      %329 = vmatpush2.bf16.msra.mxu0 0
      %330 = vmatprep.subr.bf16.mxu0 0
      %331 = vmatpush2.bf16.msra.mxu0 0
      %332 = vmatprep.subr.bf16.mxu0 0
      %333 = vmatpush2.bf16.msra.mxu0 0
      %334 = vmatprep.mubr.bf16.mxu0 0
      %335 = vmatmul.mubr.bf16.gmra.mxu0 %v240
      %v336 = vpop.f32.mrf.mxu0
      %v337 = vadd.f32 %v210, %v336
      %v338 = vpop.f32.mrf.mxu0
      %v339 = vpop.f32.mrf.mxu0
      %v340 = vadd.f32 %v210, %v339
      %v341 = vpop.f32.mrf.mxu0
      %342 = vmatprep.mubr.bf16.mxu0 0
      %343 = vmatmul.mubr.bf16.gmra.mxu0 %v241
      %v344 = vpop.f32.mrf.mxu0
      %v345 = vadd.f32 %v210, %v344
      %v346 = vpop.f32.mrf.mxu0
      %v347 = vpop.f32.mrf.mxu0
      %v348 = vadd.f32 %v210, %v347
      %v349 = vpop.f32.mrf.mxu0
      %350 = vmatprep.mubr.bf16.mxu0 0
      %351 = vmatmul.mubr.bf16.gmra.mxu0 %v242
      %v352 = vpop.f32.mrf.mxu0
      %v353 = vadd.f32 %v210, %v352
      %v354 = vpop.f32.mrf.mxu0
      %v355 = vpop.f32.mrf.mxu0
      %v356 = vadd.f32 %v210, %v355
      %v357 = vpop.f32.mrf.mxu0
      %358 = vmatprep.mubr.bf16.mxu0 0
      %359 = vmatmul.mubr.bf16.gmra.mxu0 %v243
      %v360 = vpop.f32.mrf.mxu0
      %v361 = vadd.f32 %v210, %v360
      %v362 = vpop.f32.mrf.mxu0
      %v363 = vpop.f32.mrf.mxu0
      %v364 = vadd.f32 %v210, %v363
      %v365 = vpop.f32.mrf.mxu0
      %366 = vmatprep.mubr.bf16.mxu0 0
      %367 = vmatmul.mubr.bf16.gmra.mxu0 %v244
      %v368 = vpop.f32.mrf.mxu0
      %v369 = vadd.f32 %v210, %v368
      %v370 = vpop.f32.mrf.mxu0
      %v371 = vpop.f32.mrf.mxu0
      %v372 = vadd.f32 %v210, %v371
      %v373 = vpop.f32.mrf.mxu0
      %374 = vmatprep.mubr.bf16.mxu0 0
      %375 = vmatmul.mubr.bf16.gmra.mxu0 %v245
      %v376 = vpop.f32.mrf.mxu0
      %v377 = vadd.f32 %v210, %v376
      %v378 = vpop.f32.mrf.mxu0
      %v379 = vpop.f32.mrf.mxu0
      %v380 = vadd.f32 %v210, %v379
      %v381 = vpop.f32.mrf.mxu0
      %382 = vmatprep.mubr.bf16.mxu0 0
      %383 = vmatmul.mubr.bf16.gmra.mxu0 %v246
      %v384 = vpop.f32.mrf.mxu0
      %v385 = vadd.f32 %v210, %v384
      %v386 = vpop.f32.mrf.mxu0
      %v387 = vpop.f32.mrf.mxu0
      %v388 = vadd.f32 %v210, %v387
      %v389 = vpop.f32.mrf.mxu0
      %390 = vdwg.mxu0
      %v391 = vmax.f32 %v337, 0.0
      %v392 = vmax.f32 %v340, 0.0
      %v393 = vmax.f32 %v345, 0.0
      %v394 = vmax.f32 %v348, 0.0
      %v395 = vmax.f32 %v353, 0.0
      %v396 = vmax.f32 %v356, 0.0
      %v397 = vmax.f32 %v361, 0.0
      %v398 = vmax.f32 %v364, 0.0
      %v399 = vmax.f32 %v369, 0.0
      %v400 = vmax.f32 %v372, 0.0
      %v401 = vmax.f32 %v377, 0.0
      %v402 = vmax.f32 %v380, 0.0
      %v403 = vmax.f32 %v385, 0.0
      %v404 = vmax.f32 %v388, 0.0
      %v405 = vpack.c.bf16 %v392, %v391
      %v406 = vpack.c.bf16 %v394, %v393
      %v407 = vpack.c.bf16 %v396, %v395
      %v408 = vpack.c.bf16 %v398, %v397
      %v409 = vpack.c.bf16 %v400, %v399
      %v410 = vpack.c.bf16 %v402, %v401
      %v411 = vpack.c.bf16 %v404, %v403
      %v419 = vunpack.c.l.b16 %v405
      %v420 = vunpack.c.h.b16 %v405
      %v421 = vunpack.c.l.b16 %v406
      %v422 = vunpack.c.h.b16 %v406
      %v423 = vunpack.c.l.b16 %v407
      %v424 = vunpack.c.h.b16 %v407
      %v425 = vunpack.c.l.b16 %v408
      %v426 = vunpack.c.h.b16 %v408
      %v427 = vunpack.c.l.b16 %v409
      %v428 = vunpack.c.h.b16 %v409
      %v429 = vunpack.c.l.b16 %v410
      %v430 = vunpack.c.h.b16 %v410
      %v431 = vunpack.c.l.b16 %v411
      %v432 = vunpack.c.h.b16 %v411
      %v433 = vpack.c.b16 %v419, %v419
      %v434 = vpack.c.b16 %v420, %v420
      %v435 = vpack.c.b16 %v421, %v421
      %v436 = vpack.c.b16 %v422, %v422
      %v437 = vpack.c.b16 %v423, %v423
      %v438 = vpack.c.b16 %v424, %v424
      %v439 = vpack.c.b16 %v425, %v425
      %v440 = vpack.c.b16 %v426, %v426
      %v441 = vpack.c.b16 %v427, %v427
      %v442 = vpack.c.b16 %v428, %v428
      %v443 = vpack.c.b16 %v429, %v429
      %v444 = vpack.c.b16 %v430, %v430
      %v445 = vpack.c.b16 %v431, %v431
      %v446 = vpack.c.b16 %v432, %v432
      %461 = vst [vmem:[%s172] sm:$0xf] %v433
      %462 = vst [vmem:[%s172 + $0x4] sm:$0xf] %v434
      %463 = vst [vmem:[%s172 + $0x8] sm:$0xf] %v435
      %464 = vst [vmem:[%s172 + $0xc] sm:$0xf] %v436
      %465 = vst [vmem:[%s172 + $0x10] sm:$0xf] %v437
      %466 = vst [vmem:[%s172 + $0x14] sm:$0xf] %v438
      %467 = vst [vmem:[%s172 + $0x18] sm:$0xf] %v439
      %468 = vst [vmem:[%s172 + $0x1c] sm:$0xf] %v440
      %469 = vst [vmem:[%s172 + $0x20] sm:$0xf] %v441
      %470 = vst [vmem:[%s172 + $0x24] sm:$0xf] %v442
      %471 = vst [vmem:[%s172 + $0x28] sm:$0xf] %v443
      %472 = vst [vmem:[%s172 + $0x2c] sm:$0xf] %v444
      %473 = vst [vmem:[%s172 + $0x30] sm:$0xf] %v445
      %474 = vst [vmem:[%s172 + $0x34] sm:$0xf] %v446
      %s475 = smul.u32 14, %s14
      %p476 = scmp.lt.s32.totalorder %s475, 27
      %s477 = scalar_select %p476, %s475, 27
      %s478 = smul.addr %s477, 4
      %s479 = scalar_lea.vmem %s3, %s478
      // Predicated region
      $region33: #{my_conv_net_forward.4} parent=31 // pred_check
        %p480 = pneg %p100
      $region34: #{my_conv_net_forward.4} parent=31 // pred_check_branch
        %482 = sbr.rel (%p480) target = $region36
      $region35: #{my_conv_net_forward.4} parent=31 // pred_region
        %s483 = smul.u32 14, %s14
      $region36: #{my_conv_net_forward.4} parent=31 // pred_fallthru
        _
    $region32: #{my_conv_net_forward.4} parent=5 // pred_fallthru
      _
    %p484 = scmp.le.s32.totalorder 2, %s9
    // Predicated region
    $region37: #{my_conv_net_forward.4} parent=5 // pred_check
      %p485 = pneg %p484
    $region38: #{my_conv_net_forward.4} parent=5 // pred_check_branch
      %487 = sbr.rel (%p485) target = $region40
    $region39: #{my_conv_net_forward.4} parent=5 // pred_region
      %s488 = ssub.s32 %s9, 2
      // Predicated region
      $region41: #{my_conv_net_forward.4} parent=39 // pred_check
        %p489 = pneg %p106
      $region42: #{my_conv_net_forward.4} parent=39 // pred_check_branch
        %491 = sbr.rel (%p489) target = $region44
      $region43: #{my_conv_net_forward.4} parent=39 // pred_region
        %s492 = smul.u32 14, %s15
        %p493 = scmp.lt.s32.totalorder %s492, 27
        %s494 = scalar_select %p493, %s492, 27
        %s495 = smul.addr %s494, 4
        %s496 = scalar_lea.vmem %s3, %s495
      $region44: #{my_conv_net_forward.4} parent=39 // pred_fallthru
        _
    $region40: #{my_conv_net_forward.4} parent=5 // pred_fallthru
      _
  $region6: #{my_conv_net_forward.4} parent=0 // loop_footer
    %s13 = sadd.s32 1, %s9
  $region7: #{my_conv_net_forward.4} parent=0 // loop_footer_branch
    %8 = sbr.rel target = $region3
  $region8: #{my_conv_net_forward.4} parent=0 // loop_exit
    _

// kernel: my_conv_net_forward.5
$region0: #{my_conv_net_forward.5}
  #allocation0 [shape = 'u32[]', space=smem, size = 0x4, offset = 0x4, fixed_abs, tag = 'smem constant byte address 0x4 - core index']
  #allocation1 [shape = 'u32[144,128]{1,0:T(1,128)}', space=vmem, size = 0x12000, scoped, tag = 'internal scratch']
  %s0 = inlined_call_operand.vmem [shape: bf16[32,2000], index: 0, kind: input, shape index: {}]
  %s1 = inlined_call_operand.vmem [shape: bf16[2000,512], index: 1, kind: input, shape index: {}]
  %s2 = inlined_call_operand.vmem [shape: f32[1,512], index: 2, kind: input, shape index: {}]
  %s3 = inlined_call_operand.vmem [shape: bf16[512,128], index: 3, kind: input, shape index: {}]
  %s4 = inlined_call_operand.vmem [shape: f32[1,128], index: 4, kind: input, shape index: {}]
  %s5 = inlined_call_operand.vmem [shape: f32[32,128], index: 5, kind: output, shape index: {}]
  %s6 = sld [smem:[#allocation0]]
  $region53: #{my_conv_net_forward.5} parent=0
    _
  %s8 = ssub.s32 1, %s6
  %s9 = scalar_select 0, %s8, %s6
  loop: start=0, step=1, limit=4
  $region2: #{my_conv_net_forward.5} parent=0 // loop_pre_header
    _
  $region3: #{my_conv_net_forward.5} parent=0 // loop_header
    %s11 = sphi 0, %s15
    %p12 = scmp.ge.s32.totalorder %s11, 4
    %s21 = sphi 0, %s23
    %s24 = sphi 0, %s21
    %s25 = sphi 0, %s24
    %s41 = sphi 0, %s25
    %s45 = sphi 0, %s45
    %s47 = sphi 0, %s45
    %s48 = sphi 0, %s47
    %s62 = sphi 0, %s48
    %s66 = sphi 0, %s66
    %s68 = sphi 0, %s66
    %s69 = sphi 0, %s68
    %s83 = sphi 0, %s69
    %s87 = sphi 0, %s87
    %s89 = sphi 0, %s87
    %s90 = sphi 0, %s89
    %s104 = sphi 0, %s90
    %s108 = sphi 0, %s108
    %s110 = sphi 0, %s108
    %s111 = sphi 0, %s110
    %s125 = sphi 0, %s111
    %s131 = sphi 0, %s133
    %s134 = sphi 0, %s131
    %s135 = sphi 0, %s134
    %s151 = sphi 0, %s135
  $region4: #{my_conv_net_forward.5} parent=0 // loop_header_branch
    %14 = sbr.rel (%p12) target = $region8
  $region5: #{my_conv_net_forward.5} parent=0 // loop_body
    %s16 = ssub.s32 %s11, 1
    %s17 = ssub.s32 %s11, 2
    %s18 = sadd.s32 %s11, 1
    %s19 = ssub.s32 %s11, %s18
    %p20 = scmp.eq.s32.totalorder %s19, 0
    %s22 = sadd.s32 %s21, 1
    %s23 = scalar_select %p20, %s21, %s22
    %p26 = pneg %p20
    %p27 = scmp.eq.s32.totalorder %s11, 1
    %p28 = por %p26, %p27
    %p29 = scmp.ne.s32.totalorder %s21, %s24
    %p30 = scmp.eq.s32.totalorder %s11, 0
    %p31 = por %p29, %p30
    %p32 = scmp.ne.s32.totalorder %s21, %s24
    %p33 = scmp.eq.s32.totalorder %s16, 1
    %p34 = por %p32, %p33
    %p35 = scmp.ne.s32.totalorder %s24, %s25
    %p36 = scmp.eq.s32.totalorder %s16, 0
    %p37 = por %p35, %p36
    %p38 = scmp.ne.s32.totalorder %s24, %s25
    %p39 = scmp.eq.s32.totalorder %s17, 1
    %p40 = por %p38, %p39
    %p42 = scmp.ne.s32.totalorder %s25, %s41
    %p43 = scmp.eq.s32.totalorder %s17, 0
    %p44 = por %p42, %p43
    %s46 = sadd.s32 %s45, 1
    %p49 = scmp.eq.s32.totalorder %s11, 1
    %p50 = scmp.ne.s32.totalorder %s45, %s47
    %p51 = scmp.eq.s32.totalorder %s11, 0
    %p52 = por %p50, %p51
    %p53 = scmp.ne.s32.totalorder %s45, %s47
    %p54 = scmp.eq.s32.totalorder %s16, 1
    %p55 = por %p53, %p54
    %p56 = scmp.ne.s32.totalorder %s47, %s48
    %p57 = scmp.eq.s32.totalorder %s16, 0
    %p58 = por %p56, %p57
    %p59 = scmp.ne.s32.totalorder %s47, %s48
    %p60 = scmp.eq.s32.totalorder %s17, 1
    %p61 = por %p59, %p60
    %p63 = scmp.ne.s32.totalorder %s48, %s62
    %p64 = scmp.eq.s32.totalorder %s17, 0
    %p65 = por %p63, %p64
    %s67 = sadd.s32 %s66, 1
    %p70 = scmp.eq.s32.totalorder %s11, 1
    %p71 = scmp.ne.s32.totalorder %s66, %s68
    %p72 = scmp.eq.s32.totalorder %s11, 0
    %p73 = por %p71, %p72
    %p74 = scmp.ne.s32.totalorder %s66, %s68
    %p75 = scmp.eq.s32.totalorder %s16, 1
    %p76 = por %p74, %p75
    %p77 = scmp.ne.s32.totalorder %s68, %s69
    %p78 = scmp.eq.s32.totalorder %s16, 0
    %p79 = por %p77, %p78
    %p80 = scmp.ne.s32.totalorder %s68, %s69
    %p81 = scmp.eq.s32.totalorder %s17, 1
    %p82 = por %p80, %p81
    %p84 = scmp.ne.s32.totalorder %s69, %s83
    %p85 = scmp.eq.s32.totalorder %s17, 0
    %p86 = por %p84, %p85
    %s88 = sadd.s32 %s87, 1
    %p91 = scmp.eq.s32.totalorder %s11, 1
    %p92 = scmp.ne.s32.totalorder %s87, %s89
    %p93 = scmp.eq.s32.totalorder %s11, 0
    %p94 = por %p92, %p93
    %p95 = scmp.ne.s32.totalorder %s87, %s89
    %p96 = scmp.eq.s32.totalorder %s16, 1
    %p97 = por %p95, %p96
    %p98 = scmp.ne.s32.totalorder %s89, %s90
    %p99 = scmp.eq.s32.totalorder %s16, 0
    %p100 = por %p98, %p99
    %p101 = scmp.ne.s32.totalorder %s89, %s90
    %p102 = scmp.eq.s32.totalorder %s17, 1
    %p103 = por %p101, %p102
    %p105 = scmp.ne.s32.totalorder %s90, %s104
    %p106 = scmp.eq.s32.totalorder %s17, 0
    %p107 = por %p105, %p106
    %s109 = sadd.s32 %s108, 1
    %p112 = scmp.eq.s32.totalorder %s11, 1
    %p113 = scmp.ne.s32.totalorder %s108, %s110
    %p114 = scmp.eq.s32.totalorder %s11, 0
    %p115 = por %p113, %p114
    %p116 = scmp.ne.s32.totalorder %s108, %s110
    %p117 = scmp.eq.s32.totalorder %s16, 1
    %p118 = por %p116, %p117
    %p119 = scmp.ne.s32.totalorder %s110, %s111
    %p120 = scmp.eq.s32.totalorder %s16, 0
    %p121 = por %p119, %p120
    %p122 = scmp.ne.s32.totalorder %s110, %s111
    %p123 = scmp.eq.s32.totalorder %s17, 1
    %p124 = por %p122, %p123
    %p126 = scmp.ne.s32.totalorder %s111, %s125
    %p127 = scmp.eq.s32.totalorder %s17, 0
    %p128 = por %p126, %p127
    %s129 = ssub.s32 %s11, %s18
    %p130 = scmp.eq.s32.totalorder %s129, 0
    %s132 = sadd.s32 %s131, 1
    %s133 = scalar_select %p130, %s131, %s132
    %p136 = pneg %p130
    %p137 = scmp.eq.s32.totalorder %s11, 1
    %p138 = por %p136, %p137
    %p139 = scmp.ne.s32.totalorder %s131, %s134
    %p140 = scmp.eq.s32.totalorder %s11, 0
    %p141 = por %p139, %p140
    %p142 = scmp.ne.s32.totalorder %s131, %s134
    %p143 = scmp.eq.s32.totalorder %s16, 1
    %p144 = por %p142, %p143
    %p145 = scmp.ne.s32.totalorder %s134, %s135
    %p146 = scmp.eq.s32.totalorder %s16, 0
    %p147 = por %p145, %p146
    %p148 = scmp.ne.s32.totalorder %s134, %s135
    %p149 = scmp.eq.s32.totalorder %s17, 1
    %p150 = por %p148, %p149
    %p152 = scmp.ne.s32.totalorder %s135, %s151
    %p153 = scmp.eq.s32.totalorder %s17, 0
    %p154 = por %p152, %p153
    %p155 = scmp.le.s32.totalorder 1, %s11
    %p156 = scmp.lt.s32.totalorder %s11, 3
    %p157 = pnand %p155, %p156
    %p158 = pneg %p157
    // Predicated region
    $region9: #{my_conv_net_forward.5} parent=5 // pred_check
      _
    $region10: #{my_conv_net_forward.5} parent=5 // pred_check_branch
      %160 = sbr.rel (%p157) target = $region12
    $region11: #{my_conv_net_forward.5} parent=5 // pred_region
      %s161 = ssub.s32 %s11, 1
      // Predicated region
      $region13: #{my_conv_net_forward.5} parent=11 // pred_check
        %p162 = pneg %p58
      $region14: #{my_conv_net_forward.5} parent=11 // pred_check_branch
        %164 = sbr.rel (%p162) target = $region16
      $region15: #{my_conv_net_forward.5} parent=11 // pred_region
        _
      $region16: #{my_conv_net_forward.5} parent=11 // pred_fallthru
        _
      // Predicated region
      $region17: #{my_conv_net_forward.5} parent=11 // pred_check
        %p165 = pneg %p79
      $region18: #{my_conv_net_forward.5} parent=11 // pred_check_branch
        %167 = sbr.rel (%p165) target = $region20
      $region19: #{my_conv_net_forward.5} parent=11 // pred_region
        _
      $region20: #{my_conv_net_forward.5} parent=11 // pred_fallthru
        _
      // Predicated region
      $region21: #{my_conv_net_forward.5} parent=11 // pred_check
        %p168 = pneg %p100
      $region22: #{my_conv_net_forward.5} parent=11 // pred_check_branch
        %170 = sbr.rel (%p168) target = $region24
      $region23: #{my_conv_net_forward.5} parent=11 // pred_region
        _
      $region24: #{my_conv_net_forward.5} parent=11 // pred_fallthru
        _
      // Predicated region
      $region25: #{my_conv_net_forward.5} parent=11 // pred_check
        %p171 = pneg %p121
      $region26: #{my_conv_net_forward.5} parent=11 // pred_check_branch
        %173 = sbr.rel (%p171) target = $region28
      $region27: #{my_conv_net_forward.5} parent=11 // pred_region
        _
      $region28: #{my_conv_net_forward.5} parent=11 // pred_fallthru
        _
    $region12: #{my_conv_net_forward.5} parent=5 // pred_fallthru
      _
    %p174 = scmp.lt.s32.totalorder %s11, 2
    // Predicated region
    $region29: #{my_conv_net_forward.5} parent=5 // pred_check
      %p175 = pneg %p174
    $region30: #{my_conv_net_forward.5} parent=5 // pred_check_branch
      %177 = sbr.rel (%p175) target = $region32
    $region31: #{my_conv_net_forward.5} parent=5 // pred_region
      // Predicated region
      $region33: #{my_conv_net_forward.5} parent=31 // pred_check
        %p178 = pneg %p31
      $region34: #{my_conv_net_forward.5} parent=31 // pred_check_branch
        %180 = sbr.rel (%p178) target = $region36
      $region35: #{my_conv_net_forward.5} parent=31 // pred_region
        %s181 = smul.u32 2, %s11
        %p182 = scmp.lt.s32.totalorder %s181, 3
        %s183 = scalar_select %p182, %s181, 3
        %s184 = smul.addr %s183, 16
        %s185 = smul.addr %s184, 4
        %s186 = scalar_lea.vmem %s0, %s185
        %s187 = smul.u32 2, %s11
      $region36: #{my_conv_net_forward.5} parent=31 // pred_fallthru
        _
    $region32: #{my_conv_net_forward.5} parent=5 // pred_fallthru
      _
    %p188 = scmp.le.s32.totalorder 1, %s11
    %p189 = scmp.lt.s32.totalorder %s11, 3
    %p190 = pnand %p188, %p189
    %p191 = pneg %p190
    // Predicated region
    $region37: #{my_conv_net_forward.5} parent=5 // pred_check
      _
    $region38: #{my_conv_net_forward.5} parent=5 // pred_check_branch
      %193 = sbr.rel (%p190) target = $region40
    $region39: #{my_conv_net_forward.5} parent=5 // pred_region
      %s194 = ssub.s32 %s11, 1
      %s195 = smul.u32 2, %s16
      %p196 = scmp.lt.s32.totalorder %s195, 3
      %s197 = scalar_select %p196, %s195, 3
      %s198 = smul.addr %s197, 16
      %s199 = smul.addr %s198, 4
      %s200 = scalar_lea.vmem %s0, %s199
      %p201 = pneg %p37
      %p202 = pneg %p34
      %p203 = pneg %p58
      %p204 = pneg %p55
      %p205 = pneg %p79
      %p206 = pneg %p76
      %p207 = pneg %p100
      %p208 = pneg %p97
      %p209 = pneg %p121
      %p210 = pneg %p118
      %p211 = pneg %p147
      %p212 = pneg %p144
      %s213 = smul.u32 2, %s16
      %p214 = scmp.lt.s32.totalorder %s213, 3
      %s215 = scalar_select %p214, %s213, 3
      %s216 = smul.addr %s215, 8
      %s217 = scalar_lea.vmem %s5, %s216
      %s218 = smul.u32 2, %s16
      %p219 = scmp.lt.s32.totalorder %s218, 3
      %s220 = scalar_select %p219, %s218, 3
      %s221 = smul.addr %s220, 16
      %s222 = smul.addr %s221, 4
      %s223 = scalar_lea.vmem %s0, %s222
      %s224 = smul.u32 2, %s16
      %s225 = smul.u32 2, %s16
      %p226 = scmp.lt.s32.totalorder %s225, 3
      %s227 = scalar_select %p226, %s225, 3
      %s228 = smul.addr %s227, 8
      %s229 = scalar_lea.vmem %s5, %s228
      %s230 = smul.u32 2, %s16
      %v232 = vld [vmem:[%s223] sm:$0xff]
      %v233 = vld [vmem:[%s223 + $0x8] sm:$0xff]
      %v234 = vld [vmem:[%s223 + $0x10] sm:$0xff]
      %v235 = vld [vmem:[%s223 + $0x18] sm:$0xff]
      %v236 = vld [vmem:[%s223 + $0x20] sm:$0xff]
      %v237 = vld [vmem:[%s223 + $0x28] sm:$0xff]
      %v238 = vld [vmem:[%s223 + $0x30] sm:$0xff]
      %v239 = vld [vmem:[%s223 + $0x38] sm:$0xff]
      %v240 = vld [vmem:[%s223 + $0x40] sm:$0xff]
      %v241 = vld [vmem:[%s223 + $0x48] sm:$0xff]
      %v242 = vld [vmem:[%s223 + $0x50] sm:$0xff]
      %v243 = vld [vmem:[%s223 + $0x58] sm:$0xff]
      %v244 = vld [vmem:[%s223 + $0x60] sm:$0xff]
      %v245 = vld [vmem:[%s223 + $0x68] sm:$0xff]
      %v246 = vld [vmem:[%s223 + $0x70] sm:$0xff]
      %v247 = vld [vmem:[%s223 + $0x78] sm:$0xff]
      %v248 = vld [vmem:[%s1] sm:$0xff]
      %v249 = vld [vmem:[%s1 + $0x8] sm:$0xff]
      %v250 = vld [vmem:[%s1 + $0x10] sm:$0xff]
      %v251 = vld [vmem:[%s1 + $0x18] sm:$0xff]
      %v252 = vld [vmem:[%s1 + $0x20] sm:$0xff]
      %v253 = vld [vmem:[%s1 + $0x28] sm:$0xff]
      %v254 = vld [vmem:[%s1 + $0x30] sm:$0xff]
      %v255 = vld [vmem:[%s1 + $0x38] sm:$0xff]
      %v256 = vld [vmem:[%s1 + $0x40] sm:$0xff]
      %v257 = vld [vmem:[%s1 + $0x48] sm:$0xff]
      %v258 = vld [vmem:[%s1 + $0x50] sm:$0xff]
      %v259 = vld [vmem:[%s1 + $0x58] sm:$0xff]
      %v260 = vld [vmem:[%s1 + $0x60] sm:$0xff]
      %v261 = vld [vmem:[%s1 + $0x68] sm:$0xff]
      %v262 = vld [vmem:[%s1 + $0x70] sm:$0xff]
      %v263 = vld [vmem:[%s1 + $0x78] sm:$0xff]
      %v264 = vld [vmem:[%s1 + $0x80] sm:$0xff]
      %v265 = vld [vmem:[%s1 + $0x88] sm:$0xff]
      %v266 = vld [vmem:[%s1 + $0x90] sm:$0xff]
      %v267 = vld [vmem:[%s1 + $0x98] sm:$0xff]
      %v268 = vld [vmem:[%s1 + $0xa0] sm:$0xff]
      %v269 = vld [vmem:[%s1 + $0xa8] sm:$0xff]
      %v270 = vld [vmem:[%s1 + $0xb0] sm:$0xff]
      %v271 = vld [vmem:[%s1 + $0xb8] sm:$0xff]
      %v272 = vld [vmem:[%s1 + $0xc0] sm:$0xff]
      %v273 = vld [vmem:[%s1 + $0xc8] sm:$0xff]
      %v274 = vld [vmem:[%s1 + $0xd0] sm:$0xff]
      %v275 = vld [vmem:[%s1 + $0xd8] sm:$0xff]
      %v276 = vld [vmem:[%s1 + $0xe0] sm:$0xff]
      %v277 = vld [vmem:[%s1 + $0xe8] sm:$0xff]
      %v278 = vld [vmem:[%s1 + $0xf0] sm:$0xff]
      %v279 = vld [vmem:[%s1 + $0xf8] sm:$0xff]
      %v280 = vld [vmem:[%s1 + $0x100] sm:$0xff]
      %v281 = vld [vmem:[%s1 + $0x108] sm:$0xff]
      %v282 = vld [vmem:[%s1 + $0x110] sm:$0xff]
      %v283 = vld [vmem:[%s1 + $0x118] sm:$0xff]
      %v284 = vld [vmem:[%s1 + $0x120] sm:$0xff]
      %v285 = vld [vmem:[%s1 + $0x128] sm:$0xff]
      %v286 = vld [vmem:[%s1 + $0x130] sm:$0xff]
      %v287 = vld [vmem:[%s1 + $0x138] sm:$0xff]
      %v288 = vld [vmem:[%s1 + $0x140] sm:$0xff]
      %v289 = vld [vmem:[%s1 + $0x148] sm:$0xff]
      %v290 = vld [vmem:[%s1 + $0x150] sm:$0xff]
      %v291 = vld [vmem:[%s1 + $0x158] sm:$0xff]
      %v292 = vld [vmem:[%s1 + $0x160] sm:$0xff]
      %v293 = vld [vmem:[%s1 + $0x168] sm:$0xff]
      %v294 = vld [vmem:[%s1 + $0x170] sm:$0xff]
      %v295 = vld [vmem:[%s1 + $0x178] sm:$0xff]
      %v296 = vld [vmem:[%s1 + $0x180] sm:$0xff]
      %v297 = vld [vmem:[%s1 + $0x188] sm:$0xff]
      %v298 = vld [vmem:[%s1 + $0x190] sm:$0xff]
      %v299 = vld [vmem:[%s1 + $0x198] sm:$0xff]
      %v300 = vld [vmem:[%s1 + $0x1a0] sm:$0xff]
      %v301 = vld [vmem:[%s1 + $0x1a8] sm:$0xff]
      %v302 = vld [vmem:[%s1 + $0x1b0] sm:$0xff]
      %v303 = vld [vmem:[%s1 + $0x1b8] sm:$0xff]
      %v304 = vld [vmem:[%s1 + $0x1c0] sm:$0xff]
      %v305 = vld [vmem:[%s1 + $0x1c8] sm:$0xff]
      %v306 = vld [vmem:[%s1 + $0x1d0] sm:$0xff]
      %v307 = vld [vmem:[%s1 + $0x1d8] sm:$0xff]
      %v308 = vld [vmem:[%s1 + $0x1e0] sm:$0xff]
      %v309 = vld [vmem:[%s1 + $0x1e8] sm:$0xff]
      %v310 = vld [vmem:[%s1 + $0x1f0] sm:$0xff]
      %v311 = vld [vmem:[%s1 + $0x1f8] sm:$0xff]
      %v312 = vld [vmem:[%s1 + $0x200] sm:$0xff]
      %v313 = vld [vmem:[%s1 + $0x208] sm:$0xff]
      %v314 = vld [vmem:[%s1 + $0x210] sm:$0xff]
      %v315 = vld [vmem:[%s1 + $0x218] sm:$0xff]
      %v316 = vld [vmem:[%s1 + $0x220] sm:$0xff]
      %v317 = vld [vmem:[%s1 + $0x228] sm:$0xff]
      %v318 = vld [vmem:[%s1 + $0x230] sm:$0xff]
      %v319 = vld [vmem:[%s1 + $0x238] sm:$0xff]
      %v320 = vld [vmem:[%s1 + $0x240] sm:$0xff]
      %v321 = vld [vmem:[%s1 + $0x248] sm:$0xff]
      %v322 = vld [vmem:[%s1 + $0x250] sm:$0xff]
      %v323 = vld [vmem:[%s1 + $0x258] sm:$0xff]
      %v324 = vld [vmem:[%s1 + $0x260] sm:$0xff]
      %v325 = vld [vmem:[%s1 + $0x268] sm:$0xff]
      %v326 = vld [vmem:[%s1 + $0x270] sm:$0xff]
      %v327 = vld [vmem:[%s1 + $0x278] sm:$0xff]
      %v328 = vld [vmem:[%s1 + $0x280] sm:$0xff]
      %v329 = vld [vmem:[%s1 + $0x288] sm:$0xff]
      %v330 = vld [vmem:[%s1 + $0x290] sm:$0xff]
      %v331 = vld [vmem:[%s1 + $0x298] sm:$0xff]
      %v332 = vld [vmem:[%s1 + $0x2a0] sm:$0xff]
      %v333 = vld [vmem:[%s1 + $0x2a8] sm:$0xff]
      %v334 = vld [vmem:[%s1 + $0x2b0] sm:$0xff]
      %v335 = vld [vmem:[%s1 + $0x2b8] sm:$0xff]
      %v336 = vld [vmem:[%s1 + $0x2c0] sm:$0xff]
      %v337 = vld [vmem:[%s1 + $0x2c8] sm:$0xff]
      %v338 = vld [vmem:[%s1 + $0x2d0] sm:$0xff]
      %v339 = vld [vmem:[%s1 + $0x2d8] sm:$0xff]
      %v340 = vld [vmem:[%s1 + $0x2e0] sm:$0xff]
      %v341 = vld [vmem:[%s1 + $0x2e8] sm:$0xff]
      %v342 = vld [vmem:[%s1 + $0x2f0] sm:$0xff]
      %v343 = vld [vmem:[%s1 + $0x2f8] sm:$0xff]
      %v344 = vld [vmem:[%s1 + $0x300] sm:$0xff]
      %v345 = vld [vmem:[%s1 + $0x308] sm:$0xff]
      %v346 = vld [vmem:[%s1 + $0x310] sm:$0xff]
      %v347 = vld [vmem:[%s1 + $0x318] sm:$0xff]
      %v348 = vld [vmem:[%s1 + $0x320] sm:$0xff]
      %v349 = vld [vmem:[%s1 + $0x328] sm:$0xff]
      %v350 = vld [vmem:[%s1 + $0x330] sm:$0xff]
      %v351 = vld [vmem:[%s1 + $0x338] sm:$0xff]
      %v352 = vld [vmem:[%s1 + $0x340] sm:$0xff]
      %v353 = vld [vmem:[%s1 + $0x348] sm:$0xff]
      %v354 = vld [vmem:[%s1 + $0x350] sm:$0xff]
      %v355 = vld [vmem:[%s1 + $0x358] sm:$0xff]
      %v356 = vld [vmem:[%s1 + $0x360] sm:$0xff]
      %v357 = vld [vmem:[%s1 + $0x368] sm:$0xff]
      %v358 = vld [vmem:[%s1 + $0x370] sm:$0xff]
      %v359 = vld [vmem:[%s1 + $0x378] sm:$0xff]
      %v360 = vld [vmem:[%s1 + $0x380] sm:$0xff]
      %v361 = vld [vmem:[%s1 + $0x388] sm:$0xff]
      %v362 = vld [vmem:[%s1 + $0x390] sm:$0xff]
      %v363 = vld [vmem:[%s1 + $0x398] sm:$0xff]
      %v364 = vld [vmem:[%s1 + $0x3a0] sm:$0xff]
      %v365 = vld [vmem:[%s1 + $0x3a8] sm:$0xff]
      %v366 = vld [vmem:[%s1 + $0x3b0] sm:$0xff]
      %v367 = vld [vmem:[%s1 + $0x3b8] sm:$0xff]
      %v368 = vld [vmem:[%s1 + $0x3c0] sm:$0xff]
      %v369 = vld [vmem:[%s1 + $0x3c8] sm:$0xff]
      %v370 = vld [vmem:[%s1 + $0x3d0] sm:$0xff]
      %v371 = vld [vmem:[%s1 + $0x3d8] sm:$0xff]
      %v372 = vld [vmem:[%s1 + $0x3e0] sm:$0xff]
      %v373 = vld [vmem:[%s1 + $0x3e8] sm:$0xff]
      %v374 = vld [vmem:[%s1 + $0x3f0] sm:$0xff]
      %v375 = vld [vmem:[%s1 + $0x3f8] sm:$0xff]
      %v376 = vld [vmem:[%s1 + $0x400] sm:$0xff]
      %v377 = vld [vmem:[%s1 + $0x408] sm:$0xff]
      %v378 = vld [vmem:[%s1 + $0x410] sm:$0xff]
      %v379 = vld [vmem:[%s1 + $0x418] sm:$0xff]
      %v380 = vld [vmem:[%s1 + $0x420] sm:$0xff]
      %v381 = vld [vmem:[%s1 + $0x428] sm:$0xff]
      %v382 = vld [vmem:[%s1 + $0x430] sm:$0xff]
      %v383 = vld [vmem:[%s1 + $0x438] sm:$0xff]
      %v384 = vld [vmem:[%s1 + $0x440] sm:$0xff]
      %v385 = vld [vmem:[%s1 + $0x448] sm:$0xff]
      %v386 = vld [vmem:[%s1 + $0x450] sm:$0xff]
      %v387 = vld [vmem:[%s1 + $0x458] sm:$0xff]
      %v388 = vld [vmem:[%s1 + $0x460] sm:$0xff]
      %v389 = vld [vmem:[%s1 + $0x468] sm:$0xff]
      %v390 = vld [vmem:[%s1 + $0x470] sm:$0xff]
      %v391 = vld [vmem:[%s1 + $0x478] sm:$0xff]
      %v392 = vld [vmem:[%s1 + $0x480] sm:$0xff]
      %v393 = vld [vmem:[%s1 + $0x488] sm:$0xff]
      %v394 = vld [vmem:[%s1 + $0x490] sm:$0xff]
      %v395 = vld [vmem:[%s1 + $0x498] sm:$0xff]
      %v396 = vld [vmem:[%s1 + $0x4a0] sm:$0xff]
      %v397 = vld [vmem:[%s1 + $0x4a8] sm:$0xff]
      %v398 = vld [vmem:[%s1 + $0x4b0] sm:$0xff]
      %v399 = vld [vmem:[%s1 + $0x4b8] sm:$0xff]
      %v400 = vld [vmem:[%s1 + $0x4c0] sm:$0xff]
      %v401 = vld [vmem:[%s1 + $0x4c8] sm:$0xff]
      %v402 = vld [vmem:[%s1 + $0x4d0] sm:$0xff]
      %v403 = vld [vmem:[%s1 + $0x4d8] sm:$0xff]
      %v404 = vld [vmem:[%s1 + $0x4e0] sm:$0xff]
      %v405 = vld [vmem:[%s1 + $0x4e8] sm:$0xff]
      %v406 = vld [vmem:[%s1 + $0x4f0] sm:$0xff]
      %v407 = vld [vmem:[%s1 + $0x4f8] sm:$0xff]
      %v408 = vld [vmem:[%s1 + $0x500] sm:$0xff]
      %v409 = vld [vmem:[%s1 + $0x508] sm:$0xff]
      %v410 = vld [vmem:[%s1 + $0x510] sm:$0xff]
      %v411 = vld [vmem:[%s1 + $0x518] sm:$0xff]
      %v412 = vld [vmem:[%s1 + $0x520] sm:$0xff]
      %v413 = vld [vmem:[%s1 + $0x528] sm:$0xff]
      %v414 = vld [vmem:[%s1 + $0x530] sm:$0xff]
      %v415 = vld [vmem:[%s1 + $0x538] sm:$0xff]
      %v416 = vld [vmem:[%s1 + $0x540] sm:$0xff]
      %v417 = vld [vmem:[%s1 + $0x548] sm:$0xff]
      %v418 = vld [vmem:[%s1 + $0x550] sm:$0xff]
      %v419 = vld [vmem:[%s1 + $0x558] sm:$0xff]
      %v420 = vld [vmem:[%s1 + $0x560] sm:$0xff]
      %v421 = vld [vmem:[%s1 + $0x568] sm:$0xff]
      %v422 = vld [vmem:[%s1 + $0x570] sm:$0xff]
      %v423 = vld [vmem:[%s1 + $0x578] sm:$0xff]
      %v424 = vld [vmem:[%s1 + $0x580] sm:$0xff]
      %v425 = vld [vmem:[%s1 + $0x588] sm:$0xff]
      %v426 = vld [vmem:[%s1 + $0x590] sm:$0xff]
      %v427 = vld [vmem:[%s1 + $0x598] sm:$0xff]
      %v428 = vld [vmem:[%s1 + $0x5a0] sm:$0xff]
      %v429 = vld [vmem:[%s1 + $0x5a8] sm:$0xff]
      %v430 = vld [vmem:[%s1 + $0x5b0] sm:$0xff]
      %v431 = vld [vmem:[%s1 + $0x5b8] sm:$0xff]
      %v432 = vld [vmem:[%s1 + $0x5c0] sm:$0xff]
      %v433 = vld [vmem:[%s1 + $0x5c8] sm:$0xff]
      %v434 = vld [vmem:[%s1 + $0x5d0] sm:$0xff]
      %v435 = vld [vmem:[%s1 + $0x5d8] sm:$0xff]
      %v436 = vld [vmem:[%s1 + $0x5e0] sm:$0xff]
      %v437 = vld [vmem:[%s1 + $0x5e8] sm:$0xff]
      %v438 = vld [vmem:[%s1 + $0x5f0] sm:$0xff]
      %v439 = vld [vmem:[%s1 + $0x5f8] sm:$0xff]
      %v440 = vld [vmem:[%s1 + $0x600] sm:$0xff]
      %v441 = vld [vmem:[%s1 + $0x608] sm:$0xff]
      %v442 = vld [vmem:[%s1 + $0x610] sm:$0xff]
      %v443 = vld [vmem:[%s1 + $0x618] sm:$0xff]
      %v444 = vld [vmem:[%s1 + $0x620] sm:$0xff]
      %v445 = vld [vmem:[%s1 + $0x628] sm:$0xff]
      %v446 = vld [vmem:[%s1 + $0x630] sm:$0xff]
      %v447 = vld [vmem:[%s1 + $0x638] sm:$0xff]
      %v448 = vld [vmem:[%s1 + $0x640] sm:$0xff]
      %v449 = vld [vmem:[%s1 + $0x648] sm:$0xff]
      %v450 = vld [vmem:[%s1 + $0x650] sm:$0xff]
      %v451 = vld [vmem:[%s1 + $0x658] sm:$0xff]
      %v452 = vld [vmem:[%s1 + $0x660] sm:$0xff]
      %v453 = vld [vmem:[%s1 + $0x668] sm:$0xff]
      %v454 = vld [vmem:[%s1 + $0x670] sm:$0xff]
      %v455 = vld [vmem:[%s1 + $0x678] sm:$0xff]
      %v456 = vld [vmem:[%s1 + $0x680] sm:$0xff]
      %v457 = vld [vmem:[%s1 + $0x688] sm:$0xff]
      %v458 = vld [vmem:[%s1 + $0x690] sm:$0xff]
      %v459 = vld [vmem:[%s1 + $0x698] sm:$0xff]
      %v460 = vld [vmem:[%s1 + $0x6a0] sm:$0xff]
      %v461 = vld [vmem:[%s1 + $0x6a8] sm:$0xff]
      %v462 = vld [vmem:[%s1 + $0x6b0] sm:$0xff]
      %v463 = vld [vmem:[%s1 + $0x6b8] sm:$0xff]
      %v464 = vld [vmem:[%s1 + $0x6c0] sm:$0xff]
      %v465 = vld [vmem:[%s1 + $0x6c8] sm:$0xff]
      %v466 = vld [vmem:[%s1 + $0x6d0] sm:$0xff]
      %v467 = vld [vmem:[%s1 + $0x6d8] sm:$0xff]
      %v468 = vld [vmem:[%s1 + $0x6e0] sm:$0xff]
      %v469 = vld [vmem:[%s1 + $0x6e8] sm:$0xff]
      %v470 = vld [vmem:[%s1 + $0x6f0] sm:$0xff]
      %v471 = vld [vmem:[%s1 + $0x6f8] sm:$0xff]
      %v472 = vld [vmem:[%s1 + $0x700] sm:$0xff]
      %v473 = vld [vmem:[%s1 + $0x708] sm:$0xff]
      %v474 = vld [vmem:[%s1 + $0x710] sm:$0xff]
      %v475 = vld [vmem:[%s1 + $0x718] sm:$0xff]
      %v476 = vld [vmem:[%s1 + $0x720] sm:$0xff]
      %v477 = vld [vmem:[%s1 + $0x728] sm:$0xff]
      %v478 = vld [vmem:[%s1 + $0x730] sm:$0xff]
      %v479 = vld [vmem:[%s1 + $0x738] sm:$0xff]
      %v480 = vld [vmem:[%s1 + $0x740] sm:$0xff]
      %v481 = vld [vmem:[%s1 + $0x748] sm:$0xff]
      %v482 = vld [vmem:[%s1 + $0x750] sm:$0xff]
      %v483 = vld [vmem:[%s1 + $0x758] sm:$0xff]
      %v484 = vld [vmem:[%s1 + $0x760] sm:$0xff]
      %v485 = vld [vmem:[%s1 + $0x768] sm:$0xff]
      %v486 = vld [vmem:[%s1 + $0x770] sm:$0xff]
      %v487 = vld [vmem:[%s1 + $0x778] sm:$0xff]
      %v488 = vld [vmem:[%s1 + $0x780] sm:$0xff]
      %v489 = vld [vmem:[%s1 + $0x788] sm:$0xff]
      %v490 = vld [vmem:[%s1 + $0x790] sm:$0xff]
      %v491 = vld [vmem:[%s1 + $0x798] sm:$0xff]
      %v492 = vld [vmem:[%s1 + $0x7a0] sm:$0xff]
      %v493 = vld [vmem:[%s1 + $0x7a8] sm:$0xff]
      %v494 = vld [vmem:[%s1 + $0x7b0] sm:$0xff]
      %v495 = vld [vmem:[%s1 + $0x7b8] sm:$0xff]
      %v496 = vld [vmem:[%s1 + $0x7c0] sm:$0xff]
      %v497 = vld [vmem:[%s1 + $0x7c8] sm:$0xff]
      %v498 = vld [vmem:[%s1 + $0x7d0] sm:$0xff]
      %v499 = vld [vmem:[%s1 + $0x7d8] sm:$0xff]
      %v500 = vld [vmem:[%s1 + $0x7e0] sm:$0xff]
      %v501 = vld [vmem:[%s1 + $0x7e8] sm:$0xff]
      %v502 = vld [vmem:[%s1 + $0x7f0] sm:$0xff]
      %v503 = vld [vmem:[%s1 + $0x7f8] sm:$0xff]
      %v504 = vld [vmem:[%s1 + $0x800] sm:$0xff]
      %v505 = vld [vmem:[%s1 + $0x808] sm:$0xff]
      %v506 = vld [vmem:[%s1 + $0x810] sm:$0xff]
      %v507 = vld [vmem:[%s1 + $0x818] sm:$0xff]
      %v508 = vld [vmem:[%s1 + $0x820] sm:$0xff]
      %v509 = vld [vmem:[%s1 + $0x828] sm:$0xff]
      %v510 = vld [vmem:[%s1 + $0x830] sm:$0xff]
      %v511 = vld [vmem:[%s1 + $0x838] sm:$0xff]
      %v512 = vld [vmem:[%s1 + $0x840] sm:$0xff]
      %v513 = vld [vmem:[%s1 + $0x848] sm:$0xff]
      %v514 = vld [vmem:[%s1 + $0x850] sm:$0xff]
      %v515 = vld [vmem:[%s1 + $0x858] sm:$0xff]
      %v516 = vld [vmem:[%s1 + $0x860] sm:$0xff]
      %v517 = vld [vmem:[%s1 + $0x868] sm:$0xff]
      %v518 = vld [vmem:[%s1 + $0x870] sm:$0xff]
      %v519 = vld [vmem:[%s1 + $0x878] sm:$0xff]
      %v520 = vld [vmem:[%s1 + $0x880] sm:$0xff]
      %v521 = vld [vmem:[%s1 + $0x888] sm:$0xff]
      %v522 = vld [vmem:[%s1 + $0x890] sm:$0xff]
      %v523 = vld [vmem:[%s1 + $0x898] sm:$0xff]
      %v524 = vld [vmem:[%s1 + $0x8a0] sm:$0xff]
      %v525 = vld [vmem:[%s1 + $0x8a8] sm:$0xff]
      %v526 = vld [vmem:[%s1 + $0x8b0] sm:$0xff]
      %v527 = vld [vmem:[%s1 + $0x8b8] sm:$0xff]
      %v528 = vld [vmem:[%s1 + $0x8c0] sm:$0xff]
      %v529 = vld [vmem:[%s1 + $0x8c8] sm:$0xff]
      %v530 = vld [vmem:[%s1 + $0x8d0] sm:$0xff]
      %v531 = vld [vmem:[%s1 + $0x8d8] sm:$0xff]
      %v532 = vld [vmem:[%s1 + $0x8e0] sm:$0xff]
      %v533 = vld [vmem:[%s1 + $0x8e8] sm:$0xff]
      %v534 = vld [vmem:[%s1 + $0x8f0] sm:$0xff]
      %v535 = vld [vmem:[%s1 + $0x8f8] sm:$0xff]
      %v536 = vld [vmem:[%s1 + $0x900] sm:$0xff]
      %v537 = vld [vmem:[%s1 + $0x908] sm:$0xff]
      %v538 = vld [vmem:[%s1 + $0x910] sm:$0xff]
      %v539 = vld [vmem:[%s1 + $0x918] sm:$0xff]
      %v540 = vld [vmem:[%s1 + $0x920] sm:$0xff]
      %v541 = vld [vmem:[%s1 + $0x928] sm:$0xff]
      %v542 = vld [vmem:[%s1 + $0x930] sm:$0xff]
      %v543 = vld [vmem:[%s1 + $0x938] sm:$0xff]
      %v544 = vld [vmem:[%s1 + $0x940] sm:$0xff]
      %v545 = vld [vmem:[%s1 + $0x948] sm:$0xff]
      %v546 = vld [vmem:[%s1 + $0x950] sm:$0xff]
      %v547 = vld [vmem:[%s1 + $0x958] sm:$0xff]
      %v548 = vld [vmem:[%s1 + $0x960] sm:$0xff]
      %v549 = vld [vmem:[%s1 + $0x968] sm:$0xff]
      %v550 = vld [vmem:[%s1 + $0x970] sm:$0xff]
      %v551 = vld [vmem:[%s1 + $0x978] sm:$0xff]
      %v552 = vld [vmem:[%s1 + $0x980] sm:$0xff]
      %v553 = vld [vmem:[%s1 + $0x988] sm:$0xff]
      %v554 = vld [vmem:[%s1 + $0x990] sm:$0xff]
      %v555 = vld [vmem:[%s1 + $0x998] sm:$0xff]
      %v556 = vld [vmem:[%s1 + $0x9a0] sm:$0xff]
      %v557 = vld [vmem:[%s1 + $0x9a8] sm:$0xff]
      %v558 = vld [vmem:[%s1 + $0x9b0] sm:$0xff]
      %v559 = vld [vmem:[%s1 + $0x9b8] sm:$0xff]
      %v560 = vld [vmem:[%s1 + $0x9c0] sm:$0xff]
      %v561 = vld [vmem:[%s1 + $0x9c8] sm:$0xff]
      %v562 = vld [vmem:[%s1 + $0x9d0] sm:$0xff]
      %v563 = vld [vmem:[%s1 + $0x9d8] sm:$0xff]
      %v564 = vld [vmem:[%s1 + $0x9e0] sm:$0xff]
      %v565 = vld [vmem:[%s1 + $0x9e8] sm:$0xff]
      %v566 = vld [vmem:[%s1 + $0x9f0] sm:$0xff]
      %v567 = vld [vmem:[%s1 + $0x9f8] sm:$0xff]
      %v568 = vld [vmem:[%s1 + $0xa00] sm:$0xff]
      %v569 = vld [vmem:[%s1 + $0xa08] sm:$0xff]
      %v570 = vld [vmem:[%s1 + $0xa10] sm:$0xff]
      %v571 = vld [vmem:[%s1 + $0xa18] sm:$0xff]
      %v572 = vld [vmem:[%s1 + $0xa20] sm:$0xff]
      %v573 = vld [vmem:[%s1 + $0xa28] sm:$0xff]
      %v574 = vld [vmem:[%s1 + $0xa30] sm:$0xff]
      %v575 = vld [vmem:[%s1 + $0xa38] sm:$0xff]
      %v576 = vld [vmem:[%s1 + $0xa40] sm:$0xff]
      %v577 = vld [vmem:[%s1 + $0xa48] sm:$0xff]
      %v578 = vld [vmem:[%s1 + $0xa50] sm:$0xff]
      %v579 = vld [vmem:[%s1 + $0xa58] sm:$0xff]
      %v580 = vld [vmem:[%s1 + $0xa60] sm:$0xff]
      %v581 = vld [vmem:[%s1 + $0xa68] sm:$0xff]
      %v582 = vld [vmem:[%s1 + $0xa70] sm:$0xff]
      %v583 = vld [vmem:[%s1 + $0xa78] sm:$0xff]
      %v584 = vld [vmem:[%s1 + $0xa80] sm:$0xff]
      %v585 = vld [vmem:[%s1 + $0xa88] sm:$0xff]
      %v586 = vld [vmem:[%s1 + $0xa90] sm:$0xff]
      %v587 = vld [vmem:[%s1 + $0xa98] sm:$0xff]
      %v588 = vld [vmem:[%s1 + $0xaa0] sm:$0xff]
      %v589 = vld [vmem:[%s1 + $0xaa8] sm:$0xff]
      %v590 = vld [vmem:[%s1 + $0xab0] sm:$0xff]
      %v591 = vld [vmem:[%s1 + $0xab8] sm:$0xff]
      %v592 = vld [vmem:[%s1 + $0xac0] sm:$0xff]
      %v593 = vld [vmem:[%s1 + $0xac8] sm:$0xff]
      %v594 = vld [vmem:[%s1 + $0xad0] sm:$0xff]
      %v595 = vld [vmem:[%s1 + $0xad8] sm:$0xff]
      %v596 = vld [vmem:[%s1 + $0xae0] sm:$0xff]
      %v597 = vld [vmem:[%s1 + $0xae8] sm:$0xff]
      %v598 = vld [vmem:[%s1 + $0xaf0] sm:$0xff]
      %v599 = vld [vmem:[%s1 + $0xaf8] sm:$0xff]
      %v600 = vld [vmem:[%s1 + $0xb00] sm:$0xff]
      %v601 = vld [vmem:[%s1 + $0xb08] sm:$0xff]
      %v602 = vld [vmem:[%s1 + $0xb10] sm:$0xff]
      %v603 = vld [vmem:[%s1 + $0xb18] sm:$0xff]
      %v604 = vld [vmem:[%s1 + $0xb20] sm:$0xff]
      %v605 = vld [vmem:[%s1 + $0xb28] sm:$0xff]
      %v606 = vld [vmem:[%s1 + $0xb30] sm:$0xff]
      %v607 = vld [vmem:[%s1 + $0xb38] sm:$0xff]
      %v608 = vld [vmem:[%s1 + $0xb40] sm:$0xff]
      %v609 = vld [vmem:[%s1 + $0xb48] sm:$0xff]
      %v610 = vld [vmem:[%s1 + $0xb50] sm:$0xff]
      %v611 = vld [vmem:[%s1 + $0xb58] sm:$0xff]
      %v612 = vld [vmem:[%s1 + $0xb60] sm:$0xff]
      %v613 = vld [vmem:[%s1 + $0xb68] sm:$0xff]
      %v614 = vld [vmem:[%s1 + $0xb70] sm:$0xff]
      %v615 = vld [vmem:[%s1 + $0xb78] sm:$0xff]
      %v616 = vld [vmem:[%s1 + $0xb80] sm:$0xff]
      %v617 = vld [vmem:[%s1 + $0xb88] sm:$0xff]
      %v618 = vld [vmem:[%s1 + $0xb90] sm:$0xff]
      %v619 = vld [vmem:[%s1 + $0xb98] sm:$0xff]
      %v620 = vld [vmem:[%s1 + $0xba0] sm:$0xff]
      %v621 = vld [vmem:[%s1 + $0xba8] sm:$0xff]
      %v622 = vld [vmem:[%s1 + $0xbb0] sm:$0xff]
      %v623 = vld [vmem:[%s1 + $0xbb8] sm:$0xff]
      %v624 = vld [vmem:[%s1 + $0xbc0] sm:$0xff]
      %v625 = vld [vmem:[%s1 + $0xbc8] sm:$0xff]
      %v626 = vld [vmem:[%s1 + $0xbd0] sm:$0xff]
      %v627 = vld [vmem:[%s1 + $0xbd8] sm:$0xff]
      %v628 = vld [vmem:[%s1 + $0xbe0] sm:$0xff]
      %v629 = vld [vmem:[%s1 + $0xbe8] sm:$0xff]
      %v630 = vld [vmem:[%s1 + $0xbf0] sm:$0xff]
      %v631 = vld [vmem:[%s1 + $0xbf8] sm:$0xff]
      %v632 = vld [vmem:[%s1 + $0xc00] sm:$0xff]
      %v633 = vld [vmem:[%s1 + $0xc08] sm:$0xff]
      %v634 = vld [vmem:[%s1 + $0xc10] sm:$0xff]
      %v635 = vld [vmem:[%s1 + $0xc18] sm:$0xff]
      %v636 = vld [vmem:[%s1 + $0xc20] sm:$0xff]
      %v637 = vld [vmem:[%s1 + $0xc28] sm:$0xff]
      %v638 = vld [vmem:[%s1 + $0xc30] sm:$0xff]
      %v639 = vld [vmem:[%s1 + $0xc38] sm:$0xff]
      %v640 = vld [vmem:[%s1 + $0xc40] sm:$0xff]
      %v641 = vld [vmem:[%s1 + $0xc48] sm:$0xff]
      %v642 = vld [vmem:[%s1 + $0xc50] sm:$0xff]
      %v643 = vld [vmem:[%s1 + $0xc58] sm:$0xff]
      %v644 = vld [vmem:[%s1 + $0xc60] sm:$0xff]
      %v645 = vld [vmem:[%s1 + $0xc68] sm:$0xff]
      %v646 = vld [vmem:[%s1 + $0xc70] sm:$0xff]
      %v647 = vld [vmem:[%s1 + $0xc78] sm:$0xff]
      %v648 = vld [vmem:[%s1 + $0xc80] sm:$0xff]
      %v649 = vld [vmem:[%s1 + $0xc88] sm:$0xff]
      %v650 = vld [vmem:[%s1 + $0xc90] sm:$0xff]
      %v651 = vld [vmem:[%s1 + $0xc98] sm:$0xff]
      %v652 = vld [vmem:[%s1 + $0xca0] sm:$0xff]
      %v653 = vld [vmem:[%s1 + $0xca8] sm:$0xff]
      %v654 = vld [vmem:[%s1 + $0xcb0] sm:$0xff]
      %v655 = vld [vmem:[%s1 + $0xcb8] sm:$0xff]
      %v656 = vld [vmem:[%s1 + $0xcc0] sm:$0xff]
      %v657 = vld [vmem:[%s1 + $0xcc8] sm:$0xff]
      %v658 = vld [vmem:[%s1 + $0xcd0] sm:$0xff]
      %v659 = vld [vmem:[%s1 + $0xcd8] sm:$0xff]
      %v660 = vld [vmem:[%s1 + $0xce0] sm:$0xff]
      %v661 = vld [vmem:[%s1 + $0xce8] sm:$0xff]
      %v662 = vld [vmem:[%s1 + $0xcf0] sm:$0xff]
      %v663 = vld [vmem:[%s1 + $0xcf8] sm:$0xff]
      %v664 = vld [vmem:[%s1 + $0xd00] sm:$0xff]
      %v665 = vld [vmem:[%s1 + $0xd08] sm:$0xff]
      %v666 = vld [vmem:[%s1 + $0xd10] sm:$0xff]
      %v667 = vld [vmem:[%s1 + $0xd18] sm:$0xff]
      %v668 = vld [vmem:[%s1 + $0xd20] sm:$0xff]
      %v669 = vld [vmem:[%s1 + $0xd28] sm:$0xff]
      %v670 = vld [vmem:[%s1 + $0xd30] sm:$0xff]
      %v671 = vld [vmem:[%s1 + $0xd38] sm:$0xff]
      %v672 = vld [vmem:[%s1 + $0xd40] sm:$0xff]
      %v673 = vld [vmem:[%s1 + $0xd48] sm:$0xff]
      %v674 = vld [vmem:[%s1 + $0xd50] sm:$0xff]
      %v675 = vld [vmem:[%s1 + $0xd58] sm:$0xff]
      %v676 = vld [vmem:[%s1 + $0xd60] sm:$0xff]
      %v677 = vld [vmem:[%s1 + $0xd68] sm:$0xff]
      %v678 = vld [vmem:[%s1 + $0xd70] sm:$0xff]
      %v679 = vld [vmem:[%s1 + $0xd78] sm:$0xff]
      %v680 = vld [vmem:[%s1 + $0xd80] sm:$0xff]
      %v681 = vld [vmem:[%s1 + $0xd88] sm:$0xff]
      %v682 = vld [vmem:[%s1 + $0xd90] sm:$0xff]
      %v683 = vld [vmem:[%s1 + $0xd98] sm:$0xff]
      %v684 = vld [vmem:[%s1 + $0xda0] sm:$0xff]
      %v685 = vld [vmem:[%s1 + $0xda8] sm:$0xff]
      %v686 = vld [vmem:[%s1 + $0xdb0] sm:$0xff]
      %v687 = vld [vmem:[%s1 + $0xdb8] sm:$0xff]
      %v688 = vld [vmem:[%s1 + $0xdc0] sm:$0xff]
      %v689 = vld [vmem:[%s1 + $0xdc8] sm:$0xff]
      %v690 = vld [vmem:[%s1 + $0xdd0] sm:$0xff]
      %v691 = vld [vmem:[%s1 + $0xdd8] sm:$0xff]
      %v692 = vld [vmem:[%s1 + $0xde0] sm:$0xff]
      %v693 = vld [vmem:[%s1 + $0xde8] sm:$0xff]
      %v694 = vld [vmem:[%s1 + $0xdf0] sm:$0xff]
      %v695 = vld [vmem:[%s1 + $0xdf8] sm:$0xff]
      %v696 = vld [vmem:[%s1 + $0xe00] sm:$0xff]
      %v697 = vld [vmem:[%s1 + $0xe08] sm:$0xff]
      %v698 = vld [vmem:[%s1 + $0xe10] sm:$0xff]
      %v699 = vld [vmem:[%s1 + $0xe18] sm:$0xff]
      %v700 = vld [vmem:[%s1 + $0xe20] sm:$0xff]
      %v701 = vld [vmem:[%s1 + $0xe28] sm:$0xff]
      %v702 = vld [vmem:[%s1 + $0xe30] sm:$0xff]
      %v703 = vld [vmem:[%s1 + $0xe38] sm:$0xff]
      %v704 = vld [vmem:[%s1 + $0xe40] sm:$0xff]
      %v705 = vld [vmem:[%s1 + $0xe48] sm:$0xff]
      %v706 = vld [vmem:[%s1 + $0xe50] sm:$0xff]
      %v707 = vld [vmem:[%s1 + $0xe58] sm:$0xff]
      %v708 = vld [vmem:[%s1 + $0xe60] sm:$0xff]
      %v709 = vld [vmem:[%s1 + $0xe68] sm:$0xff]
      %v710 = vld [vmem:[%s1 + $0xe70] sm:$0xff]
      %v711 = vld [vmem:[%s1 + $0xe78] sm:$0xff]
      %v712 = vld [vmem:[%s1 + $0xe80] sm:$0xff]
      %v713 = vld [vmem:[%s1 + $0xe88] sm:$0xff]
      %v714 = vld [vmem:[%s1 + $0xe90] sm:$0xff]
      %v715 = vld [vmem:[%s1 + $0xe98] sm:$0xff]
      %v716 = vld [vmem:[%s1 + $0xea0] sm:$0xff]
      %v717 = vld [vmem:[%s1 + $0xea8] sm:$0xff]
      %v718 = vld [vmem:[%s1 + $0xeb0] sm:$0xff]
      %v719 = vld [vmem:[%s1 + $0xeb8] sm:$0xff]
      %v720 = vld [vmem:[%s1 + $0xec0] sm:$0xff]
      %v721 = vld [vmem:[%s1 + $0xec8] sm:$0xff]
      %v722 = vld [vmem:[%s1 + $0xed0] sm:$0xff]
      %v723 = vld [vmem:[%s1 + $0xed8] sm:$0xff]
      %v724 = vld [vmem:[%s1 + $0xee0] sm:$0xff]
      %v725 = vld [vmem:[%s1 + $0xee8] sm:$0xff]
      %v726 = vld [vmem:[%s1 + $0xef0] sm:$0xff]
      %v727 = vld [vmem:[%s1 + $0xef8] sm:$0xff]
      %v728 = vld [vmem:[%s1 + $0xf00] sm:$0xff]
      %v729 = vld [vmem:[%s1 + $0xf08] sm:$0xff]
      %v730 = vld [vmem:[%s1 + $0xf10] sm:$0xff]
      %v731 = vld [vmem:[%s1 + $0xf18] sm:$0xff]
      %v732 = vld [vmem:[%s1 + $0xf20] sm:$0xff]
      %v733 = vld [vmem:[%s1 + $0xf28] sm:$0xff]
      %v734 = vld [vmem:[%s1 + $0xf30] sm:$0xff]
      %v735 = vld [vmem:[%s1 + $0xf38] sm:$0xff]
      %v736 = vld [vmem:[%s1 + $0xf40] sm:$0xff]
      %v737 = vld [vmem:[%s1 + $0xf48] sm:$0xff]
      %v738 = vld [vmem:[%s1 + $0xf50] sm:$0xff]
      %v739 = vld [vmem:[%s1 + $0xf58] sm:$0xff]
      %v740 = vld [vmem:[%s1 + $0xf60] sm:$0xff]
      %v741 = vld [vmem:[%s1 + $0xf68] sm:$0xff]
      %v742 = vld [vmem:[%s1 + $0xf70] sm:$0xff]
      %v743 = vld [vmem:[%s1 + $0xf78] sm:$0xff]
      %v744 = vld [vmem:[%s1 + $0xf80] sm:$0xff]
      %v745 = vld [vmem:[%s1 + $0xf88] sm:$0xff]
      %v746 = vld [vmem:[%s1 + $0xf90] sm:$0xff]
      %v747 = vld [vmem:[%s1 + $0xf98] sm:$0xff]
      %v748 = vld [vmem:[%s2] sm:$0xf]
      %v750 = vlaneseq
      %v751 = vshrl.u32 %v750, 7
      %v752 = vsub.s32 0, %v751
      %v753 = vrot.slane %v748, %v752
      %v754 = vlaneseq
      %v755 = vshrl.u32 %v754, 7
      %v756 = vsub.s32 1, %v755
      %v757 = vrot.slane %v748, %v756
      %v758 = vlaneseq
      %v759 = vshrl.u32 %v758, 7
      %v760 = vsub.s32 2, %v759
      %v761 = vrot.slane %v748, %v760
      %v762 = vlaneseq
      %v763 = vshrl.u32 %v762, 7
      %v764 = vsub.s32 3, %v763
      %v765 = vrot.slane %v748, %v764
      %v786 = vunpack.c.l.b16 %v232
      %v787 = vunpack.c.h.b16 %v232
      %v788 = vunpack.c.l.b16 %v233
      %v789 = vunpack.c.h.b16 %v233
      %v790 = vunpack.c.l.b16 %v234
      %v791 = vunpack.c.h.b16 %v234
      %v792 = vunpack.c.l.b16 %v235
      %v793 = vunpack.c.h.b16 %v235
      %v794 = vunpack.c.l.b16 %v236
      %v795 = vunpack.c.h.b16 %v236
      %v796 = vunpack.c.l.b16 %v237
      %v797 = vunpack.c.h.b16 %v237
      %v798 = vunpack.c.l.b16 %v238
      %v799 = vunpack.c.h.b16 %v238
      %v800 = vunpack.c.l.b16 %v239
      %v801 = vunpack.c.h.b16 %v239
      %v802 = vunpack.c.l.b16 %v240
      %v803 = vunpack.c.h.b16 %v240
      %v804 = vunpack.c.l.b16 %v241
      %v805 = vunpack.c.h.b16 %v241
      %v806 = vunpack.c.l.b16 %v242
      %v807 = vunpack.c.h.b16 %v242
      %v808 = vunpack.c.l.b16 %v243
      %v809 = vunpack.c.h.b16 %v243
      %v810 = vunpack.c.l.b16 %v244
      %v811 = vunpack.c.h.b16 %v244
      %v812 = vunpack.c.l.b16 %v245
      %v813 = vunpack.c.h.b16 %v245
      %v814 = vunpack.c.l.b16 %v246
      %v815 = vunpack.c.h.b16 %v246
      %v816 = vunpack.c.l.b16 %v247
      %v817 = vunpack.c.h.b16 %v247
      %v818 = vpack.c.b16 %v802, %v786
      %v819 = vpack.c.b16 %v803, %v787
      %v820 = vpack.c.b16 %v804, %v788
      %v821 = vpack.c.b16 %v805, %v789
      %v822 = vpack.c.b16 %v806, %v790
      %v823 = vpack.c.b16 %v807, %v791
      %v824 = vpack.c.b16 %v808, %v792
      %v825 = vpack.c.b16 %v809, %v793
      %v826 = vpack.c.b16 %v810, %v794
      %v827 = vpack.c.b16 %v811, %v795
      %v828 = vpack.c.b16 %v812, %v796
      %v829 = vpack.c.b16 %v813, %v797
      %v830 = vpack.c.b16 %v814, %v798
      %v831 = vpack.c.b16 %v815, %v799
      %v832 = vpack.c.b16 %v816, %v800
      %v833 = vpack.c.b16 %v817, %v801
      %v1349 = vunpack.c.l.b16 %v248
      %v1350 = vunpack.c.h.b16 %v248
      %v1351 = vunpack.c.l.b16 %v249
      %v1352 = vunpack.c.h.b16 %v249
      %v1353 = vunpack.c.l.b16 %v250
      %v1354 = vunpack.c.h.b16 %v250
      %v1355 = vunpack.c.l.b16 %v251
      %v1356 = vunpack.c.h.b16 %v251
      %v1357 = vunpack.c.l.b16 %v252
      %v1358 = vunpack.c.h.b16 %v252
      %v1359 = vunpack.c.l.b16 %v253
      %v1360 = vunpack.c.h.b16 %v253
      %v1361 = vunpack.c.l.b16 %v254
      %v1362 = vunpack.c.h.b16 %v254
      %v1363 = vunpack.c.l.b16 %v255
      %v1364 = vunpack.c.h.b16 %v255
      %v1365 = vunpack.c.l.b16 %v256
      %v1366 = vunpack.c.h.b16 %v256
      %v1367 = vunpack.c.l.b16 %v257
      %v1368 = vunpack.c.h.b16 %v257
      %v1369 = vunpack.c.l.b16 %v258
      %v1370 = vunpack.c.h.b16 %v258
      %v1371 = vunpack.c.l.b16 %v259
      %v1372 = vunpack.c.h.b16 %v259
      %v1373 = vunpack.c.l.b16 %v260
      %v1374 = vunpack.c.h.b16 %v260
      %v1375 = vunpack.c.l.b16 %v261
      %v1376 = vunpack.c.h.b16 %v261
      %v1377 = vunpack.c.l.b16 %v262
      %v1378 = vunpack.c.h.b16 %v262
      %v1379 = vunpack.c.l.b16 %v263
      %v1380 = vunpack.c.h.b16 %v263
      %v1381 = vunpack.c.l.b16 %v264
      %v1382 = vunpack.c.h.b16 %v264
      %v1383 = vunpack.c.l.b16 %v265
      %v1384 = vunpack.c.h.b16 %v265
      %v1385 = vunpack.c.l.b16 %v266
      %v1386 = vunpack.c.h.b16 %v266
      %v1387 = vunpack.c.l.b16 %v267
      %v1388 = vunpack.c.h.b16 %v267
      %v1389 = vunpack.c.l.b16 %v268
      %v1390 = vunpack.c.h.b16 %v268
      %v1391 = vunpack.c.l.b16 %v269
      %v1392 = vunpack.c.h.b16 %v269
      %v1393 = vunpack.c.l.b16 %v270
      %v1394 = vunpack.c.h.b16 %v270
      %v1395 = vunpack.c.l.b16 %v271
      %v1396 = vunpack.c.h.b16 %v271
      %v1397 = vunpack.c.l.b16 %v272
      %v1398 = vunpack.c.h.b16 %v272
      %v1399 = vunpack.c.l.b16 %v273
      %v1400 = vunpack.c.h.b16 %v273
      %v1401 = vunpack.c.l.b16 %v274
      %v1402 = vunpack.c.h.b16 %v274
      %v1403 = vunpack.c.l.b16 %v275
      %v1404 = vunpack.c.h.b16 %v275
      %v1405 = vunpack.c.l.b16 %v276
      %v1406 = vunpack.c.h.b16 %v276
      %v1407 = vunpack.c.l.b16 %v277
      %v1408 = vunpack.c.h.b16 %v277
      %v1409 = vunpack.c.l.b16 %v278
      %v1410 = vunpack.c.h.b16 %v278
      %v1411 = vunpack.c.l.b16 %v279
      %v1412 = vunpack.c.h.b16 %v279
      %v1413 = vunpack.c.l.b16 %v280
      %v1414 = vunpack.c.h.b16 %v280
      %v1415 = vunpack.c.l.b16 %v281
      %v1416 = vunpack.c.h.b16 %v281
      %v1417 = vunpack.c.l.b16 %v282
      %v1418 = vunpack.c.h.b16 %v282
      %v1419 = vunpack.c.l.b16 %v283
      %v1420 = vunpack.c.h.b16 %v283
      %v1421 = vunpack.c.l.b16 %v284
      %v1422 = vunpack.c.h.b16 %v284
      %v1423 = vunpack.c.l.b16 %v285
      %v1424 = vunpack.c.h.b16 %v285
      %v1425 = vunpack.c.l.b16 %v286
      %v1426 = vunpack.c.h.b16 %v286
      %v1427 = vunpack.c.l.b16 %v287
      %v1428 = vunpack.c.h.b16 %v287
      %v1429 = vunpack.c.l.b16 %v288
      %v1430 = vunpack.c.h.b16 %v288
      %v1431 = vunpack.c.l.b16 %v289
      %v1432 = vunpack.c.h.b16 %v289
      %v1433 = vunpack.c.l.b16 %v290
      %v1434 = vunpack.c.h.b16 %v290
      %v1435 = vunpack.c.l.b16 %v291
      %v1436 = vunpack.c.h.b16 %v291
      %v1437 = vunpack.c.l.b16 %v292
      %v1438 = vunpack.c.h.b16 %v292
      %v1439 = vunpack.c.l.b16 %v293
      %v1440 = vunpack.c.h.b16 %v293
      %v1441 = vunpack.c.l.b16 %v294
      %v1442 = vunpack.c.h.b16 %v294
      %v1443 = vunpack.c.l.b16 %v295
      %v1444 = vunpack.c.h.b16 %v295
      %v1445 = vunpack.c.l.b16 %v296
      %v1446 = vunpack.c.h.b16 %v296
      %v1447 = vunpack.c.l.b16 %v297
      %v1448 = vunpack.c.h.b16 %v297
      %v1449 = vunpack.c.l.b16 %v298
      %v1450 = vunpack.c.h.b16 %v298
      %v1451 = vunpack.c.l.b16 %v299
      %v1452 = vunpack.c.h.b16 %v299
      %v1453 = vunpack.c.l.b16 %v300
      %v1454 = vunpack.c.h.b16 %v300
      %v1455 = vunpack.c.l.b16 %v301
      %v1456 = vunpack.c.h.b16 %v301
      %v1457 = vunpack.c.l.b16 %v302
      %v1458 = vunpack.c.h.b16 %v302
      %v1459 = vunpack.c.l.b16 %v303
      %v1460 = vunpack.c.h.b16 %v303
      %v1461 = vunpack.c.l.b16 %v304
      %v1462 = vunpack.c.h.b16 %v304
      %v1463 = vunpack.c.l.b16 %v305
      %v1464 = vunpack.c.h.b16 %v305
      %v1465 = vunpack.c.l.b16 %v306
      %v1466 = vunpack.c.h.b16 %v306
      %v1467 = vunpack.c.l.b16 %v307
      %v1468 = vunpack.c.h.b16 %v307
      %v1469 = vunpack.c.l.b16 %v308
      %v1470 = vunpack.c.h.b16 %v308
      %v1471 = vunpack.c.l.b16 %v309
      %v1472 = vunpack.c.h.b16 %v309
      %v1473 = vunpack.c.l.b16 %v310
      %v1474 = vunpack.c.h.b16 %v310
      %v1475 = vunpack.c.l.b16 %v311
      %v1476 = vunpack.c.h.b16 %v311
      %v1477 = vunpack.c.l.b16 %v312
      %v1478 = vunpack.c.h.b16 %v312
      %v1479 = vunpack.c.l.b16 %v313
      %v1480 = vunpack.c.h.b16 %v313
      %v1481 = vunpack.c.l.b16 %v314
      %v1482 = vunpack.c.h.b16 %v314
      %v1483 = vunpack.c.l.b16 %v315
      %v1484 = vunpack.c.h.b16 %v315
      %v1485 = vunpack.c.l.b16 %v316
      %v1486 = vunpack.c.h.b16 %v316
      %v1487 = vunpack.c.l.b16 %v317
      %v1488 = vunpack.c.h.b16 %v317
      %v1489 = vunpack.c.l.b16 %v318
      %v1490 = vunpack.c.h.b16 %v318
      %v1491 = vunpack.c.l.b16 %v319
      %v1492 = vunpack.c.h.b16 %v319
      %v1493 = vunpack.c.l.b16 %v320
      %v1494 = vunpack.c.h.b16 %v320
      %v1495 = vunpack.c.l.b16 %v321
      %v1496 = vunpack.c.h.b16 %v321
      %v1497 = vunpack.c.l.b16 %v322
      %v1498 = vunpack.c.h.b16 %v322
      %v1499 = vunpack.c.l.b16 %v323
      %v1500 = vunpack.c.h.b16 %v323
      %v1501 = vunpack.c.l.b16 %v324
      %v1502 = vunpack.c.h.b16 %v324
      %v1503 = vunpack.c.l.b16 %v325
      %v1504 = vunpack.c.h.b16 %v325
      %v1505 = vunpack.c.l.b16 %v326
      %v1506 = vunpack.c.h.b16 %v326
      %v1507 = vunpack.c.l.b16 %v327
      %v1508 = vunpack.c.h.b16 %v327
      %v1509 = vunpack.c.l.b16 %v328
      %v1510 = vunpack.c.h.b16 %v328
      %v1511 = vunpack.c.l.b16 %v329
      %v1512 = vunpack.c.h.b16 %v329
      %v1513 = vunpack.c.l.b16 %v330
      %v1514 = vunpack.c.h.b16 %v330
      %v1515 = vunpack.c.l.b16 %v331
      %v1516 = vunpack.c.h.b16 %v331
      %v1517 = vunpack.c.l.b16 %v332
      %v1518 = vunpack.c.h.b16 %v332
      %v1519 = vunpack.c.l.b16 %v333
      %v1520 = vunpack.c.h.b16 %v333
      %v1521 = vunpack.c.l.b16 %v334
      %v1522 = vunpack.c.h.b16 %v334
      %v1523 = vunpack.c.l.b16 %v335
      %v1524 = vunpack.c.h.b16 %v335
      %v1525 = vunpack.c.l.b16 %v336
      %v1526 = vunpack.c.h.b16 %v336
      %v1527 = vunpack.c.l.b16 %v337
      %v1528 = vunpack.c.h.b16 %v337
      %v1529 = vunpack.c.l.b16 %v338
      %v1530 = vunpack.c.h.b16 %v338
      %v1531 = vunpack.c.l.b16 %v339
      %v1532 = vunpack.c.h.b16 %v339
      %v1533 = vunpack.c.l.b16 %v340
      %v1534 = vunpack.c.h.b16 %v340
      %v1535 = vunpack.c.l.b16 %v341
      %v1536 = vunpack.c.h.b16 %v341
      %v1537 = vunpack.c.l.b16 %v342
      %v1538 = vunpack.c.h.b16 %v342
      %v1539 = vunpack.c.l.b16 %v343
      %v1540 = vunpack.c.h.b16 %v343
      %v1541 = vunpack.c.l.b16 %v344
      %v1542 = vunpack.c.h.b16 %v344
      %v1543 = vunpack.c.l.b16 %v345
      %v1544 = vunpack.c.h.b16 %v345
      %v1545 = vunpack.c.l.b16 %v346
      %v1546 = vunpack.c.h.b16 %v346
      %v1547 = vunpack.c.l.b16 %v347
      %v1548 = vunpack.c.h.b16 %v347
      %v1549 = vunpack.c.l.b16 %v348
      %v1550 = vunpack.c.h.b16 %v348
      %v1551 = vunpack.c.l.b16 %v349
      %v1552 = vunpack.c.h.b16 %v349
      %v1553 = vunpack.c.l.b16 %v350
      %v1554 = vunpack.c.h.b16 %v350
      %v1555 = vunpack.c.l.b16 %v351
      %v1556 = vunpack.c.h.b16 %v351
      %v1557 = vunpack.c.l.b16 %v352
      %v1558 = vunpack.c.h.b16 %v352
      %v1559 = vunpack.c.l.b16 %v353
      %v1560 = vunpack.c.h.b16 %v353
      %v1561 = vunpack.c.l.b16 %v354
      %v1562 = vunpack.c.h.b16 %v354
      %v1563 = vunpack.c.l.b16 %v355
      %v1564 = vunpack.c.h.b16 %v355
      %v1565 = vunpack.c.l.b16 %v356
      %v1566 = vunpack.c.h.b16 %v356
      %v1567 = vunpack.c.l.b16 %v357
      %v1568 = vunpack.c.h.b16 %v357
      %v1569 = vunpack.c.l.b16 %v358
      %v1570 = vunpack.c.h.b16 %v358
      %v1571 = vunpack.c.l.b16 %v359
      %v1572 = vunpack.c.h.b16 %v359
      %v1573 = vunpack.c.l.b16 %v360
      %v1574 = vunpack.c.h.b16 %v360
      %v1575 = vunpack.c.l.b16 %v361
      %v1576 = vunpack.c.h.b16 %v361
      %v1577 = vunpack.c.l.b16 %v362
      %v1578 = vunpack.c.h.b16 %v362
      %v1579 = vunpack.c.l.b16 %v363
      %v1580 = vunpack.c.h.b16 %v363
      %v1581 = vunpack.c.l.b16 %v364
      %v1582 = vunpack.c.h.b16 %v364
      %v1583 = vunpack.c.l.b16 %v365
      %v1584 = vunpack.c.h.b16 %v365
      %v1585 = vunpack.c.l.b16 %v366
      %v1586 = vunpack.c.h.b16 %v366
      %v1587 = vunpack.c.l.b16 %v367
      %v1588 = vunpack.c.h.b16 %v367
      %v1589 = vunpack.c.l.b16 %v368
      %v1590 = vunpack.c.h.b16 %v368
      %v1591 = vunpack.c.l.b16 %v369
      %v1592 = vunpack.c.h.b16 %v369
      %v1593 = vunpack.c.l.b16 %v370
      %v1594 = vunpack.c.h.b16 %v370
      %v1595 = vunpack.c.l.b16 %v371
      %v1596 = vunpack.c.h.b16 %v371
      %v1597 = vunpack.c.l.b16 %v372
      %v1598 = vunpack.c.h.b16 %v372
      %v1599 = vunpack.c.l.b16 %v373
      %v1600 = vunpack.c.h.b16 %v373
      %v1601 = vunpack.c.l.b16 %v374
      %v1602 = vunpack.c.h.b16 %v374
      %v1603 = vunpack.c.l.b16 %v375
      %v1604 = vunpack.c.h.b16 %v375
      %v1605 = vunpack.c.l.b16 %v376
      %v1606 = vunpack.c.h.b16 %v376
      %v1607 = vunpack.c.l.b16 %v377
      %v1608 = vunpack.c.h.b16 %v377
      %v1609 = vunpack.c.l.b16 %v378
      %v1610 = vunpack.c.h.b16 %v378
      %v1611 = vunpack.c.l.b16 %v379
      %v1612 = vunpack.c.h.b16 %v379
      %v1613 = vunpack.c.l.b16 %v380
      %v1614 = vunpack.c.h.b16 %v380
      %v1615 = vunpack.c.l.b16 %v381
      %v1616 = vunpack.c.h.b16 %v381
      %v1617 = vunpack.c.l.b16 %v382
      %v1618 = vunpack.c.h.b16 %v382
      %v1619 = vunpack.c.l.b16 %v383
      %v1620 = vunpack.c.h.b16 %v383
      %v1621 = vunpack.c.l.b16 %v384
      %v1622 = vunpack.c.h.b16 %v384
      %v1623 = vunpack.c.l.b16 %v385
      %v1624 = vunpack.c.h.b16 %v385
      %v1625 = vunpack.c.l.b16 %v386
      %v1626 = vunpack.c.h.b16 %v386
      %v1627 = vunpack.c.l.b16 %v387
      %v1628 = vunpack.c.h.b16 %v387
      %v1629 = vunpack.c.l.b16 %v388
      %v1630 = vunpack.c.h.b16 %v388
      %v1631 = vunpack.c.l.b16 %v389
      %v1632 = vunpack.c.h.b16 %v389
      %v1633 = vunpack.c.l.b16 %v390
      %v1634 = vunpack.c.h.b16 %v390
      %v1635 = vunpack.c.l.b16 %v391
      %v1636 = vunpack.c.h.b16 %v391
      %v1637 = vunpack.c.l.b16 %v392
      %v1638 = vunpack.c.h.b16 %v392
      %v1639 = vunpack.c.l.b16 %v393
      %v1640 = vunpack.c.h.b16 %v393
      %v1641 = vunpack.c.l.b16 %v394
      %v1642 = vunpack.c.h.b16 %v394
      %v1643 = vunpack.c.l.b16 %v395
      %v1644 = vunpack.c.h.b16 %v395
      %v1645 = vunpack.c.l.b16 %v396
      %v1646 = vunpack.c.h.b16 %v396
      %v1647 = vunpack.c.l.b16 %v397
      %v1648 = vunpack.c.h.b16 %v397
      %v1649 = vunpack.c.l.b16 %v398
      %v1650 = vunpack.c.h.b16 %v398
      %v1651 = vunpack.c.l.b16 %v399
      %v1652 = vunpack.c.h.b16 %v399
      %v1653 = vunpack.c.l.b16 %v400
      %v1654 = vunpack.c.h.b16 %v400
      %v1655 = vunpack.c.l.b16 %v401
      %v1656 = vunpack.c.h.b16 %v401
      %v1657 = vunpack.c.l.b16 %v402
      %v1658 = vunpack.c.h.b16 %v402
      %v1659 = vunpack.c.l.b16 %v403
      %v1660 = vunpack.c.h.b16 %v403
      %v1661 = vunpack.c.l.b16 %v404
      %v1662 = vunpack.c.h.b16 %v404
      %v1663 = vunpack.c.l.b16 %v405
      %v1664 = vunpack.c.h.b16 %v405
      %v1665 = vunpack.c.l.b16 %v406
      %v1666 = vunpack.c.h.b16 %v406
      %v1667 = vunpack.c.l.b16 %v407
      %v1668 = vunpack.c.h.b16 %v407
      %v1669 = vunpack.c.l.b16 %v408
      %v1670 = vunpack.c.h.b16 %v408
      %v1671 = vunpack.c.l.b16 %v409
      %v1672 = vunpack.c.h.b16 %v409
      %v1673 = vunpack.c.l.b16 %v410
      %v1674 = vunpack.c.h.b16 %v410
      %v1675 = vunpack.c.l.b16 %v411
      %v1676 = vunpack.c.h.b16 %v411
      %v1677 = vunpack.c.l.b16 %v412
      %v1678 = vunpack.c.h.b16 %v412
      %v1679 = vunpack.c.l.b16 %v413
      %v1680 = vunpack.c.h.b16 %v413
      %v1681 = vunpack.c.l.b16 %v414
      %v1682 = vunpack.c.h.b16 %v414
      %v1683 = vunpack.c.l.b16 %v415
      %v1684 = vunpack.c.h.b16 %v415
      %v1685 = vunpack.c.l.b16 %v416
      %v1686 = vunpack.c.h.b16 %v416
      %v1687 = vunpack.c.l.b16 %v417
      %v1688 = vunpack.c.h.b16 %v417
      %v1689 = vunpack.c.l.b16 %v418
      %v1690 = vunpack.c.h.b16 %v418
      %v1691 = vunpack.c.l.b16 %v419
      %v1692 = vunpack.c.h.b16 %v419
      %v1693 = vunpack.c.l.b16 %v420
      %v1694 = vunpack.c.h.b16 %v420
      %v1695 = vunpack.c.l.b16 %v421
      %v1696 = vunpack.c.h.b16 %v421
      %v1697 = vunpack.c.l.b16 %v422
      %v1698 = vunpack.c.h.b16 %v422
      %v1699 = vunpack.c.l.b16 %v423
      %v1700 = vunpack.c.h.b16 %v423
      %v1701 = vunpack.c.l.b16 %v424
      %v1702 = vunpack.c.h.b16 %v424
      %v1703 = vunpack.c.l.b16 %v425
      %v1704 = vunpack.c.h.b16 %v425
      %v1705 = vunpack.c.l.b16 %v426
      %v1706 = vunpack.c.h.b16 %v426
      %v1707 = vunpack.c.l.b16 %v427
      %v1708 = vunpack.c.h.b16 %v427
      %v1709 = vunpack.c.l.b16 %v428
      %v1710 = vunpack.c.h.b16 %v428
      %v1711 = vunpack.c.l.b16 %v429
      %v1712 = vunpack.c.h.b16 %v429
      %v1713 = vunpack.c.l.b16 %v430
      %v1714 = vunpack.c.h.b16 %v430
      %v1715 = vunpack.c.l.b16 %v431
      %v1716 = vunpack.c.h.b16 %v431
      %v1717 = vunpack.c.l.b16 %v432
      %v1718 = vunpack.c.h.b16 %v432
      %v1719 = vunpack.c.l.b16 %v433
      %v1720 = vunpack.c.h.b16 %v433
      %v1721 = vunpack.c.l.b16 %v434
      %v1722 = vunpack.c.h.b16 %v434
      %v1723 = vunpack.c.l.b16 %v435
      %v1724 = vunpack.c.h.b16 %v435
      %v1725 = vunpack.c.l.b16 %v436
      %v1726 = vunpack.c.h.b16 %v436
      %v1727 = vunpack.c.l.b16 %v437
      %v1728 = vunpack.c.h.b16 %v437
      %v1729 = vunpack.c.l.b16 %v438
      %v1730 = vunpack.c.h.b16 %v438
      %v1731 = vunpack.c.l.b16 %v439
      %v1732 = vunpack.c.h.b16 %v439
      %v1733 = vunpack.c.l.b16 %v440
      %v1734 = vunpack.c.h.b16 %v440
      %v1735 = vunpack.c.l.b16 %v441
      %v1736 = vunpack.c.h.b16 %v441
      %v1737 = vunpack.c.l.b16 %v442
      %v1738 = vunpack.c.h.b16 %v442
      %v1739 = vunpack.c.l.b16 %v443
      %v1740 = vunpack.c.h.b16 %v443
      %v1741 = vunpack.c.l.b16 %v444
      %v1742 = vunpack.c.h.b16 %v444
      %v1743 = vunpack.c.l.b16 %v445
      %v1744 = vunpack.c.h.b16 %v445
      %v1745 = vunpack.c.l.b16 %v446
      %v1746 = vunpack.c.h.b16 %v446
      %v1747 = vunpack.c.l.b16 %v447
      %v1748 = vunpack.c.h.b16 %v447
      %v1749 = vunpack.c.l.b16 %v448
      %v1750 = vunpack.c.h.b16 %v448
      %v1751 = vunpack.c.l.b16 %v449
      %v1752 = vunpack.c.h.b16 %v449
      %v1753 = vunpack.c.l.b16 %v450
      %v1754 = vunpack.c.h.b16 %v450
      %v1755 = vunpack.c.l.b16 %v451
      %v1756 = vunpack.c.h.b16 %v451
      %v1757 = vunpack.c.l.b16 %v452
      %v1758 = vunpack.c.h.b16 %v452
      %v1759 = vunpack.c.l.b16 %v453
      %v1760 = vunpack.c.h.b16 %v453
      %v1761 = vunpack.c.l.b16 %v454
      %v1762 = vunpack.c.h.b16 %v454
      %v1763 = vunpack.c.l.b16 %v455
      %v1764 = vunpack.c.h.b16 %v455
      %v1765 = vunpack.c.l.b16 %v456
      %v1766 = vunpack.c.h.b16 %v456
      %v1767 = vunpack.c.l.b16 %v457
      %v1768 = vunpack.c.h.b16 %v457
      %v1769 = vunpack.c.l.b16 %v458
      %v1770 = vunpack.c.h.b16 %v458
      %v1771 = vunpack.c.l.b16 %v459
      %v1772 = vunpack.c.h.b16 %v459
      %v1773 = vunpack.c.l.b16 %v460
      %v1774 = vunpack.c.h.b16 %v460
      %v1775 = vunpack.c.l.b16 %v461
      %v1776 = vunpack.c.h.b16 %v461
      %v1777 = vunpack.c.l.b16 %v462
      %v1778 = vunpack.c.h.b16 %v462
      %v1779 = vunpack.c.l.b16 %v463
      %v1780 = vunpack.c.h.b16 %v463
      %v1781 = vunpack.c.l.b16 %v464
      %v1782 = vunpack.c.h.b16 %v464
      %v1783 = vunpack.c.l.b16 %v465
      %v1784 = vunpack.c.h.b16 %v465
      %v1785 = vunpack.c.l.b16 %v466
      %v1786 = vunpack.c.h.b16 %v466
      %v1787 = vunpack.c.l.b16 %v467
      %v1788 = vunpack.c.h.b16 %v467
      %v1789 = vunpack.c.l.b16 %v468
      %v1790 = vunpack.c.h.b16 %v468
      %v1791 = vunpack.c.l.b16 %v469
      %v1792 = vunpack.c.h.b16 %v469
      %v1793 = vunpack.c.l.b16 %v470
      %v1794 = vunpack.c.h.b16 %v470
      %v1795 = vunpack.c.l.b16 %v471
      %v1796 = vunpack.c.h.b16 %v471
      %v1797 = vunpack.c.l.b16 %v472
      %v1798 = vunpack.c.h.b16 %v472
      %v1799 = vunpack.c.l.b16 %v473
      %v1800 = vunpack.c.h.b16 %v473
      %v1801 = vunpack.c.l.b16 %v474
      %v1802 = vunpack.c.h.b16 %v474
      %v1803 = vunpack.c.l.b16 %v475
      %v1804 = vunpack.c.h.b16 %v475
      %v1805 = vunpack.c.l.b16 %v476
      %v1806 = vunpack.c.h.b16 %v476
      %v1807 = vunpack.c.l.b16 %v477
      %v1808 = vunpack.c.h.b16 %v477
      %v1809 = vunpack.c.l.b16 %v478
      %v1810 = vunpack.c.h.b16 %v478
      %v1811 = vunpack.c.l.b16 %v479
      %v1812 = vunpack.c.h.b16 %v479
      %v1813 = vunpack.c.l.b16 %v480
      %v1814 = vunpack.c.h.b16 %v480
      %v1815 = vunpack.c.l.b16 %v481
      %v1816 = vunpack.c.h.b16 %v481
      %v1817 = vunpack.c.l.b16 %v482
      %v1818 = vunpack.c.h.b16 %v482
      %v1819 = vunpack.c.l.b16 %v483
      %v1820 = vunpack.c.h.b16 %v483
      %v1821 = vunpack.c.l.b16 %v484
      %v1822 = vunpack.c.h.b16 %v484
      %v1823 = vunpack.c.l.b16 %v485
      %v1824 = vunpack.c.h.b16 %v485
      %v1825 = vunpack.c.l.b16 %v486
      %v1826 = vunpack.c.h.b16 %v486
      %v1827 = vunpack.c.l.b16 %v487
      %v1828 = vunpack.c.h.b16 %v487
      %v1829 = vunpack.c.l.b16 %v488
      %v1830 = vunpack.c.h.b16 %v488
      %v1831 = vunpack.c.l.b16 %v489
      %v1832 = vunpack.c.h.b16 %v489
      %v1833 = vunpack.c.l.b16 %v490
      %v1834 = vunpack.c.h.b16 %v490
      %v1835 = vunpack.c.l.b16 %v491
      %v1836 = vunpack.c.h.b16 %v491
      %v1837 = vunpack.c.l.b16 %v492
      %v1838 = vunpack.c.h.b16 %v492
      %v1839 = vunpack.c.l.b16 %v493
      %v1840 = vunpack.c.h.b16 %v493
      %v1841 = vunpack.c.l.b16 %v494
      %v1842 = vunpack.c.h.b16 %v494
      %v1843 = vunpack.c.l.b16 %v495
      %v1844 = vunpack.c.h.b16 %v495
      %v1845 = vunpack.c.l.b16 %v496
      %v1846 = vunpack.c.h.b16 %v496
      %v1847 = vunpack.c.l.b16 %v497
      %v1848 = vunpack.c.h.b16 %v497
      %v1849 = vunpack.c.l.b16 %v498
      %v1850 = vunpack.c.h.b16 %v498
      %v1851 = vunpack.c.l.b16 %v499
      %v1852 = vunpack.c.h.b16 %v499
      %v1853 = vunpack.c.l.b16 %v500
      %v1854 = vunpack.c.h.b16 %v500
      %v1855 = vunpack.c.l.b16 %v501
      %v1856 = vunpack.c.h.b16 %v501
      %v1857 = vunpack.c.l.b16 %v502
      %v1858 = vunpack.c.h.b16 %v502
      %v1859 = vunpack.c.l.b16 %v503
      %v1860 = vunpack.c.h.b16 %v503
      %v1861 = vunpack.c.l.b16 %v504
      %v1862 = vunpack.c.h.b16 %v504
      %v1863 = vunpack.c.l.b16 %v505
      %v1864 = vunpack.c.h.b16 %v505
      %v1865 = vunpack.c.l.b16 %v506
      %v1866 = vunpack.c.h.b16 %v506
      %v1867 = vunpack.c.l.b16 %v507
      %v1868 = vunpack.c.h.b16 %v507
      %v1869 = vunpack.c.l.b16 %v508
      %v1870 = vunpack.c.h.b16 %v508
      %v1871 = vunpack.c.l.b16 %v509
      %v1872 = vunpack.c.h.b16 %v509
      %v1873 = vunpack.c.l.b16 %v510
      %v1874 = vunpack.c.h.b16 %v510
      %v1875 = vunpack.c.l.b16 %v511
      %v1876 = vunpack.c.h.b16 %v511
      %v1877 = vunpack.c.l.b16 %v512
      %v1878 = vunpack.c.h.b16 %v512
      %v1879 = vunpack.c.l.b16 %v513
      %v1880 = vunpack.c.h.b16 %v513
      %v1881 = vunpack.c.l.b16 %v514
      %v1882 = vunpack.c.h.b16 %v514
      %v1883 = vunpack.c.l.b16 %v515
      %v1884 = vunpack.c.h.b16 %v515
      %v1885 = vunpack.c.l.b16 %v516
      %v1886 = vunpack.c.h.b16 %v516
      %v1887 = vunpack.c.l.b16 %v517
      %v1888 = vunpack.c.h.b16 %v517
      %v1889 = vunpack.c.l.b16 %v518
      %v1890 = vunpack.c.h.b16 %v518
      %v1891 = vunpack.c.l.b16 %v519
      %v1892 = vunpack.c.h.b16 %v519
      %v1893 = vunpack.c.l.b16 %v520
      %v1894 = vunpack.c.h.b16 %v520
      %v1895 = vunpack.c.l.b16 %v521
      %v1896 = vunpack.c.h.b16 %v521
      %v1897 = vunpack.c.l.b16 %v522
      %v1898 = vunpack.c.h.b16 %v522
      %v1899 = vunpack.c.l.b16 %v523
      %v1900 = vunpack.c.h.b16 %v523
      %v1901 = vunpack.c.l.b16 %v524
      %v1902 = vunpack.c.h.b16 %v524
      %v1903 = vunpack.c.l.b16 %v525
      %v1904 = vunpack.c.h.b16 %v525
      %v1905 = vunpack.c.l.b16 %v526
      %v1906 = vunpack.c.h.b16 %v526
      %v1907 = vunpack.c.l.b16 %v527
      %v1908 = vunpack.c.h.b16 %v527
      %v1909 = vunpack.c.l.b16 %v528
      %v1910 = vunpack.c.h.b16 %v528
      %v1911 = vunpack.c.l.b16 %v529
      %v1912 = vunpack.c.h.b16 %v529
      %v1913 = vunpack.c.l.b16 %v530
      %v1914 = vunpack.c.h.b16 %v530
      %v1915 = vunpack.c.l.b16 %v531
      %v1916 = vunpack.c.h.b16 %v531
      %v1917 = vunpack.c.l.b16 %v532
      %v1918 = vunpack.c.h.b16 %v532
      %v1919 = vunpack.c.l.b16 %v533
      %v1920 = vunpack.c.h.b16 %v533
      %v1921 = vunpack.c.l.b16 %v534
      %v1922 = vunpack.c.h.b16 %v534
      %v1923 = vunpack.c.l.b16 %v535
      %v1924 = vunpack.c.h.b16 %v535
      %v1925 = vunpack.c.l.b16 %v536
      %v1926 = vunpack.c.h.b16 %v536
      %v1927 = vunpack.c.l.b16 %v537
      %v1928 = vunpack.c.h.b16 %v537
      %v1929 = vunpack.c.l.b16 %v538
      %v1930 = vunpack.c.h.b16 %v538
      %v1931 = vunpack.c.l.b16 %v539
      %v1932 = vunpack.c.h.b16 %v539
      %v1933 = vunpack.c.l.b16 %v540
      %v1934 = vunpack.c.h.b16 %v540
      %v1935 = vunpack.c.l.b16 %v541
      %v1936 = vunpack.c.h.b16 %v541
      %v1937 = vunpack.c.l.b16 %v542
      %v1938 = vunpack.c.h.b16 %v542
      %v1939 = vunpack.c.l.b16 %v543
      %v1940 = vunpack.c.h.b16 %v543
      %v1941 = vunpack.c.l.b16 %v544
      %v1942 = vunpack.c.h.b16 %v544
      %v1943 = vunpack.c.l.b16 %v545
      %v1944 = vunpack.c.h.b16 %v545
      %v1945 = vunpack.c.l.b16 %v546
      %v1946 = vunpack.c.h.b16 %v546
      %v1947 = vunpack.c.l.b16 %v547
      %v1948 = vunpack.c.h.b16 %v547
      %v1949 = vunpack.c.l.b16 %v548
      %v1950 = vunpack.c.h.b16 %v548
      %v1951 = vunpack.c.l.b16 %v549
      %v1952 = vunpack.c.h.b16 %v549
      %v1953 = vunpack.c.l.b16 %v550
      %v1954 = vunpack.c.h.b16 %v550
      %v1955 = vunpack.c.l.b16 %v551
      %v1956 = vunpack.c.h.b16 %v551
      %v1957 = vunpack.c.l.b16 %v552
      %v1958 = vunpack.c.h.b16 %v552
      %v1959 = vunpack.c.l.b16 %v553
      %v1960 = vunpack.c.h.b16 %v553
      %v1961 = vunpack.c.l.b16 %v554
      %v1962 = vunpack.c.h.b16 %v554
      %v1963 = vunpack.c.l.b16 %v555
      %v1964 = vunpack.c.h.b16 %v555
      %v1965 = vunpack.c.l.b16 %v556
      %v1966 = vunpack.c.h.b16 %v556
      %v1967 = vunpack.c.l.b16 %v557
      %v1968 = vunpack.c.h.b16 %v557
      %v1969 = vunpack.c.l.b16 %v558
      %v1970 = vunpack.c.h.b16 %v558
      %v1971 = vunpack.c.l.b16 %v559
      %v1972 = vunpack.c.h.b16 %v559
      %v1973 = vunpack.c.l.b16 %v560
      %v1974 = vunpack.c.h.b16 %v560
      %v1975 = vunpack.c.l.b16 %v561
      %v1976 = vunpack.c.h.b16 %v561
      %v1977 = vunpack.c.l.b16 %v562
      %v1978 = vunpack.c.h.b16 %v562
      %v1979 = vunpack.c.l.b16 %v563
      %v1980 = vunpack.c.h.b16 %v563
      %v1981 = vunpack.c.l.b16 %v564
      %v1982 = vunpack.c.h.b16 %v564
      %v1983 = vunpack.c.l.b16 %v565
      %v1984 = vunpack.c.h.b16 %v565
      %v1985 = vunpack.c.l.b16 %v566
      %v1986 = vunpack.c.h.b16 %v566
      %v1987 = vunpack.c.l.b16 %v567
      %v1988 = vunpack.c.h.b16 %v567
      %v1989 = vunpack.c.l.b16 %v568
      %v1990 = vunpack.c.h.b16 %v568
      %v1991 = vunpack.c.l.b16 %v569
      %v1992 = vunpack.c.h.b16 %v569
      %v1993 = vunpack.c.l.b16 %v570
      %v1994 = vunpack.c.h.b16 %v570
      %v1995 = vunpack.c.l.b16 %v571
      %v1996 = vunpack.c.h.b16 %v571
      %v1997 = vunpack.c.l.b16 %v572
      %v1998 = vunpack.c.h.b16 %v572
      %v1999 = vunpack.c.l.b16 %v573
      %v2000 = vunpack.c.h.b16 %v573
      %v2001 = vunpack.c.l.b16 %v574
      %v2002 = vunpack.c.h.b16 %v574
      %v2003 = vunpack.c.l.b16 %v575
      %v2004 = vunpack.c.h.b16 %v575
      %v2005 = vunpack.c.l.b16 %v576
      %v2006 = vunpack.c.h.b16 %v576
      %v2007 = vunpack.c.l.b16 %v577
      %v2008 = vunpack.c.h.b16 %v577
      %v2009 = vunpack.c.l.b16 %v578
      %v2010 = vunpack.c.h.b16 %v578
      %v2011 = vunpack.c.l.b16 %v579
      %v2012 = vunpack.c.h.b16 %v579
      %v2013 = vunpack.c.l.b16 %v580
      %v2014 = vunpack.c.h.b16 %v580
      %v2015 = vunpack.c.l.b16 %v581
      %v2016 = vunpack.c.h.b16 %v581
      %v2017 = vunpack.c.l.b16 %v582
      %v2018 = vunpack.c.h.b16 %v582
      %v2019 = vunpack.c.l.b16 %v583
      %v2020 = vunpack.c.h.b16 %v583
      %v2021 = vunpack.c.l.b16 %v584
      %v2022 = vunpack.c.h.b16 %v584
      %v2023 = vunpack.c.l.b16 %v585
      %v2024 = vunpack.c.h.b16 %v585
      %v2025 = vunpack.c.l.b16 %v586
      %v2026 = vunpack.c.h.b16 %v586
      %v2027 = vunpack.c.l.b16 %v587
      %v2028 = vunpack.c.h.b16 %v587
      %v2029 = vunpack.c.l.b16 %v588
      %v2030 = vunpack.c.h.b16 %v588
      %v2031 = vunpack.c.l.b16 %v589
      %v2032 = vunpack.c.h.b16 %v589
      %v2033 = vunpack.c.l.b16 %v590
      %v2034 = vunpack.c.h.b16 %v590
      %v2035 = vunpack.c.l.b16 %v591
      %v2036 = vunpack.c.h.b16 %v591
      %v2037 = vunpack.c.l.b16 %v592
      %v2038 = vunpack.c.h.b16 %v592
      %v2039 = vunpack.c.l.b16 %v593
      %v2040 = vunpack.c.h.b16 %v593
      %v2041 = vunpack.c.l.b16 %v594
      %v2042 = vunpack.c.h.b16 %v594
      %v2043 = vunpack.c.l.b16 %v595
      %v2044 = vunpack.c.h.b16 %v595
      %v2045 = vunpack.c.l.b16 %v596
      %v2046 = vunpack.c.h.b16 %v596
      %v2047 = vunpack.c.l.b16 %v597
      %v2048 = vunpack.c.h.b16 %v597
      %v2049 = vunpack.c.l.b16 %v598
      %v2050 = vunpack.c.h.b16 %v598
      %v2051 = vunpack.c.l.b16 %v599
      %v2052 = vunpack.c.h.b16 %v599
      %v2053 = vunpack.c.l.b16 %v600
      %v2054 = vunpack.c.h.b16 %v600
      %v2055 = vunpack.c.l.b16 %v601
      %v2056 = vunpack.c.h.b16 %v601
      %v2057 = vunpack.c.l.b16 %v602
      %v2058 = vunpack.c.h.b16 %v602
      %v2059 = vunpack.c.l.b16 %v603
      %v2060 = vunpack.c.h.b16 %v603
      %v2061 = vunpack.c.l.b16 %v604
      %v2062 = vunpack.c.h.b16 %v604
      %v2063 = vunpack.c.l.b16 %v605
      %v2064 = vunpack.c.h.b16 %v605
      %v2065 = vunpack.c.l.b16 %v606
      %v2066 = vunpack.c.h.b16 %v606
      %v2067 = vunpack.c.l.b16 %v607
      %v2068 = vunpack.c.h.b16 %v607
      %v2069 = vunpack.c.l.b16 %v608
      %v2070 = vunpack.c.h.b16 %v608
      %v2071 = vunpack.c.l.b16 %v609
      %v2072 = vunpack.c.h.b16 %v609
      %v2073 = vunpack.c.l.b16 %v610
      %v2074 = vunpack.c.h.b16 %v610
      %v2075 = vunpack.c.l.b16 %v611
      %v2076 = vunpack.c.h.b16 %v611
      %v2077 = vunpack.c.l.b16 %v612
      %v2078 = vunpack.c.h.b16 %v612
      %v2079 = vunpack.c.l.b16 %v613
      %v2080 = vunpack.c.h.b16 %v613
      %v2081 = vunpack.c.l.b16 %v614
      %v2082 = vunpack.c.h.b16 %v614
      %v2083 = vunpack.c.l.b16 %v615
      %v2084 = vunpack.c.h.b16 %v615
      %v2085 = vunpack.c.l.b16 %v616
      %v2086 = vunpack.c.h.b16 %v616
      %v2087 = vunpack.c.l.b16 %v617
      %v2088 = vunpack.c.h.b16 %v617
      %v2089 = vunpack.c.l.b16 %v618
      %v2090 = vunpack.c.h.b16 %v618
      %v2091 = vunpack.c.l.b16 %v619
      %v2092 = vunpack.c.h.b16 %v619
      %v2093 = vunpack.c.l.b16 %v620
      %v2094 = vunpack.c.h.b16 %v620
      %v2095 = vunpack.c.l.b16 %v621
      %v2096 = vunpack.c.h.b16 %v621
      %v2097 = vunpack.c.l.b16 %v622
      %v2098 = vunpack.c.h.b16 %v622
      %v2099 = vunpack.c.l.b16 %v623
      %v2100 = vunpack.c.h.b16 %v623
      %v2101 = vunpack.c.l.b16 %v624
      %v2102 = vunpack.c.h.b16 %v624
      %v2103 = vunpack.c.l.b16 %v625
      %v2104 = vunpack.c.h.b16 %v625
      %v2105 = vunpack.c.l.b16 %v626
      %v2106 = vunpack.c.h.b16 %v626
      %v2107 = vunpack.c.l.b16 %v627
      %v2108 = vunpack.c.h.b16 %v627
      %v2109 = vunpack.c.l.b16 %v628
      %v2110 = vunpack.c.h.b16 %v628
      %v2111 = vunpack.c.l.b16 %v629
      %v2112 = vunpack.c.h.b16 %v629
      %v2113 = vunpack.c.l.b16 %v630
      %v2114 = vunpack.c.h.b16 %v630
      %v2115 = vunpack.c.l.b16 %v631
      %v2116 = vunpack.c.h.b16 %v631
      %v2117 = vunpack.c.l.b16 %v632
      %v2118 = vunpack.c.h.b16 %v632
      %v2119 = vunpack.c.l.b16 %v633
      %v2120 = vunpack.c.h.b16 %v633
      %v2121 = vunpack.c.l.b16 %v634
      %v2122 = vunpack.c.h.b16 %v634
      %v2123 = vunpack.c.l.b16 %v635
      %v2124 = vunpack.c.h.b16 %v635
      %v2125 = vunpack.c.l.b16 %v636
      %v2126 = vunpack.c.h.b16 %v636
      %v2127 = vunpack.c.l.b16 %v637
      %v2128 = vunpack.c.h.b16 %v637
      %v2129 = vunpack.c.l.b16 %v638
      %v2130 = vunpack.c.h.b16 %v638
      %v2131 = vunpack.c.l.b16 %v639
      %v2132 = vunpack.c.h.b16 %v639
      %v2133 = vunpack.c.l.b16 %v640
      %v2134 = vunpack.c.h.b16 %v640
      %v2135 = vunpack.c.l.b16 %v641
      %v2136 = vunpack.c.h.b16 %v641
      %v2137 = vunpack.c.l.b16 %v642
      %v2138 = vunpack.c.h.b16 %v642
      %v2139 = vunpack.c.l.b16 %v643
      %v2140 = vunpack.c.h.b16 %v643
      %v2141 = vunpack.c.l.b16 %v644
      %v2142 = vunpack.c.h.b16 %v644
      %v2143 = vunpack.c.l.b16 %v645
      %v2144 = vunpack.c.h.b16 %v645
      %v2145 = vunpack.c.l.b16 %v646
      %v2146 = vunpack.c.h.b16 %v646
      %v2147 = vunpack.c.l.b16 %v647
      %v2148 = vunpack.c.h.b16 %v647
      %v2149 = vunpack.c.l.b16 %v648
      %v2150 = vunpack.c.h.b16 %v648
      %v2151 = vunpack.c.l.b16 %v649
      %v2152 = vunpack.c.h.b16 %v649
      %v2153 = vunpack.c.l.b16 %v650
      %v2154 = vunpack.c.h.b16 %v650
      %v2155 = vunpack.c.l.b16 %v651
      %v2156 = vunpack.c.h.b16 %v651
      %v2157 = vunpack.c.l.b16 %v652
      %v2158 = vunpack.c.h.b16 %v652
      %v2159 = vunpack.c.l.b16 %v653
      %v2160 = vunpack.c.h.b16 %v653
      %v2161 = vunpack.c.l.b16 %v654
      %v2162 = vunpack.c.h.b16 %v654
      %v2163 = vunpack.c.l.b16 %v655
      %v2164 = vunpack.c.h.b16 %v655
      %v2165 = vunpack.c.l.b16 %v656
      %v2166 = vunpack.c.h.b16 %v656
      %v2167 = vunpack.c.l.b16 %v657
      %v2168 = vunpack.c.h.b16 %v657
      %v2169 = vunpack.c.l.b16 %v658
      %v2170 = vunpack.c.h.b16 %v658
      %v2171 = vunpack.c.l.b16 %v659
      %v2172 = vunpack.c.h.b16 %v659
      %v2173 = vunpack.c.l.b16 %v660
      %v2174 = vunpack.c.h.b16 %v660
      %v2175 = vunpack.c.l.b16 %v661
      %v2176 = vunpack.c.h.b16 %v661
      %v2177 = vunpack.c.l.b16 %v662
      %v2178 = vunpack.c.h.b16 %v662
      %v2179 = vunpack.c.l.b16 %v663
      %v2180 = vunpack.c.h.b16 %v663
      %v2181 = vunpack.c.l.b16 %v664
      %v2182 = vunpack.c.h.b16 %v664
      %v2183 = vunpack.c.l.b16 %v665
      %v2184 = vunpack.c.h.b16 %v665
      %v2185 = vunpack.c.l.b16 %v666
      %v2186 = vunpack.c.h.b16 %v666
      %v2187 = vunpack.c.l.b16 %v667
      %v2188 = vunpack.c.h.b16 %v667
      %v2189 = vunpack.c.l.b16 %v668
      %v2190 = vunpack.c.h.b16 %v668
      %v2191 = vunpack.c.l.b16 %v669
      %v2192 = vunpack.c.h.b16 %v669
      %v2193 = vunpack.c.l.b16 %v670
      %v2194 = vunpack.c.h.b16 %v670
      %v2195 = vunpack.c.l.b16 %v671
      %v2196 = vunpack.c.h.b16 %v671
      %v2197 = vunpack.c.l.b16 %v672
      %v2198 = vunpack.c.h.b16 %v672
      %v2199 = vunpack.c.l.b16 %v673
      %v2200 = vunpack.c.h.b16 %v673
      %v2201 = vunpack.c.l.b16 %v674
      %v2202 = vunpack.c.h.b16 %v674
      %v2203 = vunpack.c.l.b16 %v675
      %v2204 = vunpack.c.h.b16 %v675
      %v2205 = vunpack.c.l.b16 %v676
      %v2206 = vunpack.c.h.b16 %v676
      %v2207 = vunpack.c.l.b16 %v677
      %v2208 = vunpack.c.h.b16 %v677
      %v2209 = vunpack.c.l.b16 %v678
      %v2210 = vunpack.c.h.b16 %v678
      %v2211 = vunpack.c.l.b16 %v679
      %v2212 = vunpack.c.h.b16 %v679
      %v2213 = vunpack.c.l.b16 %v680
      %v2214 = vunpack.c.h.b16 %v680
      %v2215 = vunpack.c.l.b16 %v681
      %v2216 = vunpack.c.h.b16 %v681
      %v2217 = vunpack.c.l.b16 %v682
      %v2218 = vunpack.c.h.b16 %v682
      %v2219 = vunpack.c.l.b16 %v683
      %v2220 = vunpack.c.h.b16 %v683
      %v2221 = vunpack.c.l.b16 %v684
      %v2222 = vunpack.c.h.b16 %v684
      %v2223 = vunpack.c.l.b16 %v685
      %v2224 = vunpack.c.h.b16 %v685
      %v2225 = vunpack.c.l.b16 %v686
      %v2226 = vunpack.c.h.b16 %v686
      %v2227 = vunpack.c.l.b16 %v687
      %v2228 = vunpack.c.h.b16 %v687
      %v2229 = vunpack.c.l.b16 %v688
      %v2230 = vunpack.c.h.b16 %v688
      %v2231 = vunpack.c.l.b16 %v689
      %v2232 = vunpack.c.h.b16 %v689
      %v2233 = vunpack.c.l.b16 %v690
      %v2234 = vunpack.c.h.b16 %v690
      %v2235 = vunpack.c.l.b16 %v691
      %v2236 = vunpack.c.h.b16 %v691
      %v2237 = vunpack.c.l.b16 %v692
      %v2238 = vunpack.c.h.b16 %v692
      %v2239 = vunpack.c.l.b16 %v693
      %v2240 = vunpack.c.h.b16 %v693
      %v2241 = vunpack.c.l.b16 %v694
      %v2242 = vunpack.c.h.b16 %v694
      %v2243 = vunpack.c.l.b16 %v695
      %v2244 = vunpack.c.h.b16 %v695
      %v2245 = vunpack.c.l.b16 %v696
      %v2246 = vunpack.c.h.b16 %v696
      %v2247 = vunpack.c.l.b16 %v697
      %v2248 = vunpack.c.h.b16 %v697
      %v2249 = vunpack.c.l.b16 %v698
      %v2250 = vunpack.c.h.b16 %v698
      %v2251 = vunpack.c.l.b16 %v699
      %v2252 = vunpack.c.h.b16 %v699
      %v2253 = vunpack.c.l.b16 %v700
      %v2254 = vunpack.c.h.b16 %v700
      %v2255 = vunpack.c.l.b16 %v701
      %v2256 = vunpack.c.h.b16 %v701
      %v2257 = vunpack.c.l.b16 %v702
      %v2258 = vunpack.c.h.b16 %v702
      %v2259 = vunpack.c.l.b16 %v703
      %v2260 = vunpack.c.h.b16 %v703
      %v2261 = vunpack.c.l.b16 %v704
      %v2262 = vunpack.c.h.b16 %v704
      %v2263 = vunpack.c.l.b16 %v705
      %v2264 = vunpack.c.h.b16 %v705
      %v2265 = vunpack.c.l.b16 %v706
      %v2266 = vunpack.c.h.b16 %v706
      %v2267 = vunpack.c.l.b16 %v707
      %v2268 = vunpack.c.h.b16 %v707
      %v2269 = vunpack.c.l.b16 %v708
      %v2270 = vunpack.c.h.b16 %v708
      %v2271 = vunpack.c.l.b16 %v709
      %v2272 = vunpack.c.h.b16 %v709
      %v2273 = vunpack.c.l.b16 %v710
      %v2274 = vunpack.c.h.b16 %v710
      %v2275 = vunpack.c.l.b16 %v711
      %v2276 = vunpack.c.h.b16 %v711
      %v2277 = vunpack.c.l.b16 %v712
      %v2278 = vunpack.c.h.b16 %v712
      %v2279 = vunpack.c.l.b16 %v713
      %v2280 = vunpack.c.h.b16 %v713
      %v2281 = vunpack.c.l.b16 %v714
      %v2282 = vunpack.c.h.b16 %v714
      %v2283 = vunpack.c.l.b16 %v715
      %v2284 = vunpack.c.h.b16 %v715
      %v2285 = vunpack.c.l.b16 %v716
      %v2286 = vunpack.c.h.b16 %v716
      %v2287 = vunpack.c.l.b16 %v717
      %v2288 = vunpack.c.h.b16 %v717
      %v2289 = vunpack.c.l.b16 %v718
      %v2290 = vunpack.c.h.b16 %v718
      %v2291 = vunpack.c.l.b16 %v719
      %v2292 = vunpack.c.h.b16 %v719
      %v2293 = vunpack.c.l.b16 %v720
      %v2294 = vunpack.c.h.b16 %v720
      %v2295 = vunpack.c.l.b16 %v721
      %v2296 = vunpack.c.h.b16 %v721
      %v2297 = vunpack.c.l.b16 %v722
      %v2298 = vunpack.c.h.b16 %v722
      %v2299 = vunpack.c.l.b16 %v723
      %v2300 = vunpack.c.h.b16 %v723
      %v2301 = vunpack.c.l.b16 %v724
      %v2302 = vunpack.c.h.b16 %v724
      %v2303 = vunpack.c.l.b16 %v725
      %v2304 = vunpack.c.h.b16 %v725
      %v2305 = vunpack.c.l.b16 %v726
      %v2306 = vunpack.c.h.b16 %v726
      %v2307 = vunpack.c.l.b16 %v727
      %v2308 = vunpack.c.h.b16 %v727
      %v2309 = vunpack.c.l.b16 %v728
      %v2310 = vunpack.c.h.b16 %v728
      %v2311 = vunpack.c.l.b16 %v729
      %v2312 = vunpack.c.h.b16 %v729
      %v2313 = vunpack.c.l.b16 %v730
      %v2314 = vunpack.c.h.b16 %v730
      %v2315 = vunpack.c.l.b16 %v731
      %v2316 = vunpack.c.h.b16 %v731
      %v2317 = vunpack.c.l.b16 %v732
      %v2318 = vunpack.c.h.b16 %v732
      %v2319 = vunpack.c.l.b16 %v733
      %v2320 = vunpack.c.h.b16 %v733
      %v2321 = vunpack.c.l.b16 %v734
      %v2322 = vunpack.c.h.b16 %v734
      %v2323 = vunpack.c.l.b16 %v735
      %v2324 = vunpack.c.h.b16 %v735
      %v2325 = vunpack.c.l.b16 %v736
      %v2326 = vunpack.c.h.b16 %v736
      %v2327 = vunpack.c.l.b16 %v737
      %v2328 = vunpack.c.h.b16 %v737
      %v2329 = vunpack.c.l.b16 %v738
      %v2330 = vunpack.c.h.b16 %v738
      %v2331 = vunpack.c.l.b16 %v739
      %v2332 = vunpack.c.h.b16 %v739
      %v2333 = vunpack.c.l.b16 %v740
      %v2334 = vunpack.c.h.b16 %v740
      %v2335 = vunpack.c.l.b16 %v741
      %v2336 = vunpack.c.h.b16 %v741
      %v2337 = vunpack.c.l.b16 %v742
      %v2338 = vunpack.c.h.b16 %v742
      %v2339 = vunpack.c.l.b16 %v743
      %v2340 = vunpack.c.h.b16 %v743
      %v2341 = vunpack.c.l.b16 %v744
      %v2342 = vunpack.c.h.b16 %v744
      %v2343 = vunpack.c.l.b16 %v745
      %v2344 = vunpack.c.h.b16 %v745
      %v2345 = vunpack.c.l.b16 %v746
      %v2346 = vunpack.c.h.b16 %v746
      %v2347 = vunpack.c.l.b16 %v747
      %v2348 = vunpack.c.h.b16 %v747
      %v2349 = vpack.c.b16 %v1353, %v1349
      %v2350 = vpack.c.b16 %v1354, %v1350
      %v2351 = vpack.c.b16 %v1355, %v1351
      %v2352 = vpack.c.b16 %v1356, %v1352
      %v2353 = vpack.c.b16 %v1361, %v1357
      %v2354 = vpack.c.b16 %v1362, %v1358
      %v2355 = vpack.c.b16 %v1363, %v1359
      %v2356 = vpack.c.b16 %v1364, %v1360
      %v2357 = vpack.c.b16 %v1369, %v1365
      %v2358 = vpack.c.b16 %v1370, %v1366
      %v2359 = vpack.c.b16 %v1371, %v1367
      %v2360 = vpack.c.b16 %v1372, %v1368
      %v2361 = vpack.c.b16 %v1377, %v1373
      %v2362 = vpack.c.b16 %v1378, %v1374
      %v2363 = vpack.c.b16 %v1379, %v1375
      %v2364 = vpack.c.b16 %v1380, %v1376
      %v2365 = vpack.c.b16 %v1385, %v1381
      %v2366 = vpack.c.b16 %v1386, %v1382
      %v2367 = vpack.c.b16 %v1387, %v1383
      %v2368 = vpack.c.b16 %v1388, %v1384
      %v2369 = vpack.c.b16 %v1393, %v1389
      %v2370 = vpack.c.b16 %v1394, %v1390
      %v2371 = vpack.c.b16 %v1395, %v1391
      %v2372 = vpack.c.b16 %v1396, %v1392
      %v2373 = vpack.c.b16 %v1401, %v1397
      %v2374 = vpack.c.b16 %v1402, %v1398
      %v2375 = vpack.c.b16 %v1403, %v1399
      %v2376 = vpack.c.b16 %v1404, %v1400
      %v2377 = vpack.c.b16 %v1409, %v1405
      %v2378 = vpack.c.b16 %v1410, %v1406
      %v2379 = vpack.c.b16 %v1411, %v1407
      %v2380 = vpack.c.b16 %v1412, %v1408
      %v2381 = vpack.c.b16 %v1417, %v1413
      %v2382 = vpack.c.b16 %v1418, %v1414
      %v2383 = vpack.c.b16 %v1419, %v1415
      %v2384 = vpack.c.b16 %v1420, %v1416
      %v2385 = vpack.c.b16 %v1425, %v1421
      %v2386 = vpack.c.b16 %v1426, %v1422
      %v2387 = vpack.c.b16 %v1427, %v1423
      %v2388 = vpack.c.b16 %v1428, %v1424
      %v2389 = vpack.c.b16 %v1433, %v1429
      %v2390 = vpack.c.b16 %v1434, %v1430
      %v2391 = vpack.c.b16 %v1435, %v1431
      %v2392 = vpack.c.b16 %v1436, %v1432
      %v2393 = vpack.c.b16 %v1441, %v1437
      %v2394 = vpack.c.b16 %v1442, %v1438
      %v2395 = vpack.c.b16 %v1443, %v1439
      %v2396 = vpack.c.b16 %v1444, %v1440
      %v2397 = vpack.c.b16 %v1449, %v1445
      %v2398 = vpack.c.b16 %v1450, %v1446
      %v2399 = vpack.c.b16 %v1451, %v1447
      %v2400 = vpack.c.b16 %v1452, %v1448
      %v2401 = vpack.c.b16 %v1457, %v1453
      %v2402 = vpack.c.b16 %v1458, %v1454
      %v2403 = vpack.c.b16 %v1459, %v1455
      %v2404 = vpack.c.b16 %v1460, %v1456
      %v2405 = vpack.c.b16 %v1465, %v1461
      %v2406 = vpack.c.b16 %v1466, %v1462
      %v2407 = vpack.c.b16 %v1467, %v1463
      %v2408 = vpack.c.b16 %v1468, %v1464
      %v2409 = vpack.c.b16 %v1473, %v1469
      %v2410 = vpack.c.b16 %v1474, %v1470
      %v2411 = vpack.c.b16 %v1475, %v1471
      %v2412 = vpack.c.b16 %v1476, %v1472
      %v2413 = vpack.c.b16 %v1481, %v1477
      %v2414 = vpack.c.b16 %v1482, %v1478
      %v2415 = vpack.c.b16 %v1483, %v1479
      %v2416 = vpack.c.b16 %v1484, %v1480
      %v2417 = vpack.c.b16 %v1489, %v1485
      %v2418 = vpack.c.b16 %v1490, %v1486
      %v2419 = vpack.c.b16 %v1491, %v1487
      %v2420 = vpack.c.b16 %v1492, %v1488
      %v2421 = vpack.c.b16 %v1497, %v1493
      %v2422 = vpack.c.b16 %v1498, %v1494
      %v2423 = vpack.c.b16 %v1499, %v1495
      %v2424 = vpack.c.b16 %v1500, %v1496
      %v2425 = vpack.c.b16 %v1505, %v1501
      %v2426 = vpack.c.b16 %v1506, %v1502
      %v2427 = vpack.c.b16 %v1507, %v1503
      %v2428 = vpack.c.b16 %v1508, %v1504
      %v2429 = vpack.c.b16 %v1513, %v1509
      %v2430 = vpack.c.b16 %v1514, %v1510
      %v2431 = vpack.c.b16 %v1515, %v1511
      %v2432 = vpack.c.b16 %v1516, %v1512
      %v2433 = vpack.c.b16 %v1521, %v1517
      %v2434 = vpack.c.b16 %v1522, %v1518
      %v2435 = vpack.c.b16 %v1523, %v1519
      %v2436 = vpack.c.b16 %v1524, %v1520
      %v2437 = vpack.c.b16 %v1529, %v1525
      %v2438 = vpack.c.b16 %v1530, %v1526
      %v2439 = vpack.c.b16 %v1531, %v1527
      %v2440 = vpack.c.b16 %v1532, %v1528
      %v2441 = vpack.c.b16 %v1537, %v1533
      %v2442 = vpack.c.b16 %v1538, %v1534
      %v2443 = vpack.c.b16 %v1539, %v1535
      %v2444 = vpack.c.b16 %v1540, %v1536
      %v2445 = vpack.c.b16 %v1545, %v1541
      %v2446 = vpack.c.b16 %v1546, %v1542
      %v2447 = vpack.c.b16 %v1547, %v1543
      %v2448 = vpack.c.b16 %v1548, %v1544
      %v2449 = vpack.c.b16 %v1553, %v1549
      %v2450 = vpack.c.b16 %v1554, %v1550
      %v2451 = vpack.c.b16 %v1555, %v1551
      %v2452 = vpack.c.b16 %v1556, %v1552
      %v2453 = vpack.c.b16 %v1561, %v1557
      %v2454 = vpack.c.b16 %v1562, %v1558
      %v2455 = vpack.c.b16 %v1563, %v1559
      %v2456 = vpack.c.b16 %v1564, %v1560
      %v2457 = vpack.c.b16 %v1569, %v1565
      %v2458 = vpack.c.b16 %v1570, %v1566
      %v2459 = vpack.c.b16 %v1571, %v1567
      %v2460 = vpack.c.b16 %v1572, %v1568
      %v2461 = vpack.c.b16 %v1577, %v1573
      %v2462 = vpack.c.b16 %v1578, %v1574
      %v2463 = vpack.c.b16 %v1579, %v1575
      %v2464 = vpack.c.b16 %v1580, %v1576
      %v2465 = vpack.c.b16 %v1585, %v1581
      %v2466 = vpack.c.b16 %v1586, %v1582
      %v2467 = vpack.c.b16 %v1587, %v1583
      %v2468 = vpack.c.b16 %v1588, %v1584
      %v2469 = vpack.c.b16 %v1593, %v1589
      %v2470 = vpack.c.b16 %v1594, %v1590
      %v2471 = vpack.c.b16 %v1595, %v1591
      %v2472 = vpack.c.b16 %v1596, %v1592
      %v2473 = vpack.c.b16 %v1601, %v1597
      %v2474 = vpack.c.b16 %v1602, %v1598
      %v2475 = vpack.c.b16 %v1603, %v1599
      %v2476 = vpack.c.b16 %v1604, %v1600
      %v2477 = vpack.c.b16 %v1609, %v1605
      %v2478 = vpack.c.b16 %v1610, %v1606
      %v2479 = vpack.c.b16 %v1611, %v1607
      %v2480 = vpack.c.b16 %v1612, %v1608
      %v2481 = vpack.c.b16 %v1617, %v1613
      %v2482 = vpack.c.b16 %v1618, %v1614
      %v2483 = vpack.c.b16 %v1619, %v1615
      %v2484 = vpack.c.b16 %v1620, %v1616
      %v2485 = vpack.c.b16 %v1625, %v1621
      %v2486 = vpack.c.b16 %v1626, %v1622
      %v2487 = vpack.c.b16 %v1627, %v1623
      %v2488 = vpack.c.b16 %v1628, %v1624
      %v2489 = vpack.c.b16 %v1633, %v1629
      %v2490 = vpack.c.b16 %v1634, %v1630
      %v2491 = vpack.c.b16 %v1635, %v1631
      %v2492 = vpack.c.b16 %v1636, %v1632
      %v2493 = vpack.c.b16 %v1641, %v1637
      %v2494 = vpack.c.b16 %v1642, %v1638
      %v2495 = vpack.c.b16 %v1643, %v1639
      %v2496 = vpack.c.b16 %v1644, %v1640
      %v2497 = vpack.c.b16 %v1649, %v1645
      %v2498 = vpack.c.b16 %v1650, %v1646
      %v2499 = vpack.c.b16 %v1651, %v1647
      %v2500 = vpack.c.b16 %v1652, %v1648
      %v2501 = vpack.c.b16 %v1657, %v1653
      %v2502 = vpack.c.b16 %v1658, %v1654
      %v2503 = vpack.c.b16 %v1659, %v1655
      %v2504 = vpack.c.b16 %v1660, %v1656
      %v2505 = vpack.c.b16 %v1665, %v1661
      %v2506 = vpack.c.b16 %v1666, %v1662
      %v2507 = vpack.c.b16 %v1667, %v1663
      %v2508 = vpack.c.b16 %v1668, %v1664
      %v2509 = vpack.c.b16 %v1673, %v1669
      %v2510 = vpack.c.b16 %v1674, %v1670
      %v2511 = vpack.c.b16 %v1675, %v1671
      %v2512 = vpack.c.b16 %v1676, %v1672
      %v2513 = vpack.c.b16 %v1681, %v1677
      %v2514 = vpack.c.b16 %v1682, %v1678
      %v2515 = vpack.c.b16 %v1683, %v1679
      %v2516 = vpack.c.b16 %v1684, %v1680
      %v2517 = vpack.c.b16 %v1689, %v1685
      %v2518 = vpack.c.b16 %v1690, %v1686
      %v2519 = vpack.c.b16 %v1691, %v1687
      %v2520 = vpack.c.b16 %v1692, %v1688
      %v2521 = vpack.c.b16 %v1697, %v1693
      %v2522 = vpack.c.b16 %v1698, %v1694
      %v2523 = vpack.c.b16 %v1699, %v1695
      %v2524 = vpack.c.b16 %v1700, %v1696
      %v2525 = vpack.c.b16 %v1705, %v1701
      %v2526 = vpack.c.b16 %v1706, %v1702
      %v2527 = vpack.c.b16 %v1707, %v1703
      %v2528 = vpack.c.b16 %v1708, %v1704
      %v2529 = vpack.c.b16 %v1713, %v1709
      %v2530 = vpack.c.b16 %v1714, %v1710
      %v2531 = vpack.c.b16 %v1715, %v1711
      %v2532 = vpack.c.b16 %v1716, %v1712
      %v2533 = vpack.c.b16 %v1721, %v1717
      %v2534 = vpack.c.b16 %v1722, %v1718
      %v2535 = vpack.c.b16 %v1723, %v1719
      %v2536 = vpack.c.b16 %v1724, %v1720
      %v2537 = vpack.c.b16 %v1729, %v1725
      %v2538 = vpack.c.b16 %v1730, %v1726
      %v2539 = vpack.c.b16 %v1731, %v1727
      %v2540 = vpack.c.b16 %v1732, %v1728
      %v2541 = vpack.c.b16 %v1737, %v1733
      %v2542 = vpack.c.b16 %v1738, %v1734
      %v2543 = vpack.c.b16 %v1739, %v1735
      %v2544 = vpack.c.b16 %v1740, %v1736
      %v2545 = vpack.c.b16 %v1745, %v1741
      %v2546 = vpack.c.b16 %v1746, %v1742
      %v2547 = vpack.c.b16 %v1747, %v1743
      %v2548 = vpack.c.b16 %v1748, %v1744
      %v2549 = vpack.c.b16 %v1753, %v1749
      %v2550 = vpack.c.b16 %v1754, %v1750
      %v2551 = vpack.c.b16 %v1755, %v1751
      %v2552 = vpack.c.b16 %v1756, %v1752
      %v2553 = vpack.c.b16 %v1761, %v1757
      %v2554 = vpack.c.b16 %v1762, %v1758
      %v2555 = vpack.c.b16 %v1763, %v1759
      %v2556 = vpack.c.b16 %v1764, %v1760
      %v2557 = vpack.c.b16 %v1769, %v1765
      %v2558 = vpack.c.b16 %v1770, %v1766
      %v2559 = vpack.c.b16 %v1771, %v1767
      %v2560 = vpack.c.b16 %v1772, %v1768
      %v2561 = vpack.c.b16 %v1777, %v1773
      %v2562 = vpack.c.b16 %v1778, %v1774
      %v2563 = vpack.c.b16 %v1779, %v1775
      %v2564 = vpack.c.b16 %v1780, %v1776
      %v2565 = vpack.c.b16 %v1785, %v1781
      %v2566 = vpack.c.b16 %v1786, %v1782
      %v2567 = vpack.c.b16 %v1787, %v1783
      %v2568 = vpack.c.b16 %v1788, %v1784
      %v2569 = vpack.c.b16 %v1793, %v1789
      %v2570 = vpack.c.b16 %v1794, %v1790
      %v2571 = vpack.c.b16 %v1795, %v1791
      %v2572 = vpack.c.b16 %v1796, %v1792
      %v2573 = vpack.c.b16 %v1801, %v1797
      %v2574 = vpack.c.b16 %v1802, %v1798
      %v2575 = vpack.c.b16 %v1803, %v1799
      %v2576 = vpack.c.b16 %v1804, %v1800
      %v2577 = vpack.c.b16 %v1809, %v1805
      %v2578 = vpack.c.b16 %v1810, %v1806
      %v2579 = vpack.c.b16 %v1811, %v1807
      %v2580 = vpack.c.b16 %v1812, %v1808
      %v2581 = vpack.c.b16 %v1817, %v1813
      %v2582 = vpack.c.b16 %v1818, %v1814
      %v2583 = vpack.c.b16 %v1819, %v1815
      %v2584 = vpack.c.b16 %v1820, %v1816
      %v2585 = vpack.c.b16 %v1825, %v1821
      %v2586 = vpack.c.b16 %v1826, %v1822
      %v2587 = vpack.c.b16 %v1827, %v1823
      %v2588 = vpack.c.b16 %v1828, %v1824
      %v2589 = vpack.c.b16 %v1833, %v1829
      %v2590 = vpack.c.b16 %v1834, %v1830
      %v2591 = vpack.c.b16 %v1835, %v1831
      %v2592 = vpack.c.b16 %v1836, %v1832
      %v2593 = vpack.c.b16 %v1841, %v1837
      %v2594 = vpack.c.b16 %v1842, %v1838
      %v2595 = vpack.c.b16 %v1843, %v1839
      %v2596 = vpack.c.b16 %v1844, %v1840
      %v2597 = vpack.c.b16 %v1849, %v1845
      %v2598 = vpack.c.b16 %v1850, %v1846
      %v2599 = vpack.c.b16 %v1851, %v1847
      %v2600 = vpack.c.b16 %v1852, %v1848
      %v2601 = vpack.c.b16 %v1857, %v1853
      %v2602 = vpack.c.b16 %v1858, %v1854
      %v2603 = vpack.c.b16 %v1859, %v1855
      %v2604 = vpack.c.b16 %v1860, %v1856
      %v2605 = vpack.c.b16 %v1865, %v1861
      %v2606 = vpack.c.b16 %v1866, %v1862
      %v2607 = vpack.c.b16 %v1867, %v1863
      %v2608 = vpack.c.b16 %v1868, %v1864
      %v2609 = vpack.c.b16 %v1873, %v1869
      %v2610 = vpack.c.b16 %v1874, %v1870
      %v2611 = vpack.c.b16 %v1875, %v1871
      %v2612 = vpack.c.b16 %v1876, %v1872
      %v2613 = vpack.c.b16 %v1881, %v1877
      %v2614 = vpack.c.b16 %v1882, %v1878
      %v2615 = vpack.c.b16 %v1883, %v1879
      %v2616 = vpack.c.b16 %v1884, %v1880
      %v2617 = vpack.c.b16 %v1889, %v1885
      %v2618 = vpack.c.b16 %v1890, %v1886
      %v2619 = vpack.c.b16 %v1891, %v1887
      %v2620 = vpack.c.b16 %v1892, %v1888
      %v2621 = vpack.c.b16 %v1897, %v1893
      %v2622 = vpack.c.b16 %v1898, %v1894
      %v2623 = vpack.c.b16 %v1899, %v1895
      %v2624 = vpack.c.b16 %v1900, %v1896
      %v2625 = vpack.c.b16 %v1905, %v1901
      %v2626 = vpack.c.b16 %v1906, %v1902
      %v2627 = vpack.c.b16 %v1907, %v1903
      %v2628 = vpack.c.b16 %v1908, %v1904
      %v2629 = vpack.c.b16 %v1913, %v1909
      %v2630 = vpack.c.b16 %v1914, %v1910
      %v2631 = vpack.c.b16 %v1915, %v1911
      %v2632 = vpack.c.b16 %v1916, %v1912
      %v2633 = vpack.c.b16 %v1921, %v1917
      %v2634 = vpack.c.b16 %v1922, %v1918
      %v2635 = vpack.c.b16 %v1923, %v1919
      %v2636 = vpack.c.b16 %v1924, %v1920
      %v2637 = vpack.c.b16 %v1929, %v1925
      %v2638 = vpack.c.b16 %v1930, %v1926
      %v2639 = vpack.c.b16 %v1931, %v1927
      %v2640 = vpack.c.b16 %v1932, %v1928
      %v2641 = vpack.c.b16 %v1937, %v1933
      %v2642 = vpack.c.b16 %v1938, %v1934
      %v2643 = vpack.c.b16 %v1939, %v1935
      %v2644 = vpack.c.b16 %v1940, %v1936
      %v2645 = vpack.c.b16 %v1945, %v1941
      %v2646 = vpack.c.b16 %v1946, %v1942
      %v2647 = vpack.c.b16 %v1947, %v1943
      %v2648 = vpack.c.b16 %v1948, %v1944
      %v2649 = vpack.c.b16 %v1953, %v1949
      %v2650 = vpack.c.b16 %v1954, %v1950
      %v2651 = vpack.c.b16 %v1955, %v1951
      %v2652 = vpack.c.b16 %v1956, %v1952
      %v2653 = vpack.c.b16 %v1961, %v1957
      %v2654 = vpack.c.b16 %v1962, %v1958
      %v2655 = vpack.c.b16 %v1963, %v1959
      %v2656 = vpack.c.b16 %v1964, %v1960
      %v2657 = vpack.c.b16 %v1969, %v1965
      %v2658 = vpack.c.b16 %v1970, %v1966
      %v2659 = vpack.c.b16 %v1971, %v1967
      %v2660 = vpack.c.b16 %v1972, %v1968
      %v2661 = vpack.c.b16 %v1977, %v1973
      %v2662 = vpack.c.b16 %v1978, %v1974
      %v2663 = vpack.c.b16 %v1979, %v1975
      %v2664 = vpack.c.b16 %v1980, %v1976
      %v2665 = vpack.c.b16 %v1985, %v1981
      %v2666 = vpack.c.b16 %v1986, %v1982
      %v2667 = vpack.c.b16 %v1987, %v1983
      %v2668 = vpack.c.b16 %v1988, %v1984
      %v2669 = vpack.c.b16 %v1993, %v1989
      %v2670 = vpack.c.b16 %v1994, %v1990
      %v2671 = vpack.c.b16 %v1995, %v1991
      %v2672 = vpack.c.b16 %v1996, %v1992
      %v2673 = vpack.c.b16 %v2001, %v1997
      %v2674 = vpack.c.b16 %v2002, %v1998
      %v2675 = vpack.c.b16 %v2003, %v1999
      %v2676 = vpack.c.b16 %v2004, %v2000
      %v2677 = vpack.c.b16 %v2009, %v2005
      %v2678 = vpack.c.b16 %v2010, %v2006
      %v2679 = vpack.c.b16 %v2011, %v2007
      %v2680 = vpack.c.b16 %v2012, %v2008
      %v2681 = vpack.c.b16 %v2017, %v2013
      %v2682 = vpack.c.b16 %v2018, %v2014
      %v2683 = vpack.c.b16 %v2019, %v2015
      %v2684 = vpack.c.b16 %v2020, %v2016
      %v2685 = vpack.c.b16 %v2025, %v2021
      %v2686 = vpack.c.b16 %v2026, %v2022
      %v2687 = vpack.c.b16 %v2027, %v2023
      %v2688 = vpack.c.b16 %v2028, %v2024
      %v2689 = vpack.c.b16 %v2033, %v2029
      %v2690 = vpack.c.b16 %v2034, %v2030
      %v2691 = vpack.c.b16 %v2035, %v2031
      %v2692 = vpack.c.b16 %v2036, %v2032
      %v2693 = vpack.c.b16 %v2041, %v2037
      %v2694 = vpack.c.b16 %v2042, %v2038
      %v2695 = vpack.c.b16 %v2043, %v2039
      %v2696 = vpack.c.b16 %v2044, %v2040
      %v2697 = vpack.c.b16 %v2049, %v2045
      %v2698 = vpack.c.b16 %v2050, %v2046
      %v2699 = vpack.c.b16 %v2051, %v2047
      %v2700 = vpack.c.b16 %v2052, %v2048
      %v2701 = vpack.c.b16 %v2057, %v2053
      %v2702 = vpack.c.b16 %v2058, %v2054
      %v2703 = vpack.c.b16 %v2059, %v2055
      %v2704 = vpack.c.b16 %v2060, %v2056
      %v2705 = vpack.c.b16 %v2065, %v2061
      %v2706 = vpack.c.b16 %v2066, %v2062
      %v2707 = vpack.c.b16 %v2067, %v2063
      %v2708 = vpack.c.b16 %v2068, %v2064
      %v2709 = vpack.c.b16 %v2073, %v2069
      %v2710 = vpack.c.b16 %v2074, %v2070
      %v2711 = vpack.c.b16 %v2075, %v2071
      %v2712 = vpack.c.b16 %v2076, %v2072
      %v2713 = vpack.c.b16 %v2081, %v2077
      %v2714 = vpack.c.b16 %v2082, %v2078
      %v2715 = vpack.c.b16 %v2083, %v2079
      %v2716 = vpack.c.b16 %v2084, %v2080
      %v2717 = vpack.c.b16 %v2089, %v2085
      %v2718 = vpack.c.b16 %v2090, %v2086
      %v2719 = vpack.c.b16 %v2091, %v2087
      %v2720 = vpack.c.b16 %v2092, %v2088
      %v2721 = vpack.c.b16 %v2097, %v2093
      %v2722 = vpack.c.b16 %v2098, %v2094
      %v2723 = vpack.c.b16 %v2099, %v2095
      %v2724 = vpack.c.b16 %v2100, %v2096
      %v2725 = vpack.c.b16 %v2105, %v2101
      %v2726 = vpack.c.b16 %v2106, %v2102
      %v2727 = vpack.c.b16 %v2107, %v2103
      %v2728 = vpack.c.b16 %v2108, %v2104
      %v2729 = vpack.c.b16 %v2113, %v2109
      %v2730 = vpack.c.b16 %v2114, %v2110
      %v2731 = vpack.c.b16 %v2115, %v2111
      %v2732 = vpack.c.b16 %v2116, %v2112
      %v2733 = vpack.c.b16 %v2121, %v2117
      %v2734 = vpack.c.b16 %v2122, %v2118
      %v2735 = vpack.c.b16 %v2123, %v2119
      %v2736 = vpack.c.b16 %v2124, %v2120
      %v2737 = vpack.c.b16 %v2129, %v2125
      %v2738 = vpack.c.b16 %v2130, %v2126
      %v2739 = vpack.c.b16 %v2131, %v2127
      %v2740 = vpack.c.b16 %v2132, %v2128
      %v2741 = vpack.c.b16 %v2137, %v2133
      %v2742 = vpack.c.b16 %v2138, %v2134
      %v2743 = vpack.c.b16 %v2139, %v2135
      %v2744 = vpack.c.b16 %v2140, %v2136
      %v2745 = vpack.c.b16 %v2145, %v2141
      %v2746 = vpack.c.b16 %v2146, %v2142
      %v2747 = vpack.c.b16 %v2147, %v2143
      %v2748 = vpack.c.b16 %v2148, %v2144
      %v2749 = vpack.c.b16 %v2153, %v2149
      %v2750 = vpack.c.b16 %v2154, %v2150
      %v2751 = vpack.c.b16 %v2155, %v2151
      %v2752 = vpack.c.b16 %v2156, %v2152
      %v2753 = vpack.c.b16 %v2161, %v2157
      %v2754 = vpack.c.b16 %v2162, %v2158
      %v2755 = vpack.c.b16 %v2163, %v2159
      %v2756 = vpack.c.b16 %v2164, %v2160
      %v2757 = vpack.c.b16 %v2169, %v2165
      %v2758 = vpack.c.b16 %v2170, %v2166
      %v2759 = vpack.c.b16 %v2171, %v2167
      %v2760 = vpack.c.b16 %v2172, %v2168
      %v2761 = vpack.c.b16 %v2177, %v2173
      %v2762 = vpack.c.b16 %v2178, %v2174
      %v2763 = vpack.c.b16 %v2179, %v2175
      %v2764 = vpack.c.b16 %v2180, %v2176
      %v2765 = vpack.c.b16 %v2185, %v2181
      %v2766 = vpack.c.b16 %v2186, %v2182
      %v2767 = vpack.c.b16 %v2187, %v2183
      %v2768 = vpack.c.b16 %v2188, %v2184
      %v2769 = vpack.c.b16 %v2193, %v2189
      %v2770 = vpack.c.b16 %v2194, %v2190
      %v2771 = vpack.c.b16 %v2195, %v2191
      %v2772 = vpack.c.b16 %v2196, %v2192
      %v2773 = vpack.c.b16 %v2201, %v2197
      %v2774 = vpack.c.b16 %v2202, %v2198
      %v2775 = vpack.c.b16 %v2203, %v2199
      %v2776 = vpack.c.b16 %v2204, %v2200
      %v2777 = vpack.c.b16 %v2209, %v2205
      %v2778 = vpack.c.b16 %v2210, %v2206
      %v2779 = vpack.c.b16 %v2211, %v2207
      %v2780 = vpack.c.b16 %v2212, %v2208
      %v2781 = vpack.c.b16 %v2217, %v2213
      %v2782 = vpack.c.b16 %v2218, %v2214
      %v2783 = vpack.c.b16 %v2219, %v2215
      %v2784 = vpack.c.b16 %v2220, %v2216
      %v2785 = vpack.c.b16 %v2225, %v2221
      %v2786 = vpack.c.b16 %v2226, %v2222
      %v2787 = vpack.c.b16 %v2227, %v2223
      %v2788 = vpack.c.b16 %v2228, %v2224
      %v2789 = vpack.c.b16 %v2233, %v2229
      %v2790 = vpack.c.b16 %v2234, %v2230
      %v2791 = vpack.c.b16 %v2235, %v2231
      %v2792 = vpack.c.b16 %v2236, %v2232
      %v2793 = vpack.c.b16 %v2241, %v2237
      %v2794 = vpack.c.b16 %v2242, %v2238
      %v2795 = vpack.c.b16 %v2243, %v2239
      %v2796 = vpack.c.b16 %v2244, %v2240
      %v2797 = vpack.c.b16 %v2249, %v2245
      %v2798 = vpack.c.b16 %v2250, %v2246
      %v2799 = vpack.c.b16 %v2251, %v2247
      %v2800 = vpack.c.b16 %v2252, %v2248
      %v2801 = vpack.c.b16 %v2257, %v2253
      %v2802 = vpack.c.b16 %v2258, %v2254
      %v2803 = vpack.c.b16 %v2259, %v2255
      %v2804 = vpack.c.b16 %v2260, %v2256
      %v2805 = vpack.c.b16 %v2265, %v2261
      %v2806 = vpack.c.b16 %v2266, %v2262
      %v2807 = vpack.c.b16 %v2267, %v2263
      %v2808 = vpack.c.b16 %v2268, %v2264
      %v2809 = vpack.c.b16 %v2273, %v2269
      %v2810 = vpack.c.b16 %v2274, %v2270
      %v2811 = vpack.c.b16 %v2275, %v2271
      %v2812 = vpack.c.b16 %v2276, %v2272
      %v2813 = vpack.c.b16 %v2281, %v2277
      %v2814 = vpack.c.b16 %v2282, %v2278
      %v2815 = vpack.c.b16 %v2283, %v2279
      %v2816 = vpack.c.b16 %v2284, %v2280
      %v2817 = vpack.c.b16 %v2289, %v2285
      %v2818 = vpack.c.b16 %v2290, %v2286
      %v2819 = vpack.c.b16 %v2291, %v2287
      %v2820 = vpack.c.b16 %v2292, %v2288
      %v2821 = vpack.c.b16 %v2297, %v2293
      %v2822 = vpack.c.b16 %v2298, %v2294
      %v2823 = vpack.c.b16 %v2299, %v2295
      %v2824 = vpack.c.b16 %v2300, %v2296
      %v2825 = vpack.c.b16 %v2305, %v2301
      %v2826 = vpack.c.b16 %v2306, %v2302
      %v2827 = vpack.c.b16 %v2307, %v2303
      %v2828 = vpack.c.b16 %v2308, %v2304
      %v2829 = vpack.c.b16 %v2313, %v2309
      %v2830 = vpack.c.b16 %v2314, %v2310
      %v2831 = vpack.c.b16 %v2315, %v2311
      %v2832 = vpack.c.b16 %v2316, %v2312
      %v2833 = vpack.c.b16 %v2321, %v2317
      %v2834 = vpack.c.b16 %v2322, %v2318
      %v2835 = vpack.c.b16 %v2323, %v2319
      %v2836 = vpack.c.b16 %v2324, %v2320
      %v2837 = vpack.c.b16 %v2329, %v2325
      %v2838 = vpack.c.b16 %v2330, %v2326
      %v2839 = vpack.c.b16 %v2331, %v2327
      %v2840 = vpack.c.b16 %v2332, %v2328
      %v2841 = vpack.c.b16 %v2337, %v2333
      %v2842 = vpack.c.b16 %v2338, %v2334
      %v2843 = vpack.c.b16 %v2339, %v2335
      %v2844 = vpack.c.b16 %v2340, %v2336
      %v2845 = vpack.c.b16 %v2345, %v2341
      %v2846 = vpack.c.b16 %v2346, %v2342
      %v2847 = vpack.c.b16 %v2347, %v2343
      %v2848 = vpack.c.b16 %v2348, %v2344
      %vm3349 = vcmask 654336
      %v3351 = vsel %vm3349, %v833, 0
      %3353 = vmatprep.subr.bf16.mxu0 %v2378
      %3354 = vmatpush1.bf16.msra.mxu0 %v2377
      %3355 = vmatprep.subr.bf16.mxu0 %v2374
      %3356 = vmatpush1.bf16.msra.mxu0 %v2373
      %3357 = vmatprep.subr.bf16.mxu0 %v2370
      %3358 = vmatpush1.bf16.msra.mxu0 %v2369
      %3359 = vmatprep.subr.bf16.mxu0 %v2366
      %3360 = vmatpush1.bf16.msra.mxu0 %v2365
      %3361 = vmatprep.subr.bf16.mxu0 %v2362
      %3362 = vmatpush1.bf16.msra.mxu0 %v2361
      %3363 = vmatprep.subr.bf16.mxu0 %v2358
      %3364 = vmatpush1.bf16.msra.mxu0 %v2357
      %3365 = vmatprep.subr.bf16.mxu0 %v2354
      %3366 = vmatpush1.bf16.msra.mxu0 %v2353
      %3367 = vmatprep.subr.bf16.mxu0 %v2350
      %3368 = vmatpush1.bf16.msra.mxu0 %v2349
      %3369 = vmatprep.subr.bf16.mxu0 %v2410
      %3370 = vmatpush2.bf16.msra.mxu0 %v2409
      %3371 = vmatprep.subr.bf16.mxu0 %v2406
      %3372 = vmatpush2.bf16.msra.mxu0 %v2405
      %3373 = vmatprep.subr.bf16.mxu0 %v2402
      %3374 = vmatpush2.bf16.msra.mxu0 %v2401
      %3375 = vmatprep.subr.bf16.mxu0 %v2398
      %3376 = vmatpush2.bf16.msra.mxu0 %v2397
      %3377 = vmatprep.subr.bf16.mxu0 %v2394
      %3378 = vmatpush2.bf16.msra.mxu0 %v2393
      %3379 = vmatprep.subr.bf16.mxu0 %v2390
      %3380 = vmatpush2.bf16.msra.mxu0 %v2389
      %3381 = vmatprep.subr.bf16.mxu0 %v2386
      %3382 = vmatpush2.bf16.msra.mxu0 %v2385
      %3383 = vmatprep.subr.bf16.mxu0 %v2382
      %3384 = vmatpush2.bf16.msra.mxu0 %v2381
      %3385 = vmatprep.mubr.bf16.mxu0 %v819
      %3386 = vmatmul.mubr.bf16.gmra.mxu0 %v818
      %v3387 = vpop.f32.mrf.mxu0
      %v3388 = vadd.f32 %v753, %v3387
      %v3389 = vpop.f32.mrf.mxu0
      %v3390 = vadd.f32 %v757, %v3389
      %v3391 = vpop.f32.mrf.mxu0
      %v3392 = vadd.f32 %v753, %v3391
      %v3393 = vpop.f32.mrf.mxu0
      %v3394 = vadd.f32 %v757, %v3393
      %3395 = vdwg.mxu0
      %3396 = vmatprep.subr.bf16.mxu0 %v2442
      %3397 = vmatpush1.bf16.msra.mxu0 %v2441
      %3398 = vmatprep.subr.bf16.mxu0 %v2438
      %3399 = vmatpush1.bf16.msra.mxu0 %v2437
      %3400 = vmatprep.subr.bf16.mxu0 %v2434
      %3401 = vmatpush1.bf16.msra.mxu0 %v2433
      %3402 = vmatprep.subr.bf16.mxu0 %v2430
      %3403 = vmatpush1.bf16.msra.mxu0 %v2429
      %3404 = vmatprep.subr.bf16.mxu0 %v2426
      %3405 = vmatpush1.bf16.msra.mxu0 %v2425
      %3406 = vmatprep.subr.bf16.mxu0 %v2422
      %3407 = vmatpush1.bf16.msra.mxu0 %v2421
      %3408 = vmatprep.subr.bf16.mxu0 %v2418
      %3409 = vmatpush1.bf16.msra.mxu0 %v2417
      %3410 = vmatprep.subr.bf16.mxu0 %v2414
      %3411 = vmatpush1.bf16.msra.mxu0 %v2413
      %3412 = vmatprep.subr.bf16.mxu0 %v2474
      %3413 = vmatpush2.bf16.msra.mxu0 %v2473
      %3414 = vmatprep.subr.bf16.mxu0 %v2470
      %3415 = vmatpush2.bf16.msra.mxu0 %v2469
      %3416 = vmatprep.subr.bf16.mxu0 %v2466
      %3417 = vmatpush2.bf16.msra.mxu0 %v2465
      %3418 = vmatprep.subr.bf16.mxu0 %v2462
      %3419 = vmatpush2.bf16.msra.mxu0 %v2461
      %3420 = vmatprep.subr.bf16.mxu0 %v2458
      %3421 = vmatpush2.bf16.msra.mxu0 %v2457
      %3422 = vmatprep.subr.bf16.mxu0 %v2454
      %3423 = vmatpush2.bf16.msra.mxu0 %v2453
      %3424 = vmatprep.subr.bf16.mxu0 %v2450
      %3425 = vmatpush2.bf16.msra.mxu0 %v2449
      %3426 = vmatprep.subr.bf16.mxu0 %v2446
      %3427 = vmatpush2.bf16.msra.mxu0 %v2445
      %3428 = vmatprep.mubr.bf16.mxu0 %v821
      %3429 = vmatmul.mubr.bf16.gmra.mxu0 %v820
      %v3430 = vpop.f32.mrf.mxu0
      %v3431 = vadd.f32 %v3388, %v3430
      %v3432 = vpop.f32.mrf.mxu0
      %v3433 = vadd.f32 %v3390, %v3432
      %v3434 = vpop.f32.mrf.mxu0
      %v3435 = vadd.f32 %v3392, %v3434
      %v3436 = vpop.f32.mrf.mxu0
      %v3437 = vadd.f32 %v3394, %v3436
      %3438 = vdwg.mxu0
      %3439 = vmatprep.subr.bf16.mxu0 %v2506
      %3440 = vmatpush1.bf16.msra.mxu0 %v2505
      %3441 = vmatprep.subr.bf16.mxu0 %v2502
      %3442 = vmatpush1.bf16.msra.mxu0 %v2501
      %3443 = vmatprep.subr.bf16.mxu0 %v2498
      %3444 = vmatpush1.bf16.msra.mxu0 %v2497
      %3445 = vmatprep.subr.bf16.mxu0 %v2494
      %3446 = vmatpush1.bf16.msra.mxu0 %v2493
      %3447 = vmatprep.subr.bf16.mxu0 %v2490
      %3448 = vmatpush1.bf16.msra.mxu0 %v2489
      %3449 = vmatprep.subr.bf16.mxu0 %v2486
      %3450 = vmatpush1.bf16.msra.mxu0 %v2485
      %3451 = vmatprep.subr.bf16.mxu0 %v2482
      %3452 = vmatpush1.bf16.msra.mxu0 %v2481
      %3453 = vmatprep.subr.bf16.mxu0 %v2478
      %3454 = vmatpush1.bf16.msra.mxu0 %v2477
      %3455 = vmatprep.subr.bf16.mxu0 %v2538
      %3456 = vmatpush2.bf16.msra.mxu0 %v2537
      %3457 = vmatprep.subr.bf16.mxu0 %v2534
      %3458 = vmatpush2.bf16.msra.mxu0 %v2533
      %3459 = vmatprep.subr.bf16.mxu0 %v2530
      %3460 = vmatpush2.bf16.msra.mxu0 %v2529
      %3461 = vmatprep.subr.bf16.mxu0 %v2526
      %3462 = vmatpush2.bf16.msra.mxu0 %v2525
      %3463 = vmatprep.subr.bf16.mxu0 %v2522
      %3464 = vmatpush2.bf16.msra.mxu0 %v2521
      %3465 = vmatprep.subr.bf16.mxu0 %v2518
      %3466 = vmatpush2.bf16.msra.mxu0 %v2517
      %3467 = vmatprep.subr.bf16.mxu0 %v2514
      %3468 = vmatpush2.bf16.msra.mxu0 %v2513
      %3469 = vmatprep.subr.bf16.mxu0 %v2510
      %3470 = vmatpush2.bf16.msra.mxu0 %v2509
      %3471 = vmatprep.mubr.bf16.mxu0 %v823
      %3472 = vmatmul.mubr.bf16.gmra.mxu0 %v822
      %v3473 = vpop.f32.mrf.mxu0
      %v3474 = vadd.f32 %v3431, %v3473
      %v3475 = vpop.f32.mrf.mxu0
      %v3476 = vadd.f32 %v3433, %v3475
      %v3477 = vpop.f32.mrf.mxu0
      %v3478 = vadd.f32 %v3435, %v3477
      %v3479 = vpop.f32.mrf.mxu0
      %v3480 = vadd.f32 %v3437, %v3479
      %3481 = vdwg.mxu0
      %3482 = vmatprep.subr.bf16.mxu0 %v2570
      %3483 = vmatpush1.bf16.msra.mxu0 %v2569
      %3484 = vmatprep.subr.bf16.mxu0 %v2566
      %3485 = vmatpush1.bf16.msra.mxu0 %v2565
      %3486 = vmatprep.subr.bf16.mxu0 %v2562
      %3487 = vmatpush1.bf16.msra.mxu0 %v2561
      %3488 = vmatprep.subr.bf16.mxu0 %v2558
      %3489 = vmatpush1.bf16.msra.mxu0 %v2557
      %3490 = vmatprep.subr.bf16.mxu0 %v2554
      %3491 = vmatpush1.bf16.msra.mxu0 %v2553
      %3492 = vmatprep.subr.bf16.mxu0 %v2550
      %3493 = vmatpush1.bf16.msra.mxu0 %v2549
      %3494 = vmatprep.subr.bf16.mxu0 %v2546
      %3495 = vmatpush1.bf16.msra.mxu0 %v2545
      %3496 = vmatprep.subr.bf16.mxu0 %v2542
      %3497 = vmatpush1.bf16.msra.mxu0 %v2541
      %3498 = vmatprep.subr.bf16.mxu0 %v2602
      %3499 = vmatpush2.bf16.msra.mxu0 %v2601
      %3500 = vmatprep.subr.bf16.mxu0 %v2598
      %3501 = vmatpush2.bf16.msra.mxu0 %v2597
      %3502 = vmatprep.subr.bf16.mxu0 %v2594
      %3503 = vmatpush2.bf16.msra.mxu0 %v2593
      %3504 = vmatprep.subr.bf16.mxu0 %v2590
      %3505 = vmatpush2.bf16.msra.mxu0 %v2589
      %3506 = vmatprep.subr.bf16.mxu0 %v2586
      %3507 = vmatpush2.bf16.msra.mxu0 %v2585
      %3508 = vmatprep.subr.bf16.mxu0 %v2582
      %3509 = vmatpush2.bf16.msra.mxu0 %v2581
      %3510 = vmatprep.subr.bf16.mxu0 %v2578
      %3511 = vmatpush2.bf16.msra.mxu0 %v2577
      %3512 = vmatprep.subr.bf16.mxu0 %v2574
      %3513 = vmatpush2.bf16.msra.mxu0 %v2573
      %3514 = vmatprep.mubr.bf16.mxu0 %v825
      %3515 = vmatmul.mubr.bf16.gmra.mxu0 %v824
      %v3516 = vpop.f32.mrf.mxu0
      %v3517 = vadd.f32 %v3474, %v3516
      %v3518 = vpop.f32.mrf.mxu0
      %v3519 = vadd.f32 %v3476, %v3518
      %v3520 = vpop.f32.mrf.mxu0
      %v3521 = vadd.f32 %v3478, %v3520
      %v3522 = vpop.f32.mrf.mxu0
      %v3523 = vadd.f32 %v3480, %v3522
      %3524 = vdwg.mxu0
      %3525 = vmatprep.subr.bf16.mxu0 %v2634
      %3526 = vmatpush1.bf16.msra.mxu0 %v2633
      %3527 = vmatprep.subr.bf16.mxu0 %v2630
      %3528 = vmatpush1.bf16.msra.mxu0 %v2629
      %3529 = vmatprep.subr.bf16.mxu0 %v2626
      %3530 = vmatpush1.bf16.msra.mxu0 %v2625
      %3531 = vmatprep.subr.bf16.mxu0 %v2622
      %3532 = vmatpush1.bf16.msra.mxu0 %v2621
      %3533 = vmatprep.subr.bf16.mxu0 %v2618
      %3534 = vmatpush1.bf16.msra.mxu0 %v2617
      %3535 = vmatprep.subr.bf16.mxu0 %v2614
      %3536 = vmatpush1.bf16.msra.mxu0 %v2613
      %3537 = vmatprep.subr.bf16.mxu0 %v2610
      %3538 = vmatpush1.bf16.msra.mxu0 %v2609
      %3539 = vmatprep.subr.bf16.mxu0 %v2606
      %3540 = vmatpush1.bf16.msra.mxu0 %v2605
      %3541 = vmatprep.subr.bf16.mxu0 %v2666
      %3542 = vmatpush2.bf16.msra.mxu0 %v2665
      %3543 = vmatprep.subr.bf16.mxu0 %v2662
      %3544 = vmatpush2.bf16.msra.mxu0 %v2661
      %3545 = vmatprep.subr.bf16.mxu0 %v2658
      %3546 = vmatpush2.bf16.msra.mxu0 %v2657
      %3547 = vmatprep.subr.bf16.mxu0 %v2654
      %3548 = vmatpush2.bf16.msra.mxu0 %v2653
      %3549 = vmatprep.subr.bf16.mxu0 %v2650
      %3550 = vmatpush2.bf16.msra.mxu0 %v2649
      %3551 = vmatprep.subr.bf16.mxu0 %v2646
      %3552 = vmatpush2.bf16.msra.mxu0 %v2645
      %3553 = vmatprep.subr.bf16.mxu0 %v2642
      %3554 = vmatpush2.bf16.msra.mxu0 %v2641
      %3555 = vmatprep.subr.bf16.mxu0 %v2638
      %3556 = vmatpush2.bf16.msra.mxu0 %v2637
      %3557 = vmatprep.mubr.bf16.mxu0 %v827
      %3558 = vmatmul.mubr.bf16.gmra.mxu0 %v826
      %v3559 = vpop.f32.mrf.mxu0
      %v3560 = vadd.f32 %v3517, %v3559
      %v3561 = vpop.f32.mrf.mxu0
      %v3562 = vadd.f32 %v3519, %v3561
      %v3563 = vpop.f32.mrf.mxu0
      %v3564 = vadd.f32 %v3521, %v3563
      %v3565 = vpop.f32.mrf.mxu0
      %v3566 = vadd.f32 %v3523, %v3565
      %3567 = vdwg.mxu0
      %3568 = vmatprep.subr.bf16.mxu0 %v2698
      %3569 = vmatpush1.bf16.msra.mxu0 %v2697
      %3570 = vmatprep.subr.bf16.mxu0 %v2694
      %3571 = vmatpush1.bf16.msra.mxu0 %v2693
      %3572 = vmatprep.subr.bf16.mxu0 %v2690
      %3573 = vmatpush1.bf16.msra.mxu0 %v2689
      %3574 = vmatprep.subr.bf16.mxu0 %v2686
      %3575 = vmatpush1.bf16.msra.mxu0 %v2685
      %3576 = vmatprep.subr.bf16.mxu0 %v2682
      %3577 = vmatpush1.bf16.msra.mxu0 %v2681
      %3578 = vmatprep.subr.bf16.mxu0 %v2678
      %3579 = vmatpush1.bf16.msra.mxu0 %v2677
      %3580 = vmatprep.subr.bf16.mxu0 %v2674
      %3581 = vmatpush1.bf16.msra.mxu0 %v2673
      %3582 = vmatprep.subr.bf16.mxu0 %v2670
      %3583 = vmatpush1.bf16.msra.mxu0 %v2669
      %3584 = vmatprep.subr.bf16.mxu0 %v2730
      %3585 = vmatpush2.bf16.msra.mxu0 %v2729
      %3586 = vmatprep.subr.bf16.mxu0 %v2726
      %3587 = vmatpush2.bf16.msra.mxu0 %v2725
      %3588 = vmatprep.subr.bf16.mxu0 %v2722
      %3589 = vmatpush2.bf16.msra.mxu0 %v2721
      %3590 = vmatprep.subr.bf16.mxu0 %v2718
      %3591 = vmatpush2.bf16.msra.mxu0 %v2717
      %3592 = vmatprep.subr.bf16.mxu0 %v2714
      %3593 = vmatpush2.bf16.msra.mxu0 %v2713
      %3594 = vmatprep.subr.bf16.mxu0 %v2710
      %3595 = vmatpush2.bf16.msra.mxu0 %v2709
      %3596 = vmatprep.subr.bf16.mxu0 %v2706
      %3597 = vmatpush2.bf16.msra.mxu0 %v2705
      %3598 = vmatprep.subr.bf16.mxu0 %v2702
      %3599 = vmatpush2.bf16.msra.mxu0 %v2701
      %3600 = vmatprep.mubr.bf16.mxu0 %v829
      %3601 = vmatmul.mubr.bf16.gmra.mxu0 %v828
      %v3602 = vpop.f32.mrf.mxu0
      %v3603 = vadd.f32 %v3560, %v3602
      %v3604 = vpop.f32.mrf.mxu0
      %v3605 = vadd.f32 %v3562, %v3604
      %v3606 = vpop.f32.mrf.mxu0
      %v3607 = vadd.f32 %v3564, %v3606
      %v3608 = vpop.f32.mrf.mxu0
      %v3609 = vadd.f32 %v3566, %v3608
      %3610 = vdwg.mxu0
      %3611 = vmatprep.subr.bf16.mxu0 %v2762
      %3612 = vmatpush1.bf16.msra.mxu0 %v2761
      %3613 = vmatprep.subr.bf16.mxu0 %v2758
      %3614 = vmatpush1.bf16.msra.mxu0 %v2757
      %3615 = vmatprep.subr.bf16.mxu0 %v2754
      %3616 = vmatpush1.bf16.msra.mxu0 %v2753
      %3617 = vmatprep.subr.bf16.mxu0 %v2750
      %3618 = vmatpush1.bf16.msra.mxu0 %v2749
      %3619 = vmatprep.subr.bf16.mxu0 %v2746
      %3620 = vmatpush1.bf16.msra.mxu0 %v2745
      %3621 = vmatprep.subr.bf16.mxu0 %v2742
      %3622 = vmatpush1.bf16.msra.mxu0 %v2741
      %3623 = vmatprep.subr.bf16.mxu0 %v2738
      %3624 = vmatpush1.bf16.msra.mxu0 %v2737
      %3625 = vmatprep.subr.bf16.mxu0 %v2734
      %3626 = vmatpush1.bf16.msra.mxu0 %v2733
      %3627 = vmatprep.subr.bf16.mxu0 %v2794
      %3628 = vmatpush2.bf16.msra.mxu0 %v2793
      %3629 = vmatprep.subr.bf16.mxu0 %v2790
      %3630 = vmatpush2.bf16.msra.mxu0 %v2789
      %3631 = vmatprep.subr.bf16.mxu0 %v2786
      %3632 = vmatpush2.bf16.msra.mxu0 %v2785
      %3633 = vmatprep.subr.bf16.mxu0 %v2782
      %3634 = vmatpush2.bf16.msra.mxu0 %v2781
      %3635 = vmatprep.subr.bf16.mxu0 %v2778
      %3636 = vmatpush2.bf16.msra.mxu0 %v2777
      %3637 = vmatprep.subr.bf16.mxu0 %v2774
      %3638 = vmatpush2.bf16.msra.mxu0 %v2773
      %3639 = vmatprep.subr.bf16.mxu0 %v2770
      %3640 = vmatpush2.bf16.msra.mxu0 %v2769
      %3641 = vmatprep.subr.bf16.mxu0 %v2766
      %3642 = vmatpush2.bf16.msra.mxu0 %v2765
      %3643 = vmatprep.mubr.bf16.mxu0 %v831
      %3644 = vmatmul.mubr.bf16.gmra.mxu0 %v830
      %v3645 = vpop.f32.mrf.mxu0
      %v3646 = vadd.f32 %v3603, %v3645
      %v3647 = vpop.f32.mrf.mxu0
      %v3648 = vadd.f32 %v3605, %v3647
      %v3649 = vpop.f32.mrf.mxu0
      %v3650 = vadd.f32 %v3607, %v3649
      %v3651 = vpop.f32.mrf.mxu0
      %v3652 = vadd.f32 %v3609, %v3651
      %3653 = vdwg.mxu0
      %3654 = vmatprep.subr.bf16.mxu0 %v2826
      %3655 = vmatpush1.bf16.msra.mxu0 %v2825
      %3656 = vmatprep.subr.bf16.mxu0 %v2822
      %3657 = vmatpush1.bf16.msra.mxu0 %v2821
      %3658 = vmatprep.subr.bf16.mxu0 %v2818
      %3659 = vmatpush1.bf16.msra.mxu0 %v2817
      %3660 = vmatprep.subr.bf16.mxu0 %v2814
      %3661 = vmatpush1.bf16.msra.mxu0 %v2813
      %3662 = vmatprep.subr.bf16.mxu0 %v2810
      %3663 = vmatpush1.bf16.msra.mxu0 %v2809
      %3664 = vmatprep.subr.bf16.mxu0 %v2806
      %3665 = vmatpush1.bf16.msra.mxu0 %v2805
      %3666 = vmatprep.subr.bf16.mxu0 %v2802
      %3667 = vmatpush1.bf16.msra.mxu0 %v2801
      %3668 = vmatprep.subr.bf16.mxu0 %v2798
      %3669 = vmatpush1.bf16.msra.mxu0 %v2797
      %3670 = vmatprep.subr.bf16.mxu0 0
      %3671 = vmatpush2.bf16.msra.mxu0 0
      %3672 = vmatprep.subr.bf16.mxu0 0
      %3673 = vmatpush2.bf16.msra.mxu0 0
      %3674 = vmatprep.subr.bf16.mxu0 0
      %3675 = vmatpush2.bf16.msra.mxu0 0
      %3676 = vmatprep.subr.bf16.mxu0 %v2846
      %3677 = vmatpush2.bf16.msra.mxu0 %v2845
      %3678 = vmatprep.subr.bf16.mxu0 %v2842
      %3679 = vmatpush2.bf16.msra.mxu0 %v2841
      %3680 = vmatprep.subr.bf16.mxu0 %v2838
      %3681 = vmatpush2.bf16.msra.mxu0 %v2837
      %3682 = vmatprep.subr.bf16.mxu0 %v2834
      %3683 = vmatpush2.bf16.msra.mxu0 %v2833
      %3684 = vmatprep.subr.bf16.mxu0 %v2830
      %3685 = vmatpush2.bf16.msra.mxu0 %v2829
      %3686 = vmatprep.mubr.bf16.mxu0 %v3351
      %3687 = vmatmul.mubr.bf16.gmra.mxu0 %v832
      %v3688 = vpop.f32.mrf.mxu0
      %v3689 = vadd.f32 %v3646, %v3688
      %v3690 = vpop.f32.mrf.mxu0
      %v3691 = vadd.f32 %v3648, %v3690
      %v3692 = vpop.f32.mrf.mxu0
      %v3693 = vadd.f32 %v3650, %v3692
      %v3694 = vpop.f32.mrf.mxu0
      %v3695 = vadd.f32 %v3652, %v3694
      %3696 = vdwg.mxu0
      %3697 = vmatprep.subr.bf16.mxu0 %v2380
      %3698 = vmatpush1.bf16.msra.mxu0 %v2379
      %3699 = vmatprep.subr.bf16.mxu0 %v2376
      %3700 = vmatpush1.bf16.msra.mxu0 %v2375
      %3701 = vmatprep.subr.bf16.mxu0 %v2372
      %3702 = vmatpush1.bf16.msra.mxu0 %v2371
      %3703 = vmatprep.subr.bf16.mxu0 %v2368
      %3704 = vmatpush1.bf16.msra.mxu0 %v2367
      %3705 = vmatprep.subr.bf16.mxu0 %v2364
      %3706 = vmatpush1.bf16.msra.mxu0 %v2363
      %3707 = vmatprep.subr.bf16.mxu0 %v2360
      %3708 = vmatpush1.bf16.msra.mxu0 %v2359
      %3709 = vmatprep.subr.bf16.mxu0 %v2356
      %3710 = vmatpush1.bf16.msra.mxu0 %v2355
      %3711 = vmatprep.subr.bf16.mxu0 %v2352
      %3712 = vmatpush1.bf16.msra.mxu0 %v2351
      %3713 = vmatprep.subr.bf16.mxu0 %v2412
      %3714 = vmatpush2.bf16.msra.mxu0 %v2411
      %3715 = vmatprep.subr.bf16.mxu0 %v2408
      %3716 = vmatpush2.bf16.msra.mxu0 %v2407
      %3717 = vmatprep.subr.bf16.mxu0 %v2404
      %3718 = vmatpush2.bf16.msra.mxu0 %v2403
      %3719 = vmatprep.subr.bf16.mxu0 %v2400
      %3720 = vmatpush2.bf16.msra.mxu0 %v2399
      %3721 = vmatprep.subr.bf16.mxu0 %v2396
      %3722 = vmatpush2.bf16.msra.mxu0 %v2395
      %3723 = vmatprep.subr.bf16.mxu0 %v2392
      %3724 = vmatpush2.bf16.msra.mxu0 %v2391
      %3725 = vmatprep.subr.bf16.mxu0 %v2388
      %3726 = vmatpush2.bf16.msra.mxu0 %v2387
      %3727 = vmatprep.subr.bf16.mxu0 %v2384
      %3728 = vmatpush2.bf16.msra.mxu0 %v2383
      %3729 = vmatprep.mubr.bf16.mxu0 %v819
      %3730 = vmatmul.mubr.bf16.gmra.mxu0 %v818
      %v3731 = vpop.f32.mrf.mxu0
      %v3732 = vadd.f32 %v761, %v3731
      %v3733 = vpop.f32.mrf.mxu0
      %v3734 = vadd.f32 %v765, %v3733
      %v3735 = vpop.f32.mrf.mxu0
      %v3736 = vadd.f32 %v761, %v3735
      %v3737 = vpop.f32.mrf.mxu0
      %v3738 = vadd.f32 %v765, %v3737
      %3739 = vdwg.mxu0
      %3740 = vmatprep.subr.bf16.mxu0 %v2444
      %3741 = vmatpush1.bf16.msra.mxu0 %v2443
      %3742 = vmatprep.subr.bf16.mxu0 %v2440
      %3743 = vmatpush1.bf16.msra.mxu0 %v2439
      %3744 = vmatprep.subr.bf16.mxu0 %v2436
      %3745 = vmatpush1.bf16.msra.mxu0 %v2435
      %3746 = vmatprep.subr.bf16.mxu0 %v2432
      %3747 = vmatpush1.bf16.msra.mxu0 %v2431
      %3748 = vmatprep.subr.bf16.mxu0 %v2428
      %3749 = vmatpush1.bf16.msra.mxu0 %v2427
      %3750 = vmatprep.subr.bf16.mxu0 %v2424
      %3751 = vmatpush1.bf16.msra.mxu0 %v2423
      %3752 = vmatprep.subr.bf16.mxu0 %v2420
      %3753 = vmatpush1.bf16.msra.mxu0 %v2419
      %3754 = vmatprep.subr.bf16.mxu0 %v2416
      %3755 = vmatpush1.bf16.msra.mxu0 %v2415
      %3756 = vmatprep.subr.bf16.mxu0 %v2476
      %3757 = vmatpush2.bf16.msra.mxu0 %v2475
      %3758 = vmatprep.subr.bf16.mxu0 %v2472
      %3759 = vmatpush2.bf16.msra.mxu0 %v2471
      %3760 = vmatprep.subr.bf16.mxu0 %v2468
      %3761 = vmatpush2.bf16.msra.mxu0 %v2467
      %3762 = vmatprep.subr.bf16.mxu0 %v2464
      %3763 = vmatpush2.bf16.msra.mxu0 %v2463
      %3764 = vmatprep.subr.bf16.mxu0 %v2460
      %3765 = vmatpush2.bf16.msra.mxu0 %v2459
      %3766 = vmatprep.subr.bf16.mxu0 %v2456
      %3767 = vmatpush2.bf16.msra.mxu0 %v2455
      %3768 = vmatprep.subr.bf16.mxu0 %v2452
      %3769 = vmatpush2.bf16.msra.mxu0 %v2451
      %3770 = vmatprep.subr.bf16.mxu0 %v2448
      %3771 = vmatpush2.bf16.msra.mxu0 %v2447
      %3772 = vmatprep.mubr.bf16.mxu0 %v821
      %3773 = vmatmul.mubr.bf16.gmra.mxu0 %v820
      %v3774 = vpop.f32.mrf.mxu0
      %v3775 = vadd.f32 %v3732, %v3774
      %v3776 = vpop.f32.mrf.mxu0
      %v3777 = vadd.f32 %v3734, %v3776
      %v3778 = vpop.f32.mrf.mxu0
      %v3779 = vadd.f32 %v3736, %v3778
      %v3780 = vpop.f32.mrf.mxu0
      %v3781 = vadd.f32 %v3738, %v3780
      %3782 = vdwg.mxu0
      %3783 = vmatprep.subr.bf16.mxu0 %v2508
      %3784 = vmatpush1.bf16.msra.mxu0 %v2507
      %3785 = vmatprep.subr.bf16.mxu0 %v2504
      %3786 = vmatpush1.bf16.msra.mxu0 %v2503
      %3787 = vmatprep.subr.bf16.mxu0 %v2500
      %3788 = vmatpush1.bf16.msra.mxu0 %v2499
      %3789 = vmatprep.subr.bf16.mxu0 %v2496
      %3790 = vmatpush1.bf16.msra.mxu0 %v2495
      %3791 = vmatprep.subr.bf16.mxu0 %v2492
      %3792 = vmatpush1.bf16.msra.mxu0 %v2491
      %3793 = vmatprep.subr.bf16.mxu0 %v2488
      %3794 = vmatpush1.bf16.msra.mxu0 %v2487
      %3795 = vmatprep.subr.bf16.mxu0 %v2484
      %3796 = vmatpush1.bf16.msra.mxu0 %v2483
      %3797 = vmatprep.subr.bf16.mxu0 %v2480
      %3798 = vmatpush1.bf16.msra.mxu0 %v2479
      %3799 = vmatprep.subr.bf16.mxu0 %v2540
      %3800 = vmatpush2.bf16.msra.mxu0 %v2539
      %3801 = vmatprep.subr.bf16.mxu0 %v2536
      %3802 = vmatpush2.bf16.msra.mxu0 %v2535
      %3803 = vmatprep.subr.bf16.mxu0 %v2532
      %3804 = vmatpush2.bf16.msra.mxu0 %v2531
      %3805 = vmatprep.subr.bf16.mxu0 %v2528
      %3806 = vmatpush2.bf16.msra.mxu0 %v2527
      %3807 = vmatprep.subr.bf16.mxu0 %v2524
      %3808 = vmatpush2.bf16.msra.mxu0 %v2523
      %3809 = vmatprep.subr.bf16.mxu0 %v2520
      %3810 = vmatpush2.bf16.msra.mxu0 %v2519
      %3811 = vmatprep.subr.bf16.mxu0 %v2516
      %3812 = vmatpush2.bf16.msra.mxu0 %v2515
      %3813 = vmatprep.subr.bf16.mxu0 %v2512
      %3814 = vmatpush2.bf16.msra.mxu0 %v2511
      %3815 = vmatprep.mubr.bf16.mxu0 %v823
      %3816 = vmatmul.mubr.bf16.gmra.mxu0 %v822
      %v3817 = vpop.f32.mrf.mxu0
      %v3818 = vadd.f32 %v3775, %v3817
      %v3819 = vpop.f32.mrf.mxu0
      %v3820 = vadd.f32 %v3777, %v3819
      %v3821 = vpop.f32.mrf.mxu0
      %v3822 = vadd.f32 %v3779, %v3821
      %v3823 = vpop.f32.mrf.mxu0
      %v3824 = vadd.f32 %v3781, %v3823
      %3825 = vdwg.mxu0
      %3826 = vmatprep.subr.bf16.mxu0 %v2572
      %3827 = vmatpush1.bf16.msra.mxu0 %v2571
      %3828 = vmatprep.subr.bf16.mxu0 %v2568
      %3829 = vmatpush1.bf16.msra.mxu0 %v2567
      %3830 = vmatprep.subr.bf16.mxu0 %v2564
      %3831 = vmatpush1.bf16.msra.mxu0 %v2563
      %3832 = vmatprep.subr.bf16.mxu0 %v2560
      %3833 = vmatpush1.bf16.msra.mxu0 %v2559
      %3834 = vmatprep.subr.bf16.mxu0 %v2556
      %3835 = vmatpush1.bf16.msra.mxu0 %v2555
      %3836 = vmatprep.subr.bf16.mxu0 %v2552
      %3837 = vmatpush1.bf16.msra.mxu0 %v2551
      %3838 = vmatprep.subr.bf16.mxu0 %v2548
      %3839 = vmatpush1.bf16.msra.mxu0 %v2547
      %3840 = vmatprep.subr.bf16.mxu0 %v2544
      %3841 = vmatpush1.bf16.msra.mxu0 %v2543
      %3842 = vmatprep.subr.bf16.mxu0 %v2604
      %3843 = vmatpush2.bf16.msra.mxu0 %v2603
      %3844 = vmatprep.subr.bf16.mxu0 %v2600
      %3845 = vmatpush2.bf16.msra.mxu0 %v2599
      %3846 = vmatprep.subr.bf16.mxu0 %v2596
      %3847 = vmatpush2.bf16.msra.mxu0 %v2595
      %3848 = vmatprep.subr.bf16.mxu0 %v2592
      %3849 = vmatpush2.bf16.msra.mxu0 %v2591
      %3850 = vmatprep.subr.bf16.mxu0 %v2588
      %3851 = vmatpush2.bf16.msra.mxu0 %v2587
      %3852 = vmatprep.subr.bf16.mxu0 %v2584
      %3853 = vmatpush2.bf16.msra.mxu0 %v2583
      %3854 = vmatprep.subr.bf16.mxu0 %v2580
      %3855 = vmatpush2.bf16.msra.mxu0 %v2579
      %3856 = vmatprep.subr.bf16.mxu0 %v2576
      %3857 = vmatpush2.bf16.msra.mxu0 %v2575
      %3858 = vmatprep.mubr.bf16.mxu0 %v825
      %3859 = vmatmul.mubr.bf16.gmra.mxu0 %v824
      %v3860 = vpop.f32.mrf.mxu0
      %v3861 = vadd.f32 %v3818, %v3860
      %v3862 = vpop.f32.mrf.mxu0
      %v3863 = vadd.f32 %v3820, %v3862
      %v3864 = vpop.f32.mrf.mxu0
      %v3865 = vadd.f32 %v3822, %v3864
      %v3866 = vpop.f32.mrf.mxu0
      %v3867 = vadd.f32 %v3824, %v3866
      %3868 = vdwg.mxu0
      %3869 = vmatprep.subr.bf16.mxu0 %v2636
      %3870 = vmatpush1.bf16.msra.mxu0 %v2635
      %3871 = vmatprep.subr.bf16.mxu0 %v2632
      %3872 = vmatpush1.bf16.msra.mxu0 %v2631
      %3873 = vmatprep.subr.bf16.mxu0 %v2628
      %3874 = vmatpush1.bf16.msra.mxu0 %v2627
      %3875 = vmatprep.subr.bf16.mxu0 %v2624
      %3876 = vmatpush1.bf16.msra.mxu0 %v2623
      %3877 = vmatprep.subr.bf16.mxu0 %v2620
      %3878 = vmatpush1.bf16.msra.mxu0 %v2619
      %3879 = vmatprep.subr.bf16.mxu0 %v2616
      %3880 = vmatpush1.bf16.msra.mxu0 %v2615
      %3881 = vmatprep.subr.bf16.mxu0 %v2612
      %3882 = vmatpush1.bf16.msra.mxu0 %v2611
      %3883 = vmatprep.subr.bf16.mxu0 %v2608
      %3884 = vmatpush1.bf16.msra.mxu0 %v2607
      %3885 = vmatprep.subr.bf16.mxu0 %v2668
      %3886 = vmatpush2.bf16.msra.mxu0 %v2667
      %3887 = vmatprep.subr.bf16.mxu0 %v2664
      %3888 = vmatpush2.bf16.msra.mxu0 %v2663
      %3889 = vmatprep.subr.bf16.mxu0 %v2660
      %3890 = vmatpush2.bf16.msra.mxu0 %v2659
      %3891 = vmatprep.subr.bf16.mxu0 %v2656
      %3892 = vmatpush2.bf16.msra.mxu0 %v2655
      %3893 = vmatprep.subr.bf16.mxu0 %v2652
      %3894 = vmatpush2.bf16.msra.mxu0 %v2651
      %3895 = vmatprep.subr.bf16.mxu0 %v2648
      %3896 = vmatpush2.bf16.msra.mxu0 %v2647
      %3897 = vmatprep.subr.bf16.mxu0 %v2644
      %3898 = vmatpush2.bf16.msra.mxu0 %v2643
      %3899 = vmatprep.subr.bf16.mxu0 %v2640
      %3900 = vmatpush2.bf16.msra.mxu0 %v2639
      %3901 = vmatprep.mubr.bf16.mxu0 %v827
      %3902 = vmatmul.mubr.bf16.gmra.mxu0 %v826
      %v3903 = vpop.f32.mrf.mxu0
      %v3904 = vadd.f32 %v3861, %v3903
      %v3905 = vpop.f32.mrf.mxu0
      %v3906 = vadd.f32 %v3863, %v3905
      %v3907 = vpop.f32.mrf.mxu0
      %v3908 = vadd.f32 %v3865, %v3907
      %v3909 = vpop.f32.mrf.mxu0
      %v3910 = vadd.f32 %v3867, %v3909
      %3911 = vdwg.mxu0
      %3912 = vmatprep.subr.bf16.mxu0 %v2700
      %3913 = vmatpush1.bf16.msra.mxu0 %v2699
      %3914 = vmatprep.subr.bf16.mxu0 %v2696
      %3915 = vmatpush1.bf16.msra.mxu0 %v2695
      %3916 = vmatprep.subr.bf16.mxu0 %v2692
      %3917 = vmatpush1.bf16.msra.mxu0 %v2691
      %3918 = vmatprep.subr.bf16.mxu0 %v2688
      %3919 = vmatpush1.bf16.msra.mxu0 %v2687
      %3920 = vmatprep.subr.bf16.mxu0 %v2684
      %3921 = vmatpush1.bf16.msra.mxu0 %v2683
      %3922 = vmatprep.subr.bf16.mxu0 %v2680
      %3923 = vmatpush1.bf16.msra.mxu0 %v2679
      %3924 = vmatprep.subr.bf16.mxu0 %v2676
      %3925 = vmatpush1.bf16.msra.mxu0 %v2675
      %3926 = vmatprep.subr.bf16.mxu0 %v2672
      %3927 = vmatpush1.bf16.msra.mxu0 %v2671
      %3928 = vmatprep.subr.bf16.mxu0 %v2732
      %3929 = vmatpush2.bf16.msra.mxu0 %v2731
      %3930 = vmatprep.subr.bf16.mxu0 %v2728
      %3931 = vmatpush2.bf16.msra.mxu0 %v2727
      %3932 = vmatprep.subr.bf16.mxu0 %v2724
      %3933 = vmatpush2.bf16.msra.mxu0 %v2723
      %3934 = vmatprep.subr.bf16.mxu0 %v2720
      %3935 = vmatpush2.bf16.msra.mxu0 %v2719
      %3936 = vmatprep.subr.bf16.mxu0 %v2716
      %3937 = vmatpush2.bf16.msra.mxu0 %v2715
      %3938 = vmatprep.subr.bf16.mxu0 %v2712
      %3939 = vmatpush2.bf16.msra.mxu0 %v2711
      %3940 = vmatprep.subr.bf16.mxu0 %v2708
      %3941 = vmatpush2.bf16.msra.mxu0 %v2707
      %3942 = vmatprep.subr.bf16.mxu0 %v2704
      %3943 = vmatpush2.bf16.msra.mxu0 %v2703
      %3944 = vmatprep.mubr.bf16.mxu0 %v829
      %3945 = vmatmul.mubr.bf16.gmra.mxu0 %v828
      %v3946 = vpop.f32.mrf.mxu0
      %v3947 = vadd.f32 %v3904, %v3946
      %v3948 = vpop.f32.mrf.mxu0
      %v3949 = vadd.f32 %v3906, %v3948
      %v3950 = vpop.f32.mrf.mxu0
      %v3951 = vadd.f32 %v3908, %v3950
      %v3952 = vpop.f32.mrf.mxu0
      %v3953 = vadd.f32 %v3910, %v3952
      %3954 = vdwg.mxu0
      %3955 = vmatprep.subr.bf16.mxu0 %v2764
      %3956 = vmatpush1.bf16.msra.mxu0 %v2763
      %3957 = vmatprep.subr.bf16.mxu0 %v2760
      %3958 = vmatpush1.bf16.msra.mxu0 %v2759
      %3959 = vmatprep.subr.bf16.mxu0 %v2756
      %3960 = vmatpush1.bf16.msra.mxu0 %v2755
      %3961 = vmatprep.subr.bf16.mxu0 %v2752
      %3962 = vmatpush1.bf16.msra.mxu0 %v2751
      %3963 = vmatprep.subr.bf16.mxu0 %v2748
      %3964 = vmatpush1.bf16.msra.mxu0 %v2747
      %3965 = vmatprep.subr.bf16.mxu0 %v2744
      %3966 = vmatpush1.bf16.msra.mxu0 %v2743
      %3967 = vmatprep.subr.bf16.mxu0 %v2740
      %3968 = vmatpush1.bf16.msra.mxu0 %v2739
      %3969 = vmatprep.subr.bf16.mxu0 %v2736
      %3970 = vmatpush1.bf16.msra.mxu0 %v2735
      %3971 = vmatprep.subr.bf16.mxu0 %v2796
      %3972 = vmatpush2.bf16.msra.mxu0 %v2795
      %3973 = vmatprep.subr.bf16.mxu0 %v2792
      %3974 = vmatpush2.bf16.msra.mxu0 %v2791
      %3975 = vmatprep.subr.bf16.mxu0 %v2788
      %3976 = vmatpush2.bf16.msra.mxu0 %v2787
      %3977 = vmatprep.subr.bf16.mxu0 %v2784
      %3978 = vmatpush2.bf16.msra.mxu0 %v2783
      %3979 = vmatprep.subr.bf16.mxu0 %v2780
      %3980 = vmatpush2.bf16.msra.mxu0 %v2779
      %3981 = vmatprep.subr.bf16.mxu0 %v2776
      %3982 = vmatpush2.bf16.msra.mxu0 %v2775
      %3983 = vmatprep.subr.bf16.mxu0 %v2772
      %3984 = vmatpush2.bf16.msra.mxu0 %v2771
      %3985 = vmatprep.subr.bf16.mxu0 %v2768
      %3986 = vmatpush2.bf16.msra.mxu0 %v2767
      %3987 = vmatprep.mubr.bf16.mxu0 %v831
      %3988 = vmatmul.mubr.bf16.gmra.mxu0 %v830
      %v3989 = vpop.f32.mrf.mxu0
      %v3990 = vadd.f32 %v3947, %v3989
      %v3991 = vpop.f32.mrf.mxu0
      %v3992 = vadd.f32 %v3949, %v3991
      %v3993 = vpop.f32.mrf.mxu0
      %v3994 = vadd.f32 %v3951, %v3993
      %v3995 = vpop.f32.mrf.mxu0
      %v3996 = vadd.f32 %v3953, %v3995
      %3997 = vdwg.mxu0
      %3998 = vmatprep.subr.bf16.mxu0 %v2828
      %3999 = vmatpush1.bf16.msra.mxu0 %v2827
      %4000 = vmatprep.subr.bf16.mxu0 %v2824
      %4001 = vmatpush1.bf16.msra.mxu0 %v2823
      %4002 = vmatprep.subr.bf16.mxu0 %v2820
      %4003 = vmatpush1.bf16.msra.mxu0 %v2819
      %4004 = vmatprep.subr.bf16.mxu0 %v2816
      %4005 = vmatpush1.bf16.msra.mxu0 %v2815
      %4006 = vmatprep.subr.bf16.mxu0 %v2812
      %4007 = vmatpush1.bf16.msra.mxu0 %v2811
      %4008 = vmatprep.subr.bf16.mxu0 %v2808
      %4009 = vmatpush1.bf16.msra.mxu0 %v2807
      %4010 = vmatprep.subr.bf16.mxu0 %v2804
      %4011 = vmatpush1.bf16.msra.mxu0 %v2803
      %4012 = vmatprep.subr.bf16.mxu0 %v2800
      %4013 = vmatpush1.bf16.msra.mxu0 %v2799
      %4014 = vmatprep.subr.bf16.mxu0 0
      %4015 = vmatpush2.bf16.msra.mxu0 0
      %4016 = vmatprep.subr.bf16.mxu0 0
      %4017 = vmatpush2.bf16.msra.mxu0 0
      %4018 = vmatprep.subr.bf16.mxu0 0
      %4019 = vmatpush2.bf16.msra.mxu0 0
      %4020 = vmatprep.subr.bf16.mxu0 %v2848
      %4021 = vmatpush2.bf16.msra.mxu0 %v2847
      %4022 = vmatprep.subr.bf16.mxu0 %v2844
      %4023 = vmatpush2.bf16.msra.mxu0 %v2843
      %4024 = vmatprep.subr.bf16.mxu0 %v2840
      %4025 = vmatpush2.bf16.msra.mxu0 %v2839
      %4026 = vmatprep.subr.bf16.mxu0 %v2836
      %4027 = vmatpush2.bf16.msra.mxu0 %v2835
      %4028 = vmatprep.subr.bf16.mxu0 %v2832
      %4029 = vmatpush2.bf16.msra.mxu0 %v2831
      %4030 = vmatprep.mubr.bf16.mxu0 %v3351
      %4031 = vmatmul.mubr.bf16.gmra.mxu0 %v832
      %v4032 = vpop.f32.mrf.mxu0
      %v4033 = vadd.f32 %v3990, %v4032
      %v4034 = vpop.f32.mrf.mxu0
      %v4035 = vadd.f32 %v3992, %v4034
      %v4036 = vpop.f32.mrf.mxu0
      %v4037 = vadd.f32 %v3994, %v4036
      %v4038 = vpop.f32.mrf.mxu0
      %v4039 = vadd.f32 %v3996, %v4038
      %4040 = vdwg.mxu0
      %v4041 = vmax.f32 %v3689, 0.0
      %v4042 = vmax.f32 %v3691, 0.0
      %v4043 = vmax.f32 %v4033, 0.0
      %v4044 = vmax.f32 %v4035, 0.0
      %v4045 = vmax.f32 %v3693, 0.0
      %v4046 = vmax.f32 %v3695, 0.0
      %v4047 = vmax.f32 %v4037, 0.0
      %v4048 = vmax.f32 %v4039, 0.0
      %v4049 = vpack.c.bf16 %v4045, %v4041
      %v4050 = vpack.c.bf16 %v4046, %v4042
      %v4051 = vpack.c.bf16 %v4047, %v4043
      %v4052 = vpack.c.bf16 %v4048, %v4044
      %v4053 = vld [vmem:[%s3] sm:$0xf]
      %v4054 = vld [vmem:[%s3 + $0x4] sm:$0xf]
      %v4055 = vld [vmem:[%s3 + $0x8] sm:$0xf]
      %v4056 = vld [vmem:[%s3 + $0xc] sm:$0xf]
      %v4057 = vld [vmem:[%s3 + $0x10] sm:$0xf]
      %v4058 = vld [vmem:[%s3 + $0x14] sm:$0xf]
      %v4059 = vld [vmem:[%s3 + $0x18] sm:$0xf]
      %v4060 = vld [vmem:[%s3 + $0x1c] sm:$0xf]
      %v4061 = vld [vmem:[%s3 + $0x20] sm:$0xf]
      %v4062 = vld [vmem:[%s3 + $0x24] sm:$0xf]
      %v4063 = vld [vmem:[%s3 + $0x28] sm:$0xf]
      %v4064 = vld [vmem:[%s3 + $0x2c] sm:$0xf]
      %v4065 = vld [vmem:[%s3 + $0x30] sm:$0xf]
      %v4066 = vld [vmem:[%s3 + $0x34] sm:$0xf]
      %v4067 = vld [vmem:[%s3 + $0x38] sm:$0xf]
      %v4068 = vld [vmem:[%s3 + $0x3c] sm:$0xf]
      %v4069 = vld [vmem:[%s3 + $0x40] sm:$0xf]
      %v4070 = vld [vmem:[%s3 + $0x44] sm:$0xf]
      %v4071 = vld [vmem:[%s3 + $0x48] sm:$0xf]
      %v4072 = vld [vmem:[%s3 + $0x4c] sm:$0xf]
      %v4073 = vld [vmem:[%s3 + $0x50] sm:$0xf]
      %v4074 = vld [vmem:[%s3 + $0x54] sm:$0xf]
      %v4075 = vld [vmem:[%s3 + $0x58] sm:$0xf]
      %v4076 = vld [vmem:[%s3 + $0x5c] sm:$0xf]
      %v4077 = vld [vmem:[%s3 + $0x60] sm:$0xf]
      %v4078 = vld [vmem:[%s3 + $0x64] sm:$0xf]
      %v4079 = vld [vmem:[%s3 + $0x68] sm:$0xf]
      %v4080 = vld [vmem:[%s3 + $0x6c] sm:$0xf]
      %v4081 = vld [vmem:[%s3 + $0x70] sm:$0xf]
      %v4082 = vld [vmem:[%s3 + $0x74] sm:$0xf]
      %v4083 = vld [vmem:[%s3 + $0x78] sm:$0xf]
      %v4084 = vld [vmem:[%s3 + $0x7c] sm:$0xf]
      %v4085 = vld [vmem:[%s3 + $0x80] sm:$0xf]
      %v4086 = vld [vmem:[%s3 + $0x84] sm:$0xf]
      %v4087 = vld [vmem:[%s3 + $0x88] sm:$0xf]
      %v4088 = vld [vmem:[%s3 + $0x8c] sm:$0xf]
      %v4089 = vld [vmem:[%s3 + $0x90] sm:$0xf]
      %v4090 = vld [vmem:[%s3 + $0x94] sm:$0xf]
      %v4091 = vld [vmem:[%s3 + $0x98] sm:$0xf]
      %v4092 = vld [vmem:[%s3 + $0x9c] sm:$0xf]
      %v4093 = vld [vmem:[%s3 + $0xa0] sm:$0xf]
      %v4094 = vld [vmem:[%s3 + $0xa4] sm:$0xf]
      %v4095 = vld [vmem:[%s3 + $0xa8] sm:$0xf]
      %v4096 = vld [vmem:[%s3 + $0xac] sm:$0xf]
      %v4097 = vld [vmem:[%s3 + $0xb0] sm:$0xf]
      %v4098 = vld [vmem:[%s3 + $0xb4] sm:$0xf]
      %v4099 = vld [vmem:[%s3 + $0xb8] sm:$0xf]
      %v4100 = vld [vmem:[%s3 + $0xbc] sm:$0xf]
      %v4101 = vld [vmem:[%s3 + $0xc0] sm:$0xf]
      %v4102 = vld [vmem:[%s3 + $0xc4] sm:$0xf]
      %v4103 = vld [vmem:[%s3 + $0xc8] sm:$0xf]
      %v4104 = vld [vmem:[%s3 + $0xcc] sm:$0xf]
      %v4105 = vld [vmem:[%s3 + $0xd0] sm:$0xf]
      %v4106 = vld [vmem:[%s3 + $0xd4] sm:$0xf]
      %v4107 = vld [vmem:[%s3 + $0xd8] sm:$0xf]
      %v4108 = vld [vmem:[%s3 + $0xdc] sm:$0xf]
      %v4109 = vld [vmem:[%s3 + $0xe0] sm:$0xf]
      %v4110 = vld [vmem:[%s3 + $0xe4] sm:$0xf]
      %v4111 = vld [vmem:[%s3 + $0xe8] sm:$0xf]
      %v4112 = vld [vmem:[%s3 + $0xec] sm:$0xf]
      %v4113 = vld [vmem:[%s3 + $0xf0] sm:$0xf]
      %v4114 = vld [vmem:[%s3 + $0xf4] sm:$0xf]
      %v4115 = vld [vmem:[%s3 + $0xf8] sm:$0xf]
      %v4116 = vld [vmem:[%s3 + $0xfc] sm:$0xf]
      %v4117 = vld [vmem:[%s4] sm:$0x1]
      %v4119 = vlaneseq
      %v4120 = vshrl.u32 %v4119, 7
      %v4121 = vsub.s32 0, %v4120
      %v4122 = vrot.slane %v4117, %v4121
      %v4188 = vunpack.c.l.b16 %v4053
      %v4189 = vunpack.c.l.b16 %v4054
      %v4190 = vunpack.c.l.b16 %v4055
      %v4191 = vunpack.c.l.b16 %v4056
      %v4192 = vunpack.c.l.b16 %v4057
      %v4193 = vunpack.c.l.b16 %v4058
      %v4194 = vunpack.c.l.b16 %v4059
      %v4195 = vunpack.c.l.b16 %v4060
      %v4196 = vunpack.c.l.b16 %v4061
      %v4197 = vunpack.c.l.b16 %v4062
      %v4198 = vunpack.c.l.b16 %v4063
      %v4199 = vunpack.c.l.b16 %v4064
      %v4200 = vunpack.c.l.b16 %v4065
      %v4201 = vunpack.c.l.b16 %v4066
      %v4202 = vunpack.c.l.b16 %v4067
      %v4203 = vunpack.c.l.b16 %v4068
      %v4204 = vunpack.c.l.b16 %v4069
      %v4205 = vunpack.c.l.b16 %v4070
      %v4206 = vunpack.c.l.b16 %v4071
      %v4207 = vunpack.c.l.b16 %v4072
      %v4208 = vunpack.c.l.b16 %v4073
      %v4209 = vunpack.c.l.b16 %v4074
      %v4210 = vunpack.c.l.b16 %v4075
      %v4211 = vunpack.c.l.b16 %v4076
      %v4212 = vunpack.c.l.b16 %v4077
      %v4213 = vunpack.c.l.b16 %v4078
      %v4214 = vunpack.c.l.b16 %v4079
      %v4215 = vunpack.c.l.b16 %v4080
      %v4216 = vunpack.c.l.b16 %v4081
      %v4217 = vunpack.c.l.b16 %v4082
      %v4218 = vunpack.c.l.b16 %v4083
      %v4219 = vunpack.c.l.b16 %v4084
      %v4220 = vunpack.c.l.b16 %v4085
      %v4221 = vunpack.c.l.b16 %v4086
      %v4222 = vunpack.c.l.b16 %v4087
      %v4223 = vunpack.c.l.b16 %v4088
      %v4224 = vunpack.c.l.b16 %v4089
      %v4225 = vunpack.c.l.b16 %v4090
      %v4226 = vunpack.c.l.b16 %v4091
      %v4227 = vunpack.c.l.b16 %v4092
      %v4228 = vunpack.c.l.b16 %v4093
      %v4229 = vunpack.c.l.b16 %v4094
      %v4230 = vunpack.c.l.b16 %v4095
      %v4231 = vunpack.c.l.b16 %v4096
      %v4232 = vunpack.c.l.b16 %v4097
      %v4233 = vunpack.c.l.b16 %v4098
      %v4234 = vunpack.c.l.b16 %v4099
      %v4235 = vunpack.c.l.b16 %v4100
      %v4236 = vunpack.c.l.b16 %v4101
      %v4237 = vunpack.c.l.b16 %v4102
      %v4238 = vunpack.c.l.b16 %v4103
      %v4239 = vunpack.c.l.b16 %v4104
      %v4240 = vunpack.c.l.b16 %v4105
      %v4241 = vunpack.c.l.b16 %v4106
      %v4242 = vunpack.c.l.b16 %v4107
      %v4243 = vunpack.c.l.b16 %v4108
      %v4244 = vunpack.c.l.b16 %v4109
      %v4245 = vunpack.c.l.b16 %v4110
      %v4246 = vunpack.c.l.b16 %v4111
      %v4247 = vunpack.c.l.b16 %v4112
      %v4248 = vunpack.c.l.b16 %v4113
      %v4249 = vunpack.c.l.b16 %v4114
      %v4250 = vunpack.c.l.b16 %v4115
      %v4251 = vunpack.c.l.b16 %v4116
      %v4252 = vpack.c.b16 %v4189, %v4188
      %v4253 = vpack.c.b16 %v4191, %v4190
      %v4254 = vpack.c.b16 %v4193, %v4192
      %v4255 = vpack.c.b16 %v4195, %v4194
      %v4256 = vpack.c.b16 %v4197, %v4196
      %v4257 = vpack.c.b16 %v4199, %v4198
      %v4258 = vpack.c.b16 %v4201, %v4200
      %v4259 = vpack.c.b16 %v4203, %v4202
      %v4260 = vpack.c.b16 %v4205, %v4204
      %v4261 = vpack.c.b16 %v4207, %v4206
      %v4262 = vpack.c.b16 %v4209, %v4208
      %v4263 = vpack.c.b16 %v4211, %v4210
      %v4264 = vpack.c.b16 %v4213, %v4212
      %v4265 = vpack.c.b16 %v4215, %v4214
      %v4266 = vpack.c.b16 %v4217, %v4216
      %v4267 = vpack.c.b16 %v4219, %v4218
      %v4268 = vpack.c.b16 %v4221, %v4220
      %v4269 = vpack.c.b16 %v4223, %v4222
      %v4270 = vpack.c.b16 %v4225, %v4224
      %v4271 = vpack.c.b16 %v4227, %v4226
      %v4272 = vpack.c.b16 %v4229, %v4228
      %v4273 = vpack.c.b16 %v4231, %v4230
      %v4274 = vpack.c.b16 %v4233, %v4232
      %v4275 = vpack.c.b16 %v4235, %v4234
      %v4276 = vpack.c.b16 %v4237, %v4236
      %v4277 = vpack.c.b16 %v4239, %v4238
      %v4278 = vpack.c.b16 %v4241, %v4240
      %v4279 = vpack.c.b16 %v4243, %v4242
      %v4280 = vpack.c.b16 %v4245, %v4244
      %v4281 = vpack.c.b16 %v4247, %v4246
      %v4282 = vpack.c.b16 %v4249, %v4248
      %v4283 = vpack.c.b16 %v4251, %v4250
      %4316 = vmatprep.subr.bf16.mxu0 0
      %4317 = vmatpush1.bf16.msra.mxu0 %v4259
      %4318 = vmatprep.subr.bf16.mxu0 0
      %4319 = vmatpush1.bf16.msra.mxu0 %v4258
      %4320 = vmatprep.subr.bf16.mxu0 0
      %4321 = vmatpush1.bf16.msra.mxu0 %v4257
      %4322 = vmatprep.subr.bf16.mxu0 0
      %4323 = vmatpush1.bf16.msra.mxu0 %v4256
      %4324 = vmatprep.subr.bf16.mxu0 0
      %4325 = vmatpush1.bf16.msra.mxu0 %v4255
      %4326 = vmatprep.subr.bf16.mxu0 0
      %4327 = vmatpush1.bf16.msra.mxu0 %v4254
      %4328 = vmatprep.subr.bf16.mxu0 0
      %4329 = vmatpush1.bf16.msra.mxu0 %v4253
      %4330 = vmatprep.subr.bf16.mxu0 0
      %4331 = vmatpush1.bf16.msra.mxu0 %v4252
      %4332 = vmatprep.subr.bf16.mxu0 0
      %4333 = vmatpush2.bf16.msra.mxu0 %v4267
      %4334 = vmatprep.subr.bf16.mxu0 0
      %4335 = vmatpush2.bf16.msra.mxu0 %v4266
      %4336 = vmatprep.subr.bf16.mxu0 0
      %4337 = vmatpush2.bf16.msra.mxu0 %v4265
      %4338 = vmatprep.subr.bf16.mxu0 0
      %4339 = vmatpush2.bf16.msra.mxu0 %v4264
      %4340 = vmatprep.subr.bf16.mxu0 0
      %4341 = vmatpush2.bf16.msra.mxu0 %v4263
      %4342 = vmatprep.subr.bf16.mxu0 0
      %4343 = vmatpush2.bf16.msra.mxu0 %v4262
      %4344 = vmatprep.subr.bf16.mxu0 0
      %4345 = vmatpush2.bf16.msra.mxu0 %v4261
      %4346 = vmatprep.subr.bf16.mxu0 0
      %4347 = vmatpush2.bf16.msra.mxu0 %v4260
      %4348 = vmatprep.mubr.bf16.mxu0 %v4050
      %4349 = vmatmul.mubr.bf16.gmra.mxu0 %v4049
      %v4350 = vpop.f32.mrf.mxu0
      %v4351 = vadd.f32 %v4122, %v4350
      %v4352 = vpop.f32.mrf.mxu0
      %v4353 = vpop.f32.mrf.mxu0
      %v4354 = vadd.f32 %v4122, %v4353
      %v4355 = vpop.f32.mrf.mxu0
      %4356 = vdwg.mxu0
      %4357 = vmatprep.subr.bf16.mxu0 0
      %4358 = vmatpush1.bf16.msra.mxu0 %v4275
      %4359 = vmatprep.subr.bf16.mxu0 0
      %4360 = vmatpush1.bf16.msra.mxu0 %v4274
      %4361 = vmatprep.subr.bf16.mxu0 0
      %4362 = vmatpush1.bf16.msra.mxu0 %v4273
      %4363 = vmatprep.subr.bf16.mxu0 0
      %4364 = vmatpush1.bf16.msra.mxu0 %v4272
      %4365 = vmatprep.subr.bf16.mxu0 0
      %4366 = vmatpush1.bf16.msra.mxu0 %v4271
      %4367 = vmatprep.subr.bf16.mxu0 0
      %4368 = vmatpush1.bf16.msra.mxu0 %v4270
      %4369 = vmatprep.subr.bf16.mxu0 0
      %4370 = vmatpush1.bf16.msra.mxu0 %v4269
      %4371 = vmatprep.subr.bf16.mxu0 0
      %4372 = vmatpush1.bf16.msra.mxu0 %v4268
      %4373 = vmatprep.subr.bf16.mxu0 0
      %4374 = vmatpush2.bf16.msra.mxu0 %v4283
      %4375 = vmatprep.subr.bf16.mxu0 0
      %4376 = vmatpush2.bf16.msra.mxu0 %v4282
      %4377 = vmatprep.subr.bf16.mxu0 0
      %4378 = vmatpush2.bf16.msra.mxu0 %v4281
      %4379 = vmatprep.subr.bf16.mxu0 0
      %4380 = vmatpush2.bf16.msra.mxu0 %v4280
      %4381 = vmatprep.subr.bf16.mxu0 0
      %4382 = vmatpush2.bf16.msra.mxu0 %v4279
      %4383 = vmatprep.subr.bf16.mxu0 0
      %4384 = vmatpush2.bf16.msra.mxu0 %v4278
      %4385 = vmatprep.subr.bf16.mxu0 0
      %4386 = vmatpush2.bf16.msra.mxu0 %v4277
      %4387 = vmatprep.subr.bf16.mxu0 0
      %4388 = vmatpush2.bf16.msra.mxu0 %v4276
      %4389 = vmatprep.mubr.bf16.mxu0 %v4052
      %4390 = vmatmul.mubr.bf16.gmra.mxu0 %v4051
      %v4391 = vpop.f32.mrf.mxu0
      %v4392 = vadd.f32 %v4351, %v4391
      %v4393 = vpop.f32.mrf.mxu0
      %v4394 = vpop.f32.mrf.mxu0
      %v4395 = vadd.f32 %v4354, %v4394
      %v4396 = vpop.f32.mrf.mxu0
      %4397 = vdwg.mxu0
      %v4398 = vlaneseq
      %v4399 = vand.u32 %v4398, 127
      %vm4400 = vcmp.lt.s32.totalorder %v4399, 10
      %v4401 = vsel %vm4400, %v4392, -1e+30
      %v4402 = vsel %vm4400, %v4395, -1e+30
      %4403 = vmax.xlane.f32.xlu0 %v4401
      %v4404 = vpop.xlane.xlu0 %4403
      %4405 = vmax.xlane.f32.xlu0 %v4402
      %v4406 = vpop.xlane.xlu0 %4405
      %v4407 = vsub.f32 %v4401, %v4404
      %v4408 = vsub.f32 %v4402, %v4406
      %v4409 = vmul.f32 %v4407, 1.442695
      %v4410 = vpow.pop %v4409
      %v4411 = vmul.f32 %v4408, 1.442695
      %v4412 = vpow.pop %v4411
      %v4413 = vsel %vm4400, %v4410, 0.0
      %v4414 = vsel %vm4400, %v4412, 0.0
      %4415 = vadd.xlane.f32.xlu0 %v4413
      %v4416 = vpop.xlane.xlu0 %4415
      %4417 = vadd.xlane.f32.xlu0 %v4414
      %v4418 = vpop.xlane.xlu0 %4417
      %v4419 = vrcp.pop %v4416
      %v4420 = vmul.f32 %v4413, %v4419
      %v4421 = vrcp.pop %v4418
      %v4422 = vmul.f32 %v4414, %v4421
      %4423 = vst [vmem:[%s229] sm:$0xff] %v4420
      %4424 = vst [vmem:[%s229 + $0x8] sm:$0xff] %v4422
      %s4425 = smul.u32 2, %s16
      %p4426 = scmp.lt.s32.totalorder %s4425, 3
      %s4427 = scalar_select %p4426, %s4425, 3
      %s4428 = smul.addr %s4427, 8
      %s4429 = scalar_lea.vmem %s5, %s4428
      // Predicated region
      $region41: #{my_conv_net_forward.5} parent=39 // pred_check
        %p4430 = pneg %p144
      $region42: #{my_conv_net_forward.5} parent=39 // pred_check_branch
        %4432 = sbr.rel (%p4430) target = $region44
      $region43: #{my_conv_net_forward.5} parent=39 // pred_region
        %s4433 = smul.u32 2, %s16
      $region44: #{my_conv_net_forward.5} parent=39 // pred_fallthru
        _
    $region40: #{my_conv_net_forward.5} parent=5 // pred_fallthru
      _
    %p4434 = scmp.le.s32.totalorder 2, %s11
    // Predicated region
    $region45: #{my_conv_net_forward.5} parent=5 // pred_check
      %p4435 = pneg %p4434
    $region46: #{my_conv_net_forward.5} parent=5 // pred_check_branch
      %4437 = sbr.rel (%p4435) target = $region48
    $region47: #{my_conv_net_forward.5} parent=5 // pred_region
      %s4438 = ssub.s32 %s11, 2
      // Predicated region
      $region49: #{my_conv_net_forward.5} parent=47 // pred_check
        %p4439 = pneg %p150
      $region50: #{my_conv_net_forward.5} parent=47 // pred_check_branch
        %4441 = sbr.rel (%p4439) target = $region52
      $region51: #{my_conv_net_forward.5} parent=47 // pred_region
        %s4442 = smul.u32 2, %s17
        %p4443 = scmp.lt.s32.totalorder %s4442, 3
        %s4444 = scalar_select %p4443, %s4442, 3
        %s4445 = smul.addr %s4444, 8
        %s4446 = scalar_lea.vmem %s5, %s4445
      $region52: #{my_conv_net_forward.5} parent=47 // pred_fallthru
        _
    $region48: #{my_conv_net_forward.5} parent=5 // pred_fallthru
      _
  $region6: #{my_conv_net_forward.5} parent=0 // loop_footer
    %s15 = sadd.s32 1, %s11
  $region7: #{my_conv_net_forward.5} parent=0 // loop_footer_branch
    %10 = sbr.rel target = $region3
  $region8: #{my_conv_net_forward.5} parent=0 // loop_exit
    _

</llo_original>
